<compile_context>
chip_gen: v7x
topology: tpu7x:2x2x1
jax: 0.10.0
libtpu: 0.0.40
codegen_flags: <defaults>
</compile_context>

<pallas_src>
import jax
import jax.numpy as jnp
from jax.experimental import pallas as pl
from jax.experimental.pallas import tpu as pltpu

# ---------------- config (small, consistent with the module's forward) -------
VOCAB = 128
D_MODEL = 32
D_INNER = 64          # expand = 2
D_STATE = 16
DT_RANK = 2           # ceil(D_MODEL / 16)
D_CONV = 4
N_LAYERS = 2
EPS = 1e-5


# ----------------------------- fused kernel ---------------------------------
def _make_kernel(batch, seq):
    bl = batch * seq
    bdi = batch * D_INNER
    f32 = jnp.float32

    def silu(x):
        return x * (1.0 / (1.0 + jnp.exp(-x)))

    def rmsnorm(x, w):
        ms = jnp.mean(x * x, axis=-1, keepdims=True)
        return x * jax.lax.rsqrt(ms + EPS) * w

    def widen_inner(x):          # token rows (B*L, D_INNER) -> wide (L, B*D_INNER)
        return jnp.concatenate(
            [x[b * seq:(b + 1) * seq, :] for b in range(batch)], axis=1)

    def unwiden_inner(y):        # wide (L, B*D_INNER) -> token rows (B*L, D_INNER)
        return jnp.concatenate(
            [y[:, b * D_INNER:(b + 1) * D_INNER] for b in range(batch)], axis=0)

    def widen_state(xc):         # compact (L, B*N) -> (L, N, B*D_INNER) lane-bcast
        parts = [jnp.broadcast_to(
            xc[:, b * D_STATE:(b + 1) * D_STATE][:, :, None],
            (seq, D_STATE, D_INNER)) for b in range(batch)]
        return jnp.concatenate(parts, axis=-1)

    def kernel(ids_ref, emb_ref, normw_ref, inxw_ref, inresw_ref,
               convw_ref, convb_ref, wdtw_ref, wdtb_ref, wbw_ref, wcw_ref,
               a_ref, dskip_ref, outw_ref, normf_ref,
               logits_ref, dA_s, dBu_s, st_s):
        # ---- embedding: exact gather as one-hot @ table (MXU) ----
        lane = jax.lax.broadcasted_iota(jnp.int32, (bl, VOCAB), 1)
        onehot = (lane == ids_ref[...]).astype(f32)                     # (bl, V)
        h = jnp.dot(onehot, emb_ref[...], preferred_element_type=f32)   # (bl, D)

        # ---- compile-time causal shift matrices: S_s[l, l'] = 1 iff l' == l-s
        ri = jax.lax.broadcasted_iota(jnp.int32, (seq, seq), 0)
        ci = jax.lax.broadcasted_iota(jnp.int32, (seq, seq), 1)
        shift_mats = [(ri - ci == s).astype(f32) for s in range(1, D_CONV)]

        for li in range(N_LAYERS):
            # -------- RMSNorm + split in_proj (two lane-contiguous dots) -----
            xn = rmsnorm(h, normw_ref[li])                              # (bl, D)
            xs = jnp.dot(xn, inxw_ref[li], preferred_element_type=f32)  # (bl, Din)
            res = jnp.dot(xn, inresw_ref[li], preferred_element_type=f32)

            # -------- depthwise causal conv in wide (L, B*Din) layout --------
            # Batch lives in lanes, so causality is purely along sublanes and
            # the shift+zero-pad is one tiny MXU matmul per tap.
            xs_w = widen_inner(xs)                                      # (L, B*Din)
            cw = convw_ref[li]                                          # (D_CONV, B*Din)
            acc = xs_w * cw[D_CONV - 1:D_CONV, :]                       # shift-0 tap
            for k in range(D_CONV - 1):
                shift = D_CONV - 1 - k
                x_sh = jnp.dot(shift_mats[shift - 1], xs_w,
                               preferred_element_type=f32)              # x[l-shift]
                acc = acc + x_sh * cw[k:k + 1, :]
            u_w = silu(acc + convb_ref[li])                             # (L, B*Din)

            # -------- x_proj (+ host-folded dt_proj) as block-diag dots ------
            dt_raw = jnp.dot(u_w, wdtw_ref[li],
                             preferred_element_type=f32) + wdtb_ref[li]  # (L, B*Din)
            Bc = jnp.dot(u_w, wbw_ref[li], preferred_element_type=f32)   # (L, B*N)
            Cc = jnp.dot(u_w, wcw_ref[li], preferred_element_type=f32)   # (L, B*N)

            # softplus with torch threshold=20, numerically stable
            sp = jnp.maximum(dt_raw, 0.0) + jnp.log(1.0 + jnp.exp(-jnp.abs(dt_raw)))
            dt_w = jnp.where(dt_raw > 20.0, dt_raw, sp)

            # -------- scan precompute: full-width unmasked stores ------------
            # lane j = b*D_INNER + c (128 lanes), state dim N on sublanes.
            dA_s[...] = jnp.exp(dt_w[:, None, :] * a_ref[li])           # (L, N, 128)
            dBu_s[...] = (dt_w * u_w)[:, None, :] * widen_state(Bc)     # (L, N, 128)

            # -------- serial recurrence: pure mul+add on a (16,128) state ----
            state = jnp.zeros((D_STATE, bdi), f32)
            for l in range(seq):                                        # L small & static
                state = dA_s[l] * state + dBu_s[l]
                st_s[l] = state                                         # off dep chain

            # -------- C contraction off the serial path, full-width ----------
            y_w = jnp.sum(st_s[...] * widen_state(Cc), axis=1)          # (L, B*Din)
            y_w = y_w + u_w * dskip_ref[li]                             # skip: + D*u
            y = unwiden_inner(y_w) * silu(res)                          # gate
            h = h + jnp.dot(y, outw_ref[li], preferred_element_type=f32)

        # -------- final RMSNorm + tied lm_head (contract emb dim 1, no .T) ---
        hn = rmsnorm(h, normf_ref[...])
        logits_ref[...] = jax.lax.dot_general(
            hn, emb_ref[...], (((1,), (1,)), ((), ())),
            preferred_element_type=f32)

    return kernel


# ------------------------------ wrapper --------------------------------------
def _zero_map(ndim):
    return lambda i: (0,) * ndim


def mamba_forward(ids, params):
    # NOTE: layout assumes Bsz*D_INNER is lane friendly (128 here) and L >= D_CONV.
    Bsz, L = ids.shape
    BL = Bsz * L
    f32 = jnp.float32
    layers = params["layers"]

    # host-side parameter prep (layout / stacking / exact linear folds only)
    eye_b = jnp.eye(Bsz, dtype=f32)

    def tile_b(v):                       # per-channel vector -> (1, B*D_INNER)
        return jnp.tile(v.reshape(1, -1), (1, Bsz))

    norm_w = jnp.stack([p["norm_w"].reshape(1, D_MODEL) for p in layers])
    inx_w = jnp.stack([p["in_proj_w"][:, :D_INNER] for p in layers])
    inres_w = jnp.stack([p["in_proj_w"][:, D_INNER:] for p in layers])
    conv_w = jnp.stack([jnp.tile(p["conv_w"], (1, Bsz)) for p in layers])
    conv_b = jnp.stack([tile_b(p["conv_b"]) for p in layers])
    # dt_proj folded into x_proj (exact), then block-diagonalized per batch so
    # the kernel's wide-layout dots stay lane contiguous.
    w_dt = jnp.stack([jnp.kron(eye_b, p["x_proj_w"][:, :DT_RANK] @ p["dt_proj_w"])
                      for p in layers])
    b_dt = jnp.stack([tile_b(p["dt_proj_b"]) for p in layers])
    w_b = jnp.stack([jnp.kron(eye_b, p["x_proj_w"][:, DT_RANK:DT_RANK + D_STATE])
                     for p in layers])
    w_c = jnp.stack([jnp.kron(eye_b, p["x_proj_w"][:, DT_RANK + D_STATE:])
                     for p in layers])
    a_tiled = jnp.stack([jnp.tile((-jnp.exp(p["A_log"])).T, (1, Bsz))
                         for p in layers])                 # (N, B*D_INNER)
    d_skip = jnp.stack([tile_b(p["D"]) for p in layers])
    out_w = jnp.stack([p["out_proj_w"] for p in layers])
    norm_f_w = params["norm_f_w"].reshape(1, D_MODEL)
    emb = params["emb"]

    ids2 = ids.reshape(BL, 1).astype(jnp.int32)

    args = (ids2, emb, norm_w, inx_w, inres_w, conv_w, conv_b,
            w_dt, b_dt, w_b, w_c, a_tiled, d_skip, out_w, norm_f_w)

    scratch = [
        pltpu.VMEM((L, D_STATE, Bsz * D_INNER), f32),     # exp(dt*A)
        pltpu.VMEM((L, D_STATE, Bsz * D_INNER), f32),     # dt*B*u
        pltpu.VMEM((L, D_STATE, Bsz * D_INNER), f32),     # per-step states
    ]

    logits = pl.pallas_call(
        _make_kernel(Bsz, L),
        out_shape=jax.ShapeDtypeStruct((BL, VOCAB), f32),
        grid=(1,),
        in_specs=[pl.BlockSpec(a.shape, _zero_map(a.ndim)) for a in args],
        out_specs=pl.BlockSpec((BL, VOCAB), _zero_map(2)),
        scratch_shapes=scratch,
        compiler_params=pltpu.CompilerParams(
            dimension_semantics=("arbitrary",)),
    )(*args)
    return logits.reshape(Bsz, L, VOCAB)


# ------------------------ pure-JAX reference (for checking) ------------------
def mamba_forward_ref(ids, params):
    def softplus(x):
        return jnp.where(x > 20.0, x, jnp.log1p(jnp.exp(jnp.minimum(x, 20.0))))

    def silu(x):
        return x * jax.nn.sigmoid(x)

    def rms(x, w):
        return x * jax.lax.rsqrt(jnp.mean(x * x, -1, keepdims=True) + EPS) * w

    h = params["emb"][ids]                                   # (B, L, D)
    Bsz, L, _ = h.shape
    for p in params["layers"]:
        xn = rms(h, p["norm_w"])
        xr = xn @ p["in_proj_w"]
        xs, res = xr[..., :D_INNER], xr[..., D_INNER:]
        xp = jnp.pad(xs, ((0, 0), (D_CONV - 1, 0), (0, 0)))
        conv = sum(xp[:, k:k + L, :] * p["conv_w"][k] for k in range(D_CONV)) + p["conv_b"]
        u = silu(conv)
        xdb = u @ p["x_proj_w"]
        dt = softplus(xdb[..., :DT_RANK] @ p["dt_proj_w"] + p["dt_proj_b"])
        Bm = xdb[..., DT_RANK:DT_RANK + D_STATE]
        Cm = xdb[..., DT_RANK + D_STATE:]
        A = -jnp.exp(p["A_log"])

        def step(state, inp):
            dt_l, u_l, B_l, C_l = inp
            dA = jnp.exp(dt_l[:, :, None] * A[None])
            state = dA * state + dt_l[:, :, None] * B_l[:, None, :] * u_l[:, :, None]
            return state, jnp.sum(state * C_l[:, None, :], axis=-1)

        inp = tuple(jnp.moveaxis(a, 1, 0) for a in (dt, u, Bm, Cm))
        _, ys = jax.lax.scan(step, jnp.zeros((Bsz, D_INNER, D_STATE)), inp)
        y = jnp.moveaxis(ys, 0, 1) + u * p["D"]
        y = y * silu(res)
        h = h + y @ p["out_proj_w"]
    h = rms(h, params["norm_f_w"])
    return h @ params["emb"].T


# ------------------------------ params ---------------------------------------
def init_params(key):
    keys = jax.random.split(key, 1 + N_LAYERS)
    emb = 0.02 * jax.random.normal(keys[0], (VOCAB, D_MODEL), jnp.float32)
    layers = []
    for li in range(N_LAYERS):
        ks = jax.random.split(keys[1 + li], 7)
        layers.append(dict(
            norm_w=jnp.ones((D_MODEL,), jnp.float32),
            in_proj_w=0.02 * jax.random.normal(ks[0], (D_MODEL, 2 * D_INNER), jnp.float32),
            conv_w=0.1 * jax.random.normal(ks[1], (D_CONV, D_INNER), jnp.float32),
            conv_b=0.1 * jax.random.normal(ks[2], (D_INNER,), jnp.float32),
            x_proj_w=0.02 * jax.random.normal(ks[3], (D_INNER, DT_RANK + 2 * D_STATE), jnp.float32),
            dt_proj_w=0.1 * jax.random.normal(ks[4], (DT_RANK, D_INNER), jnp.float32),
            dt_proj_b=0.1 * jax.random.normal(ks[5], (D_INNER,), jnp.float32),
            A_log=jnp.log(jnp.broadcast_to(
                jnp.arange(1, D_STATE + 1, dtype=jnp.float32), (D_INNER, D_STATE))),
            D=jnp.ones((D_INNER,), jnp.float32),
            out_proj_w=0.02 * jax.random.normal(ks[6], (D_INNER, D_MODEL), jnp.float32),
        ))
    return dict(emb=emb, layers=layers, norm_f_w=jnp.ones((D_MODEL,), jnp.float32))


if __name__ == "__main__":
    key = jax.random.PRNGKey(0)
    k_ids, k_params = jax.random.split(key)
    params = init_params(k_params)
    ids = jax.random.randint(k_ids, (2, 8), 0, VOCAB, dtype=jnp.int32)

    logits = jax.jit(mamba_forward)(ids, params)
    logits = jax.block_until_ready(logits)

    assert logits.shape == (2, 8, VOCAB) and logits.dtype == jnp.float32
    assert bool(jnp.all(jnp.isfinite(logits)))

    ref = mamba_forward_ref(ids, params)
    assert bool(jnp.allclose(logits, ref, atol=1e-3, rtol=1e-2)), \
        float(jnp.max(jnp.abs(logits - ref)))

    print("KERNEL_OK")
</pallas_src>

<mosaic_0001>
module attributes {stable_mosaic.version = 11 : i64} {
  func.func @kernel(%arg0: i32, %arg1: memref<16x1xi32, #tpu.memory_space<vmem>>, %arg2: memref<128x32xf32, #tpu.memory_space<vmem>>, %arg3: memref<2x1x32xf32, #tpu.memory_space<vmem>>, %arg4: memref<2x32x64xf32, #tpu.memory_space<vmem>>, %arg5: memref<2x32x64xf32, #tpu.memory_space<vmem>>, %arg6: memref<2x4x128xf32, #tpu.memory_space<vmem>>, %arg7: memref<2x1x128xf32, #tpu.memory_space<vmem>>, %arg8: memref<2x128x128xf32, #tpu.memory_space<vmem>>, %arg9: memref<2x1x128xf32, #tpu.memory_space<vmem>>, %arg10: memref<2x128x32xf32, #tpu.memory_space<vmem>>, %arg11: memref<2x128x32xf32, #tpu.memory_space<vmem>>, %arg12: memref<2x16x128xf32, #tpu.memory_space<vmem>>, %arg13: memref<2x1x128xf32, #tpu.memory_space<vmem>>, %arg14: memref<2x64x32xf32, #tpu.memory_space<vmem>>, %arg15: memref<1x32xf32, #tpu.memory_space<vmem>>, %arg16: memref<16x128xf32, #tpu.memory_space<vmem>>, %arg17: memref<8x16x128xf32, #tpu.memory_space<vmem>>, %arg18: memref<8x16x128xf32, #tpu.memory_space<vmem>>, %arg19: memref<8x16x128xf32, #tpu.memory_space<vmem>>) attributes {dimension_semantics = [#tpu.dimension_semantics<arbitrary>], iteration_bounds = array<i64: 1>, scalar_prefetch = 0 : i64, scratch_operands = 3 : i64, tpu.core_type = #tpu.core_type<tc>, window_params = [{pipeline_mode = #tpu.pipeline_mode<synchronous>, transform_indices = @transform_0, window_bounds = array<i64: 16, 1>}, {pipeline_mode = #tpu.pipeline_mode<synchronous>, transform_indices = @transform_1, window_bounds = array<i64: 128, 32>}, {pipeline_mode = #tpu.pipeline_mode<synchronous>, transform_indices = @transform_2, window_bounds = array<i64: 2, 1, 32>}, {pipeline_mode = #tpu.pipeline_mode<synchronous>, transform_indices = @transform_3, window_bounds = array<i64: 2, 32, 64>}, {pipeline_mode = #tpu.pipeline_mode<synchronous>, transform_indices = @transform_4, window_bounds = array<i64: 2, 32, 64>}, {pipeline_mode = #tpu.pipeline_mode<synchronous>, transform_indices = @transform_5, window_bounds = array<i64: 2, 4, 128>}, {pipeline_mode = #tpu.pipeline_mode<synchronous>, transform_indices = @transform_6, window_bounds = array<i64: 2, 1, 128>}, {pipeline_mode = #tpu.pipeline_mode<synchronous>, transform_indices = @transform_7, window_bounds = array<i64: 2, 128, 128>}, {pipeline_mode = #tpu.pipeline_mode<synchronous>, transform_indices = @transform_8, window_bounds = array<i64: 2, 1, 128>}, {pipeline_mode = #tpu.pipeline_mode<synchronous>, transform_indices = @transform_9, window_bounds = array<i64: 2, 128, 32>}, {pipeline_mode = #tpu.pipeline_mode<synchronous>, transform_indices = @transform_10, window_bounds = array<i64: 2, 128, 32>}, {pipeline_mode = #tpu.pipeline_mode<synchronous>, transform_indices = @transform_11, window_bounds = array<i64: 2, 16, 128>}, {pipeline_mode = #tpu.pipeline_mode<synchronous>, transform_indices = @transform_12, window_bounds = array<i64: 2, 1, 128>}, {pipeline_mode = #tpu.pipeline_mode<synchronous>, transform_indices = @transform_13, window_bounds = array<i64: 2, 64, 32>}, {pipeline_mode = #tpu.pipeline_mode<synchronous>, transform_indices = @transform_14, window_bounds = array<i64: 1, 32>}, {pipeline_mode = #tpu.pipeline_mode<synchronous>, transform_indices = @transform_15, window_bounds = array<i64: 16, 128>}]} {
    %0 = tpu.iota {dimensions = array<i32: 1>} : vector<16x128xi32>
    %c0 = arith.constant 0 : index
    %c0_0 = arith.constant 0 : index
    %1 = vector.load %arg1[%c0, %c0_0] : memref<16x1xi32, #tpu.memory_space<vmem>>, vector<16x1xi32>
    %2 = vector.broadcast %1 : vector<16x1xi32> to vector<16x128xi32>
    %3 = arith.cmpi eq, %0, %2 : vector<16x128xi32>
    %4 = arith.extui %3 : vector<16x128xi1> to vector<16x128xi32>
    %5 = arith.sitofp %4 : vector<16x128xi32> to vector<16x128xf32>
    %c0_1 = arith.constant 0 : index
    %c0_2 = arith.constant 0 : index
    %6 = vector.load %arg2[%c0_1, %c0_2] : memref<128x32xf32, #tpu.memory_space<vmem>>, vector<128x32xf32>
    %cst = arith.constant dense<0.000000e+00> : vector<16x32xf32>
    %7 = tpu.matmul %5, %6, %cst {dimension_numbers = #tpu.dot_dimension_numbers<[1], [0], [0], [1], [0, 0, 1, 1], [], []>} : vector<16x128xf32>, vector<128x32xf32>, vector<16x32xf32> -> vector<16x32xf32>
    %8 = tpu.iota {dimensions = array<i32: 0>} : vector<8x8xi32>
    %9 = tpu.iota {dimensions = array<i32: 1>} : vector<8x8xi32>
    %10 = arith.subi %8, %9 : vector<8x8xi32>
    %c1_i32 = arith.constant 1 : i32
    %11 = vector.broadcast %c1_i32 : i32 to vector<8x8xi32>
    %12 = arith.cmpi eq, %10, %11 : vector<8x8xi32>
    %13 = arith.extui %12 : vector<8x8xi1> to vector<8x8xi32>
    %14 = arith.sitofp %13 : vector<8x8xi32> to vector<8x8xf32>
    %15 = arith.subi %8, %9 : vector<8x8xi32>
    %c2_i32 = arith.constant 2 : i32
    %16 = vector.broadcast %c2_i32 : i32 to vector<8x8xi32>
    %17 = arith.cmpi eq, %15, %16 : vector<8x8xi32>
    %18 = arith.extui %17 : vector<8x8xi1> to vector<8x8xi32>
    %19 = arith.sitofp %18 : vector<8x8xi32> to vector<8x8xf32>
    %20 = arith.subi %8, %9 : vector<8x8xi32>
    %c3_i32 = arith.constant 3 : i32
    %21 = vector.broadcast %c3_i32 : i32 to vector<8x8xi32>
    %22 = arith.cmpi eq, %20, %21 : vector<8x8xi32>
    %23 = arith.extui %22 : vector<8x8xi1> to vector<8x8xi32>
    %24 = arith.sitofp %23 : vector<8x8xi32> to vector<8x8xf32>
    %c0_3 = arith.constant 0 : index
    %c0_4 = arith.constant 0 : index
    %c0_5 = arith.constant 0 : index
    %25 = vector.load %arg3[%c0_3, %c0_4, %c0_5] : memref<2x1x32xf32, #tpu.memory_space<vmem>>, vector<1x1x32xf32>
    %26 = vector.shape_cast %25 : vector<1x1x32xf32> to vector<1x32xf32>
    %27 = arith.mulf %7, %7 : vector<16x32xf32>
    %cst_6 = arith.constant dense<0.000000e+00> : vector<16xf32>
    %28 = vector.multi_reduction <add>, %27, %cst_6 [1] : vector<16x32xf32> to vector<16xf32>
    %29 = vector.shape_cast %28 : vector<16xf32> to vector<16x1xf32>
    %cst_7 = arith.constant 3.200000e+01 : f32
    %30 = vector.broadcast %cst_7 : f32 to vector<16x1xf32>
    %31 = arith.divf %29, %30 : vector<16x1xf32>
    %cst_8 = arith.constant 9.99999974E-6 : f32
    %32 = vector.broadcast %cst_8 : f32 to vector<16x1xf32>
    %33 = arith.addf %31, %32 : vector<16x1xf32>
    %34 = math.rsqrt %33 : vector<16x1xf32>
    %35 = vector.broadcast %34 : vector<16x1xf32> to vector<16x32xf32>
    %36 = arith.mulf %7, %35 : vector<16x32xf32>
    %37 = vector.broadcast %26 : vector<1x32xf32> to vector<16x32xf32>
    %38 = arith.mulf %36, %37 : vector<16x32xf32>
    %c0_9 = arith.constant 0 : index
    %c0_10 = arith.constant 0 : index
    %c0_11 = arith.constant 0 : index
    %39 = vector.load %arg4[%c0_9, %c0_10, %c0_11] : memref<2x32x64xf32, #tpu.memory_space<vmem>>, vector<1x32x64xf32>
    %40 = vector.shape_cast %39 : vector<1x32x64xf32> to vector<32x64xf32>
    %cst_12 = arith.constant dense<0.000000e+00> : vector<16x64xf32>
    %41 = tpu.matmul %38, %40, %cst_12 {dimension_numbers = #tpu.dot_dimension_numbers<[1], [0], [0], [1], [0, 0, 1, 1], [], []>} : vector<16x32xf32>, vector<32x64xf32>, vector<16x64xf32> -> vector<16x64xf32>
    %c0_13 = arith.constant 0 : index
    %c0_14 = arith.constant 0 : index
    %c0_15 = arith.constant 0 : index
    %42 = vector.load %arg5[%c0_13, %c0_14, %c0_15] : memref<2x32x64xf32, #tpu.memory_space<vmem>>, vector<1x32x64xf32>
    %43 = vector.shape_cast %42 : vector<1x32x64xf32> to vector<32x64xf32>
    %cst_16 = arith.constant dense<0.000000e+00> : vector<16x64xf32>
    %44 = tpu.matmul %38, %43, %cst_16 {dimension_numbers = #tpu.dot_dimension_numbers<[1], [0], [0], [1], [0, 0, 1, 1], [], []>} : vector<16x32xf32>, vector<32x64xf32>, vector<16x64xf32> -> vector<16x64xf32>
    %45 = vector.extract_strided_slice %41 {offsets = [0, 0], sizes = [8, 64], strides = [1, 1]} : vector<16x64xf32> to vector<8x64xf32>
    %46 = vector.extract_strided_slice %41 {offsets = [8, 0], sizes = [8, 64], strides = [1, 1]} : vector<16x64xf32> to vector<8x64xf32>
    %47 = tpu.concatenate %45, %46 in 1 : vector<8x64xf32>, vector<8x64xf32> -> vector<8x128xf32>
    %c0_17 = arith.constant 0 : index
    %c0_18 = arith.constant 0 : index
    %c0_19 = arith.constant 0 : index
    %48 = vector.load %arg6[%c0_17, %c0_18, %c0_19] : memref<2x4x128xf32, #tpu.memory_space<vmem>>, vector<1x4x128xf32>
    %49 = vector.shape_cast %48 : vector<1x4x128xf32> to vector<4x128xf32>
    %50 = vector.extract_strided_slice %49 {offsets = [3, 0], sizes = [1, 128], strides = [1, 1]} : vector<4x128xf32> to vector<1x128xf32>
    %51 = vector.broadcast %50 : vector<1x128xf32> to vector<8x128xf32>
    %52 = arith.mulf %47, %51 : vector<8x128xf32>
    %cst_20 = arith.constant dense<0.000000e+00> : vector<8x128xf32>
    %53 = tpu.matmul %24, %47, %cst_20 {dimension_numbers = #tpu.dot_dimension_numbers<[1], [0], [0], [1], [0, 0, 1, 1], [], []>} : vector<8x8xf32>, vector<8x128xf32>, vector<8x128xf32> -> vector<8x128xf32>
    %54 = vector.extract_strided_slice %49 {offsets = [0, 0], sizes = [1, 128], strides = [1, 1]} : vector<4x128xf32> to vector<1x128xf32>
    %55 = vector.broadcast %54 : vector<1x128xf32> to vector<8x128xf32>
    %56 = arith.mulf %53, %55 : vector<8x128xf32>
    %57 = arith.addf %52, %56 : vector<8x128xf32>
    %cst_21 = arith.constant dense<0.000000e+00> : vector<8x128xf32>
    %58 = tpu.matmul %19, %47, %cst_21 {dimension_numbers = #tpu.dot_dimension_numbers<[1], [0], [0], [1], [0, 0, 1, 1], [], []>} : vector<8x8xf32>, vector<8x128xf32>, vector<8x128xf32> -> vector<8x128xf32>
    %59 = vector.extract_strided_slice %49 {offsets = [1, 0], sizes = [1, 128], strides = [1, 1]} : vector<4x128xf32> to vector<1x128xf32>
    %60 = vector.broadcast %59 : vector<1x128xf32> to vector<8x128xf32>
    %61 = arith.mulf %58, %60 : vector<8x128xf32>
    %62 = arith.addf %57, %61 : vector<8x128xf32>
    %cst_22 = arith.constant dense<0.000000e+00> : vector<8x128xf32>
    %63 = tpu.matmul %14, %47, %cst_22 {dimension_numbers = #tpu.dot_dimension_numbers<[1], [0], [0], [1], [0, 0, 1, 1], [], []>} : vector<8x8xf32>, vector<8x128xf32>, vector<8x128xf32> -> vector<8x128xf32>
    %64 = vector.extract_strided_slice %49 {offsets = [2, 0], sizes = [1, 128], strides = [1, 1]} : vector<4x128xf32> to vector<1x128xf32>
    %65 = vector.broadcast %64 : vector<1x128xf32> to vector<8x128xf32>
    %66 = arith.mulf %63, %65 : vector<8x128xf32>
    %67 = arith.addf %62, %66 : vector<8x128xf32>
    %c0_23 = arith.constant 0 : index
    %c0_24 = arith.constant 0 : index
    %c0_25 = arith.constant 0 : index
    %68 = vector.load %arg7[%c0_23, %c0_24, %c0_25] : memref<2x1x128xf32, #tpu.memory_space<vmem>>, vector<1x1x128xf32>
    %69 = vector.shape_cast %68 : vector<1x1x128xf32> to vector<1x128xf32>
    %70 = vector.broadcast %69 : vector<1x128xf32> to vector<8x128xf32>
    %71 = arith.addf %67, %70 : vector<8x128xf32>
    %cst_26 = arith.constant 0.000000e+00 : f32
    %72 = vector.broadcast %cst_26 : f32 to vector<8x128xf32>
    %73 = arith.subf %72, %71 : vector<8x128xf32>
    %74 = math.exp %73 : vector<8x128xf32>
    %cst_27 = arith.constant 1.000000e+00 : f32
    %75 = vector.broadcast %cst_27 : f32 to vector<8x128xf32>
    %76 = arith.addf %75, %74 : vector<8x128xf32>
    %cst_28 = arith.constant 1.000000e+00 : f32
    %77 = vector.broadcast %cst_28 : f32 to vector<8x128xf32>
    %78 = arith.divf %77, %76 : vector<8x128xf32>
    %79 = arith.mulf %71, %78 : vector<8x128xf32>
    %c0_29 = arith.constant 0 : index
    %c0_30 = arith.constant 0 : index
    %c0_31 = arith.constant 0 : index
    %80 = vector.load %arg8[%c0_29, %c0_30, %c0_31] : memref<2x128x128xf32, #tpu.memory_space<vmem>>, vector<1x128x128xf32>
    %81 = vector.shape_cast %80 : vector<1x128x128xf32> to vector<128x128xf32>
    %cst_32 = arith.constant dense<0.000000e+00> : vector<8x128xf32>
    %82 = tpu.matmul %79, %81, %cst_32 {dimension_numbers = #tpu.dot_dimension_numbers<[1], [0], [0], [1], [0, 0, 1, 1], [], []>} : vector<8x128xf32>, vector<128x128xf32>, vector<8x128xf32> -> vector<8x128xf32>
    %c0_33 = arith.constant 0 : index
    %c0_34 = arith.constant 0 : index
    %c0_35 = arith.constant 0 : index
    %83 = vector.load %arg9[%c0_33, %c0_34, %c0_35] : memref<2x1x128xf32, #tpu.memory_space<vmem>>, vector<1x1x128xf32>
    %84 = vector.shape_cast %83 : vector<1x1x128xf32> to vector<1x128xf32>
    %85 = vector.broadcast %84 : vector<1x128xf32> to vector<8x128xf32>
    %86 = arith.addf %82, %85 : vector<8x128xf32>
    %c0_36 = arith.constant 0 : index
    %c0_37 = arith.constant 0 : index
    %c0_38 = arith.constant 0 : index
    %87 = vector.load %arg10[%c0_36, %c0_37, %c0_38] : memref<2x128x32xf32, #tpu.memory_space<vmem>>, vector<1x128x32xf32>
    %88 = vector.shape_cast %87 : vector<1x128x32xf32> to vector<128x32xf32>
    %cst_39 = arith.constant dense<0.000000e+00> : vector<8x32xf32>
    %89 = tpu.matmul %79, %88, %cst_39 {dimension_numbers = #tpu.dot_dimension_numbers<[1], [0], [0], [1], [0, 0, 1, 1], [], []>} : vector<8x128xf32>, vector<128x32xf32>, vector<8x32xf32> -> vector<8x32xf32>
    %c0_40 = arith.constant 0 : index
    %c0_41 = arith.constant 0 : index
    %c0_42 = arith.constant 0 : index
    %90 = vector.load %arg11[%c0_40, %c0_41, %c0_42] : memref<2x128x32xf32, #tpu.memory_space<vmem>>, vector<1x128x32xf32>
    %91 = vector.shape_cast %90 : vector<1x128x32xf32> to vector<128x32xf32>
    %cst_43 = arith.constant dense<0.000000e+00> : vector<8x32xf32>
    %92 = tpu.matmul %79, %91, %cst_43 {dimension_numbers = #tpu.dot_dimension_numbers<[1], [0], [0], [1], [0, 0, 1, 1], [], []>} : vector<8x128xf32>, vector<128x32xf32>, vector<8x32xf32> -> vector<8x32xf32>
    %cst_44 = arith.constant 0.000000e+00 : f32
    %93 = vector.broadcast %cst_44 : f32 to vector<8x128xf32>
    %94 = arith.maximumf %86, %93 : vector<8x128xf32>
    %95 = math.absf %86 : vector<8x128xf32>
    %cst_45 = arith.constant 0.000000e+00 : f32
    %96 = vector.broadcast %cst_45 : f32 to vector<8x128xf32>
    %97 = arith.subf %96, %95 : vector<8x128xf32>
    %98 = math.exp %97 : vector<8x128xf32>
    %cst_46 = arith.constant 1.000000e+00 : f32
    %99 = vector.broadcast %cst_46 : f32 to vector<8x128xf32>
    %100 = arith.addf %99, %98 : vector<8x128xf32>
    %101 = math.log %100 : vector<8x128xf32>
    %102 = arith.addf %94, %101 : vector<8x128xf32>
    %cst_47 = arith.constant 2.000000e+01 : f32
    %103 = vector.broadcast %cst_47 : f32 to vector<8x128xf32>
    %104 = arith.cmpf ogt, %86, %103 : vector<8x128xf32>
    %105 = arith.select %104, %86, %102 : vector<8x128xi1>, vector<8x128xf32>
    %106 = vector.shape_cast %105 : vector<8x128xf32> to vector<8x1x128xf32>
    %c0_48 = arith.constant 0 : index
    %c0_49 = arith.constant 0 : index
    %c0_50 = arith.constant 0 : index
    %107 = vector.load %arg12[%c0_48, %c0_49, %c0_50] : memref<2x16x128xf32, #tpu.memory_space<vmem>>, vector<1x16x128xf32>
    %108 = vector.shape_cast %107 : vector<1x16x128xf32> to vector<16x128xf32>
    %109 = vector.shape_cast %108 : vector<16x128xf32> to vector<1x16x128xf32>
    %110 = vector.broadcast %106 : vector<8x1x128xf32> to vector<8x16x128xf32>
    %111 = vector.broadcast %109 : vector<1x16x128xf32> to vector<8x16x128xf32>
    %112 = arith.mulf %110, %111 : vector<8x16x128xf32>
    %113 = math.exp %112 : vector<8x16x128xf32>
    %c0_51 = arith.constant 0 : index
    %c0_52 = arith.constant 0 : index
    %c0_53 = arith.constant 0 : index
    %114 = vector.load %arg17[%c0_51, %c0_52, %c0_53] : memref<8x16x128xf32, #tpu.memory_space<vmem>>, vector<8x16x128xf32>
    tpu.vector_store %arg17[%c0_51, %c0_52, %c0_53], %113 {strides = array<i32>} : memref<8x16x128xf32, #tpu.memory_space<vmem>>, vector<8x16x128xf32>,
    %115 = arith.mulf %105, %79 : vector<8x128xf32>
    %116 = vector.shape_cast %115 : vector<8x128xf32> to vector<8x1x128xf32>
    %117 = vector.extract_strided_slice %89 {offsets = [0, 0], sizes = [8, 16], strides = [1, 1]} : vector<8x32xf32> to vector<8x16xf32>
    %118 = vector.shape_cast %117 : vector<8x16xf32> to vector<8x16x1xf32>
    %119 = vector.shape_cast %118 : vector<8x16x1xf32> to vector<8x16x1xf32>
    %120 = vector.broadcast %119 : vector<8x16x1xf32> to vector<8x16x64xf32>
    %121 = vector.extract_strided_slice %89 {offsets = [0, 16], sizes = [8, 16], strides = [1, 1]} : vector<8x32xf32> to vector<8x16xf32>
    %122 = vector.shape_cast %121 : vector<8x16xf32> to vector<8x16x1xf32>
    %123 = vector.shape_cast %122 : vector<8x16x1xf32> to vector<8x16x1xf32>
    %124 = vector.broadcast %123 : vector<8x16x1xf32> to vector<8x16x64xf32>
    %125 = tpu.concatenate %120, %124 in 2 : vector<8x16x64xf32>, vector<8x16x64xf32> -> vector<8x16x128xf32>
    %126 = vector.broadcast %116 : vector<8x1x128xf32> to vector<8x16x128xf32>
    %127 = arith.mulf %126, %125 : vector<8x16x128xf32>
    %c0_54 = arith.constant 0 : index
    %c0_55 = arith.constant 0 : index
    %c0_56 = arith.constant 0 : index
    %128 = vector.load %arg18[%c0_54, %c0_55, %c0_56] : memref<8x16x128xf32, #tpu.memory_space<vmem>>, vector<8x16x128xf32>
    tpu.vector_store %arg18[%c0_54, %c0_55, %c0_56], %127 {strides = array<i32>} : memref<8x16x128xf32, #tpu.memory_space<vmem>>, vector<8x16x128xf32>,
    %cst_57 = arith.constant 0.000000e+00 : f32
    %129 = vector.broadcast %cst_57 : f32 to vector<16x128xf32>
    %c0_58 = arith.constant 0 : index
    %c0_59 = arith.constant 0 : index
    %c0_60 = arith.constant 0 : index
    %130 = vector.load %arg17[%c0_58, %c0_59, %c0_60] : memref<8x16x128xf32, #tpu.memory_space<vmem>>, vector<1x16x128xf32>
    %131 = vector.shape_cast %130 : vector<1x16x128xf32> to vector<16x128xf32>
    %132 = arith.mulf %131, %129 : vector<16x128xf32>
    %c0_61 = arith.constant 0 : index
    %c0_62 = arith.constant 0 : index
    %c0_63 = arith.constant 0 : index
    %133 = vector.load %arg18[%c0_61, %c0_62, %c0_63] : memref<8x16x128xf32, #tpu.memory_space<vmem>>, vector<1x16x128xf32>
    %134 = vector.shape_cast %133 : vector<1x16x128xf32> to vector<16x128xf32>
    %135 = arith.addf %132, %134 : vector<16x128xf32>
    %c0_64 = arith.constant 0 : index
    %c0_65 = arith.constant 0 : index
    %c0_66 = arith.constant 0 : index
    %136 = vector.load %arg19[%c0_64, %c0_65, %c0_66] : memref<8x16x128xf32, #tpu.memory_space<vmem>>, vector<1x16x128xf32>
    %137 = vector.shape_cast %136 : vector<1x16x128xf32> to vector<16x128xf32>
    %138 = vector.shape_cast %135 : vector<16x128xf32> to vector<1x16x128xf32>
    tpu.vector_store %arg19[%c0_64, %c0_65, %c0_66], %138 {strides = array<i32>} : memref<8x16x128xf32, #tpu.memory_space<vmem>>, vector<1x16x128xf32>,
    %c1 = arith.constant 1 : index
    %c0_67 = arith.constant 0 : index
    %c0_68 = arith.constant 0 : index
    %139 = vector.load %arg17[%c1, %c0_67, %c0_68] : memref<8x16x128xf32, #tpu.memory_space<vmem>>, vector<1x16x128xf32>
    %140 = vector.shape_cast %139 : vector<1x16x128xf32> to vector<16x128xf32>
    %141 = arith.mulf %140, %135 : vector<16x128xf32>
    %c1_69 = arith.constant 1 : index
    %c0_70 = arith.constant 0 : index
    %c0_71 = arith.constant 0 : index
    %142 = vector.load %arg18[%c1_69, %c0_70, %c0_71] : memref<8x16x128xf32, #tpu.memory_space<vmem>>, vector<1x16x128xf32>
    %143 = vector.shape_cast %142 : vector<1x16x128xf32> to vector<16x128xf32>
    %144 = arith.addf %141, %143 : vector<16x128xf32>
    %c1_72 = arith.constant 1 : index
    %c0_73 = arith.constant 0 : index
    %c0_74 = arith.constant 0 : index
    %145 = vector.load %arg19[%c1_72, %c0_73, %c0_74] : memref<8x16x128xf32, #tpu.memory_space<vmem>>, vector<1x16x128xf32>
    %146 = vector.shape_cast %145 : vector<1x16x128xf32> to vector<16x128xf32>
    %147 = vector.shape_cast %144 : vector<16x128xf32> to vector<1x16x128xf32>
    tpu.vector_store %arg19[%c1_72, %c0_73, %c0_74], %147 {strides = array<i32>} : memref<8x16x128xf32, #tpu.memory_space<vmem>>, vector<1x16x128xf32>,
    %c2 = arith.constant 2 : index
    %c0_75 = arith.constant 0 : index
    %c0_76 = arith.constant 0 : index
    %148 = vector.load %arg17[%c2, %c0_75, %c0_76] : memref<8x16x128xf32, #tpu.memory_space<vmem>>, vector<1x16x128xf32>
    %149 = vector.shape_cast %148 : vector<1x16x128xf32> to vector<16x128xf32>
    %150 = arith.mulf %149, %144 : vector<16x128xf32>
    %c2_77 = arith.constant 2 : index
    %c0_78 = arith.constant 0 : index
    %c0_79 = arith.constant 0 : index
    %151 = vector.load %arg18[%c2_77, %c0_78, %c0_79] : memref<8x16x128xf32, #tpu.memory_space<vmem>>, vector<1x16x128xf32>
    %152 = vector.shape_cast %151 : vector<1x16x128xf32> to vector<16x128xf32>
    %153 = arith.addf %150, %152 : vector<16x128xf32>
    %c2_80 = arith.constant 2 : index
    %c0_81 = arith.constant 0 : index
    %c0_82 = arith.constant 0 : index
    %154 = vector.load %arg19[%c2_80, %c0_81, %c0_82] : memref<8x16x128xf32, #tpu.memory_space<vmem>>, vector<1x16x128xf32>
    %155 = vector.shape_cast %154 : vector<1x16x128xf32> to vector<16x128xf32>
    %156 = vector.shape_cast %153 : vector<16x128xf32> to vector<1x16x128xf32>
    tpu.vector_store %arg19[%c2_80, %c0_81, %c0_82], %156 {strides = array<i32>} : memref<8x16x128xf32, #tpu.memory_space<vmem>>, vector<1x16x128xf32>,
    %c3 = arith.constant 3 : index
    %c0_83 = arith.constant 0 : index
    %c0_84 = arith.constant 0 : index
    %157 = vector.load %arg17[%c3, %c0_83, %c0_84] : memref<8x16x128xf32, #tpu.memory_space<vmem>>, vector<1x16x128xf32>
    %158 = vector.shape_cast %157 : vector<1x16x128xf32> to vector<16x128xf32>
    %159 = arith.mulf %158, %153 : vector<16x128xf32>
    %c3_85 = arith.constant 3 : index
    %c0_86 = arith.constant 0 : index
    %c0_87 = arith.constant 0 : index
    %160 = vector.load %arg18[%c3_85, %c0_86, %c0_87] : memref<8x16x128xf32, #tpu.memory_space<vmem>>, vector<1x16x128xf32>
    %161 = vector.shape_cast %160 : vector<1x16x128xf32> to vector<16x128xf32>
    %162 = arith.addf %159, %161 : vector<16x128xf32>
    %c3_88 = arith.constant 3 : index
    %c0_89 = arith.constant 0 : index
    %c0_90 = arith.constant 0 : index
    %163 = vector.load %arg19[%c3_88, %c0_89, %c0_90] : memref<8x16x128xf32, #tpu.memory_space<vmem>>, vector<1x16x128xf32>
    %164 = vector.shape_cast %163 : vector<1x16x128xf32> to vector<16x128xf32>
    %165 = vector.shape_cast %162 : vector<16x128xf32> to vector<1x16x128xf32>
    tpu.vector_store %arg19[%c3_88, %c0_89, %c0_90], %165 {strides = array<i32>} : memref<8x16x128xf32, #tpu.memory_space<vmem>>, vector<1x16x128xf32>,
    %c4 = arith.constant 4 : index
    %c0_91 = arith.constant 0 : index
    %c0_92 = arith.constant 0 : index
    %166 = vector.load %arg17[%c4, %c0_91, %c0_92] : memref<8x16x128xf32, #tpu.memory_space<vmem>>, vector<1x16x128xf32>
    %167 = vector.shape_cast %166 : vector<1x16x128xf32> to vector<16x128xf32>
    %168 = arith.mulf %167, %162 : vector<16x128xf32>
    %c4_93 = arith.constant 4 : index
    %c0_94 = arith.constant 0 : index
    %c0_95 = arith.constant 0 : index
    %169 = vector.load %arg18[%c4_93, %c0_94, %c0_95] : memref<8x16x128xf32, #tpu.memory_space<vmem>>, vector<1x16x128xf32>
    %170 = vector.shape_cast %169 : vector<1x16x128xf32> to vector<16x128xf32>
    %171 = arith.addf %168, %170 : vector<16x128xf32>
    %c4_96 = arith.constant 4 : index
    %c0_97 = arith.constant 0 : index
    %c0_98 = arith.constant 0 : index
    %172 = vector.load %arg19[%c4_96, %c0_97, %c0_98] : memref<8x16x128xf32, #tpu.memory_space<vmem>>, vector<1x16x128xf32>
    %173 = vector.shape_cast %172 : vector<1x16x128xf32> to vector<16x128xf32>
    %174 = vector.shape_cast %171 : vector<16x128xf32> to vector<1x16x128xf32>
    tpu.vector_store %arg19[%c4_96, %c0_97, %c0_98], %174 {strides = array<i32>} : memref<8x16x128xf32, #tpu.memory_space<vmem>>, vector<1x16x128xf32>,
    %c5 = arith.constant 5 : index
    %c0_99 = arith.constant 0 : index
    %c0_100 = arith.constant 0 : index
    %175 = vector.load %arg17[%c5, %c0_99, %c0_100] : memref<8x16x128xf32, #tpu.memory_space<vmem>>, vector<1x16x128xf32>
    %176 = vector.shape_cast %175 : vector<1x16x128xf32> to vector<16x128xf32>
    %177 = arith.mulf %176, %171 : vector<16x128xf32>
    %c5_101 = arith.constant 5 : index
    %c0_102 = arith.constant 0 : index
    %c0_103 = arith.constant 0 : index
    %178 = vector.load %arg18[%c5_101, %c0_102, %c0_103] : memref<8x16x128xf32, #tpu.memory_space<vmem>>, vector<1x16x128xf32>
    %179 = vector.shape_cast %178 : vector<1x16x128xf32> to vector<16x128xf32>
    %180 = arith.addf %177, %179 : vector<16x128xf32>
    %c5_104 = arith.constant 5 : index
    %c0_105 = arith.constant 0 : index
    %c0_106 = arith.constant 0 : index
    %181 = vector.load %arg19[%c5_104, %c0_105, %c0_106] : memref<8x16x128xf32, #tpu.memory_space<vmem>>, vector<1x16x128xf32>
    %182 = vector.shape_cast %181 : vector<1x16x128xf32> to vector<16x128xf32>
    %183 = vector.shape_cast %180 : vector<16x128xf32> to vector<1x16x128xf32>
    tpu.vector_store %arg19[%c5_104, %c0_105, %c0_106], %183 {strides = array<i32>} : memref<8x16x128xf32, #tpu.memory_space<vmem>>, vector<1x16x128xf32>,
    %c6 = arith.constant 6 : index
    %c0_107 = arith.constant 0 : index
    %c0_108 = arith.constant 0 : index
    %184 = vector.load %arg17[%c6, %c0_107, %c0_108] : memref<8x16x128xf32, #tpu.memory_space<vmem>>, vector<1x16x128xf32>
    %185 = vector.shape_cast %184 : vector<1x16x128xf32> to vector<16x128xf32>
    %186 = arith.mulf %185, %180 : vector<16x128xf32>
    %c6_109 = arith.constant 6 : index
    %c0_110 = arith.constant 0 : index
    %c0_111 = arith.constant 0 : index
    %187 = vector.load %arg18[%c6_109, %c0_110, %c0_111] : memref<8x16x128xf32, #tpu.memory_space<vmem>>, vector<1x16x128xf32>
    %188 = vector.shape_cast %187 : vector<1x16x128xf32> to vector<16x128xf32>
    %189 = arith.addf %186, %188 : vector<16x128xf32>
    %c6_112 = arith.constant 6 : index
    %c0_113 = arith.constant 0 : index
    %c0_114 = arith.constant 0 : index
    %190 = vector.load %arg19[%c6_112, %c0_113, %c0_114] : memref<8x16x128xf32, #tpu.memory_space<vmem>>, vector<1x16x128xf32>
    %191 = vector.shape_cast %190 : vector<1x16x128xf32> to vector<16x128xf32>
    %192 = vector.shape_cast %189 : vector<16x128xf32> to vector<1x16x128xf32>
    tpu.vector_store %arg19[%c6_112, %c0_113, %c0_114], %192 {strides = array<i32>} : memref<8x16x128xf32, #tpu.memory_space<vmem>>, vector<1x16x128xf32>,
    %c7 = arith.constant 7 : index
    %c0_115 = arith.constant 0 : index
    %c0_116 = arith.constant 0 : index
    %193 = vector.load %arg17[%c7, %c0_115, %c0_116] : memref<8x16x128xf32, #tpu.memory_space<vmem>>, vector<1x16x128xf32>
    %194 = vector.shape_cast %193 : vector<1x16x128xf32> to vector<16x128xf32>
    %195 = arith.mulf %194, %189 : vector<16x128xf32>
    %c7_117 = arith.constant 7 : index
    %c0_118 = arith.constant 0 : index
    %c0_119 = arith.constant 0 : index
    %196 = vector.load %arg18[%c7_117, %c0_118, %c0_119] : memref<8x16x128xf32, #tpu.memory_space<vmem>>, vector<1x16x128xf32>
    %197 = vector.shape_cast %196 : vector<1x16x128xf32> to vector<16x128xf32>
    %198 = arith.addf %195, %197 : vector<16x128xf32>
    %c7_120 = arith.constant 7 : index
    %c0_121 = arith.constant 0 : index
    %c0_122 = arith.constant 0 : index
    %199 = vector.load %arg19[%c7_120, %c0_121, %c0_122] : memref<8x16x128xf32, #tpu.memory_space<vmem>>, vector<1x16x128xf32>
    %200 = vector.shape_cast %199 : vector<1x16x128xf32> to vector<16x128xf32>
    %201 = vector.shape_cast %198 : vector<16x128xf32> to vector<1x16x128xf32>
    tpu.vector_store %arg19[%c7_120, %c0_121, %c0_122], %201 {strides = array<i32>} : memref<8x16x128xf32, #tpu.memory_space<vmem>>, vector<1x16x128xf32>,
    %c0_123 = arith.constant 0 : index
    %c0_124 = arith.constant 0 : index
    %c0_125 = arith.constant 0 : index
    %202 = vector.load %arg19[%c0_123, %c0_124, %c0_125] : memref<8x16x128xf32, #tpu.memory_space<vmem>>, vector<8x16x128xf32>
    %203 = vector.extract_strided_slice %92 {offsets = [0, 0], sizes = [8, 16], strides = [1, 1]} : vector<8x32xf32> to vector<8x16xf32>
    %204 = vector.shape_cast %203 : vector<8x16xf32> to vector<8x16x1xf32>
    %205 = vector.shape_cast %204 : vector<8x16x1xf32> to vector<8x16x1xf32>
    %206 = vector.broadcast %205 : vector<8x16x1xf32> to vector<8x16x64xf32>
    %207 = vector.extract_strided_slice %92 {offsets = [0, 16], sizes = [8, 16], strides = [1, 1]} : vector<8x32xf32> to vector<8x16xf32>
    %208 = vector.shape_cast %207 : vector<8x16xf32> to vector<8x16x1xf32>
    %209 = vector.shape_cast %208 : vector<8x16x1xf32> to vector<8x16x1xf32>
    %210 = vector.broadcast %209 : vector<8x16x1xf32> to vector<8x16x64xf32>
    %211 = tpu.concatenate %206, %210 in 2 : vector<8x16x64xf32>, vector<8x16x64xf32> -> vector<8x16x128xf32>
    %212 = arith.mulf %202, %211 : vector<8x16x128xf32>
    %cst_126 = arith.constant dense<0.000000e+00> : vector<8x128xf32>
    %213 = vector.multi_reduction <add>, %212, %cst_126 [1] : vector<8x16x128xf32> to vector<8x128xf32>
    %c0_127 = arith.constant 0 : index
    %c0_128 = arith.constant 0 : index
    %c0_129 = arith.constant 0 : index
    %214 = vector.load %arg13[%c0_127, %c0_128, %c0_129] : memref<2x1x128xf32, #tpu.memory_space<vmem>>, vector<1x1x128xf32>
    %215 = vector.shape_cast %214 : vector<1x1x128xf32> to vector<1x128xf32>
    %216 = vector.broadcast %215 : vector<1x128xf32> to vector<8x128xf32>
    %217 = arith.mulf %79, %216 : vector<8x128xf32>
    %218 = arith.addf %213, %217 : vector<8x128xf32>
    %219 = vector.extract_strided_slice %218 {offsets = [0, 0], sizes = [8, 64], strides = [1, 1]} : vector<8x128xf32> to vector<8x64xf32>
    %220 = vector.extract_strided_slice %218 {offsets = [0, 64], sizes = [8, 64], strides = [1, 1]} : vector<8x128xf32> to vector<8x64xf32>
    %221 = tpu.concatenate %219, %220 in 0 : vector<8x64xf32>, vector<8x64xf32> -> vector<16x64xf32>
    %cst_130 = arith.constant 0.000000e+00 : f32
    %222 = vector.broadcast %cst_130 : f32 to vector<16x64xf32>
    %223 = arith.subf %222, %44 : vector<16x64xf32>
    %224 = math.exp %223 : vector<16x64xf32>
    %cst_131 = arith.constant 1.000000e+00 : f32
    %225 = vector.broadcast %cst_131 : f32 to vector<16x64xf32>
    %226 = arith.addf %225, %224 : vector<16x64xf32>
    %cst_132 = arith.constant 1.000000e+00 : f32
    %227 = vector.broadcast %cst_132 : f32 to vector<16x64xf32>
    %228 = arith.divf %227, %226 : vector<16x64xf32>
    %229 = arith.mulf %44, %228 : vector<16x64xf32>
    %230 = arith.mulf %221, %229 : vector<16x64xf32>
    %c0_133 = arith.constant 0 : index
    %c0_134 = arith.constant 0 : index
    %c0_135 = arith.constant 0 : index
    %231 = vector.load %arg14[%c0_133, %c0_134, %c0_135] : memref<2x64x32xf32, #tpu.memory_space<vmem>>, vector<1x64x32xf32>
    %232 = vector.shape_cast %231 : vector<1x64x32xf32> to vector<64x32xf32>
    %cst_136 = arith.constant dense<0.000000e+00> : vector<16x32xf32>
    %233 = tpu.matmul %230, %232, %cst_136 {dimension_numbers = #tpu.dot_dimension_numbers<[1], [0], [0], [1], [0, 0, 1, 1], [], []>} : vector<16x64xf32>, vector<64x32xf32>, vector<16x32xf32> -> vector<16x32xf32>
    %234 = arith.addf %7, %233 : vector<16x32xf32>
    %c1_137 = arith.constant 1 : index
    %c0_138 = arith.constant 0 : index
    %c0_139 = arith.constant 0 : index
    %235 = vector.load %arg3[%c1_137, %c0_138, %c0_139] : memref<2x1x32xf32, #tpu.memory_space<vmem>>, vector<1x1x32xf32>
    %236 = vector.shape_cast %235 : vector<1x1x32xf32> to vector<1x32xf32>
    %237 = arith.mulf %234, %234 : vector<16x32xf32>
    %cst_140 = arith.constant dense<0.000000e+00> : vector<16xf32>
    %238 = vector.multi_reduction <add>, %237, %cst_140 [1] : vector<16x32xf32> to vector<16xf32>
    %239 = vector.shape_cast %238 : vector<16xf32> to vector<16x1xf32>
    %cst_141 = arith.constant 3.200000e+01 : f32
    %240 = vector.broadcast %cst_141 : f32 to vector<16x1xf32>
    %241 = arith.divf %239, %240 : vector<16x1xf32>
    %cst_142 = arith.constant 9.99999974E-6 : f32
    %242 = vector.broadcast %cst_142 : f32 to vector<16x1xf32>
    %243 = arith.addf %241, %242 : vector<16x1xf32>
    %244 = math.rsqrt %243 : vector<16x1xf32>
    %245 = vector.broadcast %244 : vector<16x1xf32> to vector<16x32xf32>
    %246 = arith.mulf %234, %245 : vector<16x32xf32>
    %247 = vector.broadcast %236 : vector<1x32xf32> to vector<16x32xf32>
    %248 = arith.mulf %246, %247 : vector<16x32xf32>
    %c1_143 = arith.constant 1 : index
    %c0_144 = arith.constant 0 : index
    %c0_145 = arith.constant 0 : index
    %249 = vector.load %arg4[%c1_143, %c0_144, %c0_145] : memref<2x32x64xf32, #tpu.memory_space<vmem>>, vector<1x32x64xf32>
    %250 = vector.shape_cast %249 : vector<1x32x64xf32> to vector<32x64xf32>
    %cst_146 = arith.constant dense<0.000000e+00> : vector<16x64xf32>
    %251 = tpu.matmul %248, %250, %cst_146 {dimension_numbers = #tpu.dot_dimension_numbers<[1], [0], [0], [1], [0, 0, 1, 1], [], []>} : vector<16x32xf32>, vector<32x64xf32>, vector<16x64xf32> -> vector<16x64xf32>
    %c1_147 = arith.constant 1 : index
    %c0_148 = arith.constant 0 : index
    %c0_149 = arith.constant 0 : index
    %252 = vector.load %arg5[%c1_147, %c0_148, %c0_149] : memref<2x32x64xf32, #tpu.memory_space<vmem>>, vector<1x32x64xf32>
    %253 = vector.shape_cast %252 : vector<1x32x64xf32> to vector<32x64xf32>
    %cst_150 = arith.constant dense<0.000000e+00> : vector<16x64xf32>
    %254 = tpu.matmul %248, %253, %cst_150 {dimension_numbers = #tpu.dot_dimension_numbers<[1], [0], [0], [1], [0, 0, 1, 1], [], []>} : vector<16x32xf32>, vector<32x64xf32>, vector<16x64xf32> -> vector<16x64xf32>
    %255 = vector.extract_strided_slice %251 {offsets = [0, 0], sizes = [8, 64], strides = [1, 1]} : vector<16x64xf32> to vector<8x64xf32>
    %256 = vector.extract_strided_slice %251 {offsets = [8, 0], sizes = [8, 64], strides = [1, 1]} : vector<16x64xf32> to vector<8x64xf32>
    %257 = tpu.concatenate %255, %256 in 1 : vector<8x64xf32>, vector<8x64xf32> -> vector<8x128xf32>
    %c1_151 = arith.constant 1 : index
    %c0_152 = arith.constant 0 : index
    %c0_153 = arith.constant 0 : index
    %258 = vector.load %arg6[%c1_151, %c0_152, %c0_153] : memref<2x4x128xf32, #tpu.memory_space<vmem>>, vector<1x4x128xf32>
    %259 = vector.shape_cast %258 : vector<1x4x128xf32> to vector<4x128xf32>
    %260 = vector.extract_strided_slice %259 {offsets = [3, 0], sizes = [1, 128], strides = [1, 1]} : vector<4x128xf32> to vector<1x128xf32>
    %261 = vector.broadcast %260 : vector<1x128xf32> to vector<8x128xf32>
    %262 = arith.mulf %257, %261 : vector<8x128xf32>
    %cst_154 = arith.constant dense<0.000000e+00> : vector<8x128xf32>
    %263 = tpu.matmul %24, %257, %cst_154 {dimension_numbers = #tpu.dot_dimension_numbers<[1], [0], [0], [1], [0, 0, 1, 1], [], []>} : vector<8x8xf32>, vector<8x128xf32>, vector<8x128xf32> -> vector<8x128xf32>
    %264 = vector.extract_strided_slice %259 {offsets = [0, 0], sizes = [1, 128], strides = [1, 1]} : vector<4x128xf32> to vector<1x128xf32>
    %265 = vector.broadcast %264 : vector<1x128xf32> to vector<8x128xf32>
    %266 = arith.mulf %263, %265 : vector<8x128xf32>
    %267 = arith.addf %262, %266 : vector<8x128xf32>
    %cst_155 = arith.constant dense<0.000000e+00> : vector<8x128xf32>
    %268 = tpu.matmul %19, %257, %cst_155 {dimension_numbers = #tpu.dot_dimension_numbers<[1], [0], [0], [1], [0, 0, 1, 1], [], []>} : vector<8x8xf32>, vector<8x128xf32>, vector<8x128xf32> -> vector<8x128xf32>
    %269 = vector.extract_strided_slice %259 {offsets = [1, 0], sizes = [1, 128], strides = [1, 1]} : vector<4x128xf32> to vector<1x128xf32>
    %270 = vector.broadcast %269 : vector<1x128xf32> to vector<8x128xf32>
    %271 = arith.mulf %268, %270 : vector<8x128xf32>
    %272 = arith.addf %267, %271 : vector<8x128xf32>
    %cst_156 = arith.constant dense<0.000000e+00> : vector<8x128xf32>
    %273 = tpu.matmul %14, %257, %cst_156 {dimension_numbers = #tpu.dot_dimension_numbers<[1], [0], [0], [1], [0, 0, 1, 1], [], []>} : vector<8x8xf32>, vector<8x128xf32>, vector<8x128xf32> -> vector<8x128xf32>
    %274 = vector.extract_strided_slice %259 {offsets = [2, 0], sizes = [1, 128], strides = [1, 1]} : vector<4x128xf32> to vector<1x128xf32>
    %275 = vector.broadcast %274 : vector<1x128xf32> to vector<8x128xf32>
    %276 = arith.mulf %273, %275 : vector<8x128xf32>
    %277 = arith.addf %272, %276 : vector<8x128xf32>
    %c1_157 = arith.constant 1 : index
    %c0_158 = arith.constant 0 : index
    %c0_159 = arith.constant 0 : index
    %278 = vector.load %arg7[%c1_157, %c0_158, %c0_159] : memref<2x1x128xf32, #tpu.memory_space<vmem>>, vector<1x1x128xf32>
    %279 = vector.shape_cast %278 : vector<1x1x128xf32> to vector<1x128xf32>
    %280 = vector.broadcast %279 : vector<1x128xf32> to vector<8x128xf32>
    %281 = arith.addf %277, %280 : vector<8x128xf32>
    %cst_160 = arith.constant 0.000000e+00 : f32
    %282 = vector.broadcast %cst_160 : f32 to vector<8x128xf32>
    %283 = arith.subf %282, %281 : vector<8x128xf32>
    %284 = math.exp %283 : vector<8x128xf32>
    %cst_161 = arith.constant 1.000000e+00 : f32
    %285 = vector.broadcast %cst_161 : f32 to vector<8x128xf32>
    %286 = arith.addf %285, %284 : vector<8x128xf32>
    %cst_162 = arith.constant 1.000000e+00 : f32
    %287 = vector.broadcast %cst_162 : f32 to vector<8x128xf32>
    %288 = arith.divf %287, %286 : vector<8x128xf32>
    %289 = arith.mulf %281, %288 : vector<8x128xf32>
    %c1_163 = arith.constant 1 : index
    %c0_164 = arith.constant 0 : index
    %c0_165 = arith.constant 0 : index
    %290 = vector.load %arg8[%c1_163, %c0_164, %c0_165] : memref<2x128x128xf32, #tpu.memory_space<vmem>>, vector<1x128x128xf32>
    %291 = vector.shape_cast %290 : vector<1x128x128xf32> to vector<128x128xf32>
    %cst_166 = arith.constant dense<0.000000e+00> : vector<8x128xf32>
    %292 = tpu.matmul %289, %291, %cst_166 {dimension_numbers = #tpu.dot_dimension_numbers<[1], [0], [0], [1], [0, 0, 1, 1], [], []>} : vector<8x128xf32>, vector<128x128xf32>, vector<8x128xf32> -> vector<8x128xf32>
    %c1_167 = arith.constant 1 : index
    %c0_168 = arith.constant 0 : index
    %c0_169 = arith.constant 0 : index
    %293 = vector.load %arg9[%c1_167, %c0_168, %c0_169] : memref<2x1x128xf32, #tpu.memory_space<vmem>>, vector<1x1x128xf32>
    %294 = vector.shape_cast %293 : vector<1x1x128xf32> to vector<1x128xf32>
    %295 = vector.broadcast %294 : vector<1x128xf32> to vector<8x128xf32>
    %296 = arith.addf %292, %295 : vector<8x128xf32>
    %c1_170 = arith.constant 1 : index
    %c0_171 = arith.constant 0 : index
    %c0_172 = arith.constant 0 : index
    %297 = vector.load %arg10[%c1_170, %c0_171, %c0_172] : memref<2x128x32xf32, #tpu.memory_space<vmem>>, vector<1x128x32xf32>
    %298 = vector.shape_cast %297 : vector<1x128x32xf32> to vector<128x32xf32>
    %cst_173 = arith.constant dense<0.000000e+00> : vector<8x32xf32>
    %299 = tpu.matmul %289, %298, %cst_173 {dimension_numbers = #tpu.dot_dimension_numbers<[1], [0], [0], [1], [0, 0, 1, 1], [], []>} : vector<8x128xf32>, vector<128x32xf32>, vector<8x32xf32> -> vector<8x32xf32>
    %c1_174 = arith.constant 1 : index
    %c0_175 = arith.constant 0 : index
    %c0_176 = arith.constant 0 : index
    %300 = vector.load %arg11[%c1_174, %c0_175, %c0_176] : memref<2x128x32xf32, #tpu.memory_space<vmem>>, vector<1x128x32xf32>
    %301 = vector.shape_cast %300 : vector<1x128x32xf32> to vector<128x32xf32>
    %cst_177 = arith.constant dense<0.000000e+00> : vector<8x32xf32>
    %302 = tpu.matmul %289, %301, %cst_177 {dimension_numbers = #tpu.dot_dimension_numbers<[1], [0], [0], [1], [0, 0, 1, 1], [], []>} : vector<8x128xf32>, vector<128x32xf32>, vector<8x32xf32> -> vector<8x32xf32>
    %cst_178 = arith.constant 0.000000e+00 : f32
    %303 = vector.broadcast %cst_178 : f32 to vector<8x128xf32>
    %304 = arith.maximumf %296, %303 : vector<8x128xf32>
    %305 = math.absf %296 : vector<8x128xf32>
    %cst_179 = arith.constant 0.000000e+00 : f32
    %306 = vector.broadcast %cst_179 : f32 to vector<8x128xf32>
    %307 = arith.subf %306, %305 : vector<8x128xf32>
    %308 = math.exp %307 : vector<8x128xf32>
    %cst_180 = arith.constant 1.000000e+00 : f32
    %309 = vector.broadcast %cst_180 : f32 to vector<8x128xf32>
    %310 = arith.addf %309, %308 : vector<8x128xf32>
    %311 = math.log %310 : vector<8x128xf32>
    %312 = arith.addf %304, %311 : vector<8x128xf32>
    %cst_181 = arith.constant 2.000000e+01 : f32
    %313 = vector.broadcast %cst_181 : f32 to vector<8x128xf32>
    %314 = arith.cmpf ogt, %296, %313 : vector<8x128xf32>
    %315 = arith.select %314, %296, %312 : vector<8x128xi1>, vector<8x128xf32>
    %316 = vector.shape_cast %315 : vector<8x128xf32> to vector<8x1x128xf32>
    %c1_182 = arith.constant 1 : index
    %c0_183 = arith.constant 0 : index
    %c0_184 = arith.constant 0 : index
    %317 = vector.load %arg12[%c1_182, %c0_183, %c0_184] : memref<2x16x128xf32, #tpu.memory_space<vmem>>, vector<1x16x128xf32>
    %318 = vector.shape_cast %317 : vector<1x16x128xf32> to vector<16x128xf32>
    %319 = vector.shape_cast %318 : vector<16x128xf32> to vector<1x16x128xf32>
    %320 = vector.broadcast %316 : vector<8x1x128xf32> to vector<8x16x128xf32>
    %321 = vector.broadcast %319 : vector<1x16x128xf32> to vector<8x16x128xf32>
    %322 = arith.mulf %320, %321 : vector<8x16x128xf32>
    %323 = math.exp %322 : vector<8x16x128xf32>
    %c0_185 = arith.constant 0 : index
    %c0_186 = arith.constant 0 : index
    %c0_187 = arith.constant 0 : index
    %324 = vector.load %arg17[%c0_185, %c0_186, %c0_187] : memref<8x16x128xf32, #tpu.memory_space<vmem>>, vector<8x16x128xf32>
    tpu.vector_store %arg17[%c0_185, %c0_186, %c0_187], %323 {strides = array<i32>} : memref<8x16x128xf32, #tpu.memory_space<vmem>>, vector<8x16x128xf32>,
    %325 = arith.mulf %315, %289 : vector<8x128xf32>
    %326 = vector.shape_cast %325 : vector<8x128xf32> to vector<8x1x128xf32>
    %327 = vector.extract_strided_slice %299 {offsets = [0, 0], sizes = [8, 16], strides = [1, 1]} : vector<8x32xf32> to vector<8x16xf32>
    %328 = vector.shape_cast %327 : vector<8x16xf32> to vector<8x16x1xf32>
    %329 = vector.shape_cast %328 : vector<8x16x1xf32> to vector<8x16x1xf32>
    %330 = vector.broadcast %329 : vector<8x16x1xf32> to vector<8x16x64xf32>
    %331 = vector.extract_strided_slice %299 {offsets = [0, 16], sizes = [8, 16], strides = [1, 1]} : vector<8x32xf32> to vector<8x16xf32>
    %332 = vector.shape_cast %331 : vector<8x16xf32> to vector<8x16x1xf32>
    %333 = vector.shape_cast %332 : vector<8x16x1xf32> to vector<8x16x1xf32>
    %334 = vector.broadcast %333 : vector<8x16x1xf32> to vector<8x16x64xf32>
    %335 = tpu.concatenate %330, %334 in 2 : vector<8x16x64xf32>, vector<8x16x64xf32> -> vector<8x16x128xf32>
    %336 = vector.broadcast %326 : vector<8x1x128xf32> to vector<8x16x128xf32>
    %337 = arith.mulf %336, %335 : vector<8x16x128xf32>
    %c0_188 = arith.constant 0 : index
    %c0_189 = arith.constant 0 : index
    %c0_190 = arith.constant 0 : index
    %338 = vector.load %arg18[%c0_188, %c0_189, %c0_190] : memref<8x16x128xf32, #tpu.memory_space<vmem>>, vector<8x16x128xf32>
    tpu.vector_store %arg18[%c0_188, %c0_189, %c0_190], %337 {strides = array<i32>} : memref<8x16x128xf32, #tpu.memory_space<vmem>>, vector<8x16x128xf32>,
    %cst_191 = arith.constant 0.000000e+00 : f32
    %339 = vector.broadcast %cst_191 : f32 to vector<16x128xf32>
    %c0_192 = arith.constant 0 : index
    %c0_193 = arith.constant 0 : index
    %c0_194 = arith.constant 0 : index
    %340 = vector.load %arg17[%c0_192, %c0_193, %c0_194] : memref<8x16x128xf32, #tpu.memory_space<vmem>>, vector<1x16x128xf32>
    %341 = vector.shape_cast %340 : vector<1x16x128xf32> to vector<16x128xf32>
    %342 = arith.mulf %341, %339 : vector<16x128xf32>
    %c0_195 = arith.constant 0 : index
    %c0_196 = arith.constant 0 : index
    %c0_197 = arith.constant 0 : index
    %343 = vector.load %arg18[%c0_195, %c0_196, %c0_197] : memref<8x16x128xf32, #tpu.memory_space<vmem>>, vector<1x16x128xf32>
    %344 = vector.shape_cast %343 : vector<1x16x128xf32> to vector<16x128xf32>
    %345 = arith.addf %342, %344 : vector<16x128xf32>
    %c0_198 = arith.constant 0 : index
    %c0_199 = arith.constant 0 : index
    %c0_200 = arith.constant 0 : index
    %346 = vector.load %arg19[%c0_198, %c0_199, %c0_200] : memref<8x16x128xf32, #tpu.memory_space<vmem>>, vector<1x16x128xf32>
    %347 = vector.shape_cast %346 : vector<1x16x128xf32> to vector<16x128xf32>
    %348 = vector.shape_cast %345 : vector<16x128xf32> to vector<1x16x128xf32>
    tpu.vector_store %arg19[%c0_198, %c0_199, %c0_200], %348 {strides = array<i32>} : memref<8x16x128xf32, #tpu.memory_space<vmem>>, vector<1x16x128xf32>,
    %c1_201 = arith.constant 1 : index
    %c0_202 = arith.constant 0 : index
    %c0_203 = arith.constant 0 : index
    %349 = vector.load %arg17[%c1_201, %c0_202, %c0_203] : memref<8x16x128xf32, #tpu.memory_space<vmem>>, vector<1x16x128xf32>
    %350 = vector.shape_cast %349 : vector<1x16x128xf32> to vector<16x128xf32>
    %351 = arith.mulf %350, %345 : vector<16x128xf32>
    %c1_204 = arith.constant 1 : index
    %c0_205 = arith.constant 0 : index
    %c0_206 = arith.constant 0 : index
    %352 = vector.load %arg18[%c1_204, %c0_205, %c0_206] : memref<8x16x128xf32, #tpu.memory_space<vmem>>, vector<1x16x128xf32>
    %353 = vector.shape_cast %352 : vector<1x16x128xf32> to vector<16x128xf32>
    %354 = arith.addf %351, %353 : vector<16x128xf32>
    %c1_207 = arith.constant 1 : index
    %c0_208 = arith.constant 0 : index
    %c0_209 = arith.constant 0 : index
    %355 = vector.load %arg19[%c1_207, %c0_208, %c0_209] : memref<8x16x128xf32, #tpu.memory_space<vmem>>, vector<1x16x128xf32>
    %356 = vector.shape_cast %355 : vector<1x16x128xf32> to vector<16x128xf32>
    %357 = vector.shape_cast %354 : vector<16x128xf32> to vector<1x16x128xf32>
    tpu.vector_store %arg19[%c1_207, %c0_208, %c0_209], %357 {strides = array<i32>} : memref<8x16x128xf32, #tpu.memory_space<vmem>>, vector<1x16x128xf32>,
    %c2_210 = arith.constant 2 : index
    %c0_211 = arith.constant 0 : index
    %c0_212 = arith.constant 0 : index
    %358 = vector.load %arg17[%c2_210, %c0_211, %c0_212] : memref<8x16x128xf32, #tpu.memory_space<vmem>>, vector<1x16x128xf32>
    %359 = vector.shape_cast %358 : vector<1x16x128xf32> to vector<16x128xf32>
    %360 = arith.mulf %359, %354 : vector<16x128xf32>
    %c2_213 = arith.constant 2 : index
    %c0_214 = arith.constant 0 : index
    %c0_215 = arith.constant 0 : index
    %361 = vector.load %arg18[%c2_213, %c0_214, %c0_215] : memref<8x16x128xf32, #tpu.memory_space<vmem>>, vector<1x16x128xf32>
    %362 = vector.shape_cast %361 : vector<1x16x128xf32> to vector<16x128xf32>
    %363 = arith.addf %360, %362 : vector<16x128xf32>
    %c2_216 = arith.constant 2 : index
    %c0_217 = arith.constant 0 : index
    %c0_218 = arith.constant 0 : index
    %364 = vector.load %arg19[%c2_216, %c0_217, %c0_218] : memref<8x16x128xf32, #tpu.memory_space<vmem>>, vector<1x16x128xf32>
    %365 = vector.shape_cast %364 : vector<1x16x128xf32> to vector<16x128xf32>
    %366 = vector.shape_cast %363 : vector<16x128xf32> to vector<1x16x128xf32>
    tpu.vector_store %arg19[%c2_216, %c0_217, %c0_218], %366 {strides = array<i32>} : memref<8x16x128xf32, #tpu.memory_space<vmem>>, vector<1x16x128xf32>,
    %c3_219 = arith.constant 3 : index
    %c0_220 = arith.constant 0 : index
    %c0_221 = arith.constant 0 : index
    %367 = vector.load %arg17[%c3_219, %c0_220, %c0_221] : memref<8x16x128xf32, #tpu.memory_space<vmem>>, vector<1x16x128xf32>
    %368 = vector.shape_cast %367 : vector<1x16x128xf32> to vector<16x128xf32>
    %369 = arith.mulf %368, %363 : vector<16x128xf32>
    %c3_222 = arith.constant 3 : index
    %c0_223 = arith.constant 0 : index
    %c0_224 = arith.constant 0 : index
    %370 = vector.load %arg18[%c3_222, %c0_223, %c0_224] : memref<8x16x128xf32, #tpu.memory_space<vmem>>, vector<1x16x128xf32>
    %371 = vector.shape_cast %370 : vector<1x16x128xf32> to vector<16x128xf32>
    %372 = arith.addf %369, %371 : vector<16x128xf32>
    %c3_225 = arith.constant 3 : index
    %c0_226 = arith.constant 0 : index
    %c0_227 = arith.constant 0 : index
    %373 = vector.load %arg19[%c3_225, %c0_226, %c0_227] : memref<8x16x128xf32, #tpu.memory_space<vmem>>, vector<1x16x128xf32>
    %374 = vector.shape_cast %373 : vector<1x16x128xf32> to vector<16x128xf32>
    %375 = vector.shape_cast %372 : vector<16x128xf32> to vector<1x16x128xf32>
    tpu.vector_store %arg19[%c3_225, %c0_226, %c0_227], %375 {strides = array<i32>} : memref<8x16x128xf32, #tpu.memory_space<vmem>>, vector<1x16x128xf32>,
    %c4_228 = arith.constant 4 : index
    %c0_229 = arith.constant 0 : index
    %c0_230 = arith.constant 0 : index
    %376 = vector.load %arg17[%c4_228, %c0_229, %c0_230] : memref<8x16x128xf32, #tpu.memory_space<vmem>>, vector<1x16x128xf32>
    %377 = vector.shape_cast %376 : vector<1x16x128xf32> to vector<16x128xf32>
    %378 = arith.mulf %377, %372 : vector<16x128xf32>
    %c4_231 = arith.constant 4 : index
    %c0_232 = arith.constant 0 : index
    %c0_233 = arith.constant 0 : index
    %379 = vector.load %arg18[%c4_231, %c0_232, %c0_233] : memref<8x16x128xf32, #tpu.memory_space<vmem>>, vector<1x16x128xf32>
    %380 = vector.shape_cast %379 : vector<1x16x128xf32> to vector<16x128xf32>
    %381 = arith.addf %378, %380 : vector<16x128xf32>
    %c4_234 = arith.constant 4 : index
    %c0_235 = arith.constant 0 : index
    %c0_236 = arith.constant 0 : index
    %382 = vector.load %arg19[%c4_234, %c0_235, %c0_236] : memref<8x16x128xf32, #tpu.memory_space<vmem>>, vector<1x16x128xf32>
    %383 = vector.shape_cast %382 : vector<1x16x128xf32> to vector<16x128xf32>
    %384 = vector.shape_cast %381 : vector<16x128xf32> to vector<1x16x128xf32>
    tpu.vector_store %arg19[%c4_234, %c0_235, %c0_236], %384 {strides = array<i32>} : memref<8x16x128xf32, #tpu.memory_space<vmem>>, vector<1x16x128xf32>,
    %c5_237 = arith.constant 5 : index
    %c0_238 = arith.constant 0 : index
    %c0_239 = arith.constant 0 : index
    %385 = vector.load %arg17[%c5_237, %c0_238, %c0_239] : memref<8x16x128xf32, #tpu.memory_space<vmem>>, vector<1x16x128xf32>
    %386 = vector.shape_cast %385 : vector<1x16x128xf32> to vector<16x128xf32>
    %387 = arith.mulf %386, %381 : vector<16x128xf32>
    %c5_240 = arith.constant 5 : index
    %c0_241 = arith.constant 0 : index
    %c0_242 = arith.constant 0 : index
    %388 = vector.load %arg18[%c5_240, %c0_241, %c0_242] : memref<8x16x128xf32, #tpu.memory_space<vmem>>, vector<1x16x128xf32>
    %389 = vector.shape_cast %388 : vector<1x16x128xf32> to vector<16x128xf32>
    %390 = arith.addf %387, %389 : vector<16x128xf32>
    %c5_243 = arith.constant 5 : index
    %c0_244 = arith.constant 0 : index
    %c0_245 = arith.constant 0 : index
    %391 = vector.load %arg19[%c5_243, %c0_244, %c0_245] : memref<8x16x128xf32, #tpu.memory_space<vmem>>, vector<1x16x128xf32>
    %392 = vector.shape_cast %391 : vector<1x16x128xf32> to vector<16x128xf32>
    %393 = vector.shape_cast %390 : vector<16x128xf32> to vector<1x16x128xf32>
    tpu.vector_store %arg19[%c5_243, %c0_244, %c0_245], %393 {strides = array<i32>} : memref<8x16x128xf32, #tpu.memory_space<vmem>>, vector<1x16x128xf32>,
    %c6_246 = arith.constant 6 : index
    %c0_247 = arith.constant 0 : index
    %c0_248 = arith.constant 0 : index
    %394 = vector.load %arg17[%c6_246, %c0_247, %c0_248] : memref<8x16x128xf32, #tpu.memory_space<vmem>>, vector<1x16x128xf32>
    %395 = vector.shape_cast %394 : vector<1x16x128xf32> to vector<16x128xf32>
    %396 = arith.mulf %395, %390 : vector<16x128xf32>
    %c6_249 = arith.constant 6 : index
    %c0_250 = arith.constant 0 : index
    %c0_251 = arith.constant 0 : index
    %397 = vector.load %arg18[%c6_249, %c0_250, %c0_251] : memref<8x16x128xf32, #tpu.memory_space<vmem>>, vector<1x16x128xf32>
    %398 = vector.shape_cast %397 : vector<1x16x128xf32> to vector<16x128xf32>
    %399 = arith.addf %396, %398 : vector<16x128xf32>
    %c6_252 = arith.constant 6 : index
    %c0_253 = arith.constant 0 : index
    %c0_254 = arith.constant 0 : index
    %400 = vector.load %arg19[%c6_252, %c0_253, %c0_254] : memref<8x16x128xf32, #tpu.memory_space<vmem>>, vector<1x16x128xf32>
    %401 = vector.shape_cast %400 : vector<1x16x128xf32> to vector<16x128xf32>
    %402 = vector.shape_cast %399 : vector<16x128xf32> to vector<1x16x128xf32>
    tpu.vector_store %arg19[%c6_252, %c0_253, %c0_254], %402 {strides = array<i32>} : memref<8x16x128xf32, #tpu.memory_space<vmem>>, vector<1x16x128xf32>,
    %c7_255 = arith.constant 7 : index
    %c0_256 = arith.constant 0 : index
    %c0_257 = arith.constant 0 : index
    %403 = vector.load %arg17[%c7_255, %c0_256, %c0_257] : memref<8x16x128xf32, #tpu.memory_space<vmem>>, vector<1x16x128xf32>
    %404 = vector.shape_cast %403 : vector<1x16x128xf32> to vector<16x128xf32>
    %405 = arith.mulf %404, %399 : vector<16x128xf32>
    %c7_258 = arith.constant 7 : index
    %c0_259 = arith.constant 0 : index
    %c0_260 = arith.constant 0 : index
    %406 = vector.load %arg18[%c7_258, %c0_259, %c0_260] : memref<8x16x128xf32, #tpu.memory_space<vmem>>, vector<1x16x128xf32>
    %407 = vector.shape_cast %406 : vector<1x16x128xf32> to vector<16x128xf32>
    %408 = arith.addf %405, %407 : vector<16x128xf32>
    %c7_261 = arith.constant 7 : index
    %c0_262 = arith.constant 0 : index
    %c0_263 = arith.constant 0 : index
    %409 = vector.load %arg19[%c7_261, %c0_262, %c0_263] : memref<8x16x128xf32, #tpu.memory_space<vmem>>, vector<1x16x128xf32>
    %410 = vector.shape_cast %409 : vector<1x16x128xf32> to vector<16x128xf32>
    %411 = vector.shape_cast %408 : vector<16x128xf32> to vector<1x16x128xf32>
    tpu.vector_store %arg19[%c7_261, %c0_262, %c0_263], %411 {strides = array<i32>} : memref<8x16x128xf32, #tpu.memory_space<vmem>>, vector<1x16x128xf32>,
    %c0_264 = arith.constant 0 : index
    %c0_265 = arith.constant 0 : index
    %c0_266 = arith.constant 0 : index
    %412 = vector.load %arg19[%c0_264, %c0_265, %c0_266] : memref<8x16x128xf32, #tpu.memory_space<vmem>>, vector<8x16x128xf32>
    %413 = vector.extract_strided_slice %302 {offsets = [0, 0], sizes = [8, 16], strides = [1, 1]} : vector<8x32xf32> to vector<8x16xf32>
    %414 = vector.shape_cast %413 : vector<8x16xf32> to vector<8x16x1xf32>
    %415 = vector.shape_cast %414 : vector<8x16x1xf32> to vector<8x16x1xf32>
    %416 = vector.broadcast %415 : vector<8x16x1xf32> to vector<8x16x64xf32>
    %417 = vector.extract_strided_slice %302 {offsets = [0, 16], sizes = [8, 16], strides = [1, 1]} : vector<8x32xf32> to vector<8x16xf32>
    %418 = vector.shape_cast %417 : vector<8x16xf32> to vector<8x16x1xf32>
    %419 = vector.shape_cast %418 : vector<8x16x1xf32> to vector<8x16x1xf32>
    %420 = vector.broadcast %419 : vector<8x16x1xf32> to vector<8x16x64xf32>
    %421 = tpu.concatenate %416, %420 in 2 : vector<8x16x64xf32>, vector<8x16x64xf32> -> vector<8x16x128xf32>
    %422 = arith.mulf %412, %421 : vector<8x16x128xf32>
    %cst_267 = arith.constant dense<0.000000e+00> : vector<8x128xf32>
    %423 = vector.multi_reduction <add>, %422, %cst_267 [1] : vector<8x16x128xf32> to vector<8x128xf32>
    %c1_268 = arith.constant 1 : index
    %c0_269 = arith.constant 0 : index
    %c0_270 = arith.constant 0 : index
    %424 = vector.load %arg13[%c1_268, %c0_269, %c0_270] : memref<2x1x128xf32, #tpu.memory_space<vmem>>, vector<1x1x128xf32>
    %425 = vector.shape_cast %424 : vector<1x1x128xf32> to vector<1x128xf32>
    %426 = vector.broadcast %425 : vector<1x128xf32> to vector<8x128xf32>
    %427 = arith.mulf %289, %426 : vector<8x128xf32>
    %428 = arith.addf %423, %427 : vector<8x128xf32>
    %429 = vector.extract_strided_slice %428 {offsets = [0, 0], sizes = [8, 64], strides = [1, 1]} : vector<8x128xf32> to vector<8x64xf32>
    %430 = vector.extract_strided_slice %428 {offsets = [0, 64], sizes = [8, 64], strides = [1, 1]} : vector<8x128xf32> to vector<8x64xf32>
    %431 = tpu.concatenate %429, %430 in 0 : vector<8x64xf32>, vector<8x64xf32> -> vector<16x64xf32>
    %cst_271 = arith.constant 0.000000e+00 : f32
    %432 = vector.broadcast %cst_271 : f32 to vector<16x64xf32>
    %433 = arith.subf %432, %254 : vector<16x64xf32>
    %434 = math.exp %433 : vector<16x64xf32>
    %cst_272 = arith.constant 1.000000e+00 : f32
    %435 = vector.broadcast %cst_272 : f32 to vector<16x64xf32>
    %436 = arith.addf %435, %434 : vector<16x64xf32>
    %cst_273 = arith.constant 1.000000e+00 : f32
    %437 = vector.broadcast %cst_273 : f32 to vector<16x64xf32>
    %438 = arith.divf %437, %436 : vector<16x64xf32>
    %439 = arith.mulf %254, %438 : vector<16x64xf32>
    %440 = arith.mulf %431, %439 : vector<16x64xf32>
    %c1_274 = arith.constant 1 : index
    %c0_275 = arith.constant 0 : index
    %c0_276 = arith.constant 0 : index
    %441 = vector.load %arg14[%c1_274, %c0_275, %c0_276] : memref<2x64x32xf32, #tpu.memory_space<vmem>>, vector<1x64x32xf32>
    %442 = vector.shape_cast %441 : vector<1x64x32xf32> to vector<64x32xf32>
    %cst_277 = arith.constant dense<0.000000e+00> : vector<16x32xf32>
    %443 = tpu.matmul %440, %442, %cst_277 {dimension_numbers = #tpu.dot_dimension_numbers<[1], [0], [0], [1], [0, 0, 1, 1], [], []>} : vector<16x64xf32>, vector<64x32xf32>, vector<16x32xf32> -> vector<16x32xf32>
    %444 = arith.addf %234, %443 : vector<16x32xf32>
    %c0_278 = arith.constant 0 : index
    %c0_279 = arith.constant 0 : index
    %445 = vector.load %arg15[%c0_278, %c0_279] : memref<1x32xf32, #tpu.memory_space<vmem>>, vector<1x32xf32>
    %446 = arith.mulf %444, %444 : vector<16x32xf32>
    %cst_280 = arith.constant dense<0.000000e+00> : vector<16xf32>
    %447 = vector.multi_reduction <add>, %446, %cst_280 [1] : vector<16x32xf32> to vector<16xf32>
    %448 = vector.shape_cast %447 : vector<16xf32> to vector<16x1xf32>
    %cst_281 = arith.constant 3.200000e+01 : f32
    %449 = vector.broadcast %cst_281 : f32 to vector<16x1xf32>
    %450 = arith.divf %448, %449 : vector<16x1xf32>
    %cst_282 = arith.constant 9.99999974E-6 : f32
    %451 = vector.broadcast %cst_282 : f32 to vector<16x1xf32>
    %452 = arith.addf %450, %451 : vector<16x1xf32>
    %453 = math.rsqrt %452 : vector<16x1xf32>
    %454 = vector.broadcast %453 : vector<16x1xf32> to vector<16x32xf32>
    %455 = arith.mulf %444, %454 : vector<16x32xf32>
    %456 = vector.broadcast %445 : vector<1x32xf32> to vector<16x32xf32>
    %457 = arith.mulf %455, %456 : vector<16x32xf32>
    %c0_283 = arith.constant 0 : index
    %c0_284 = arith.constant 0 : index
    %458 = vector.load %arg2[%c0_283, %c0_284] : memref<128x32xf32, #tpu.memory_space<vmem>>, vector<128x32xf32>
    %cst_285 = arith.constant dense<0.000000e+00> : vector<16x128xf32>
    %459 = tpu.matmul %457, %458, %cst_285 {dimension_numbers = #tpu.dot_dimension_numbers<[1], [1], [0], [0], [0, 0, 1, 0], [], []>} : vector<16x32xf32>, vector<128x32xf32>, vector<16x128xf32> -> vector<16x128xf32>
    %c0_286 = arith.constant 0 : index
    %c0_287 = arith.constant 0 : index
    %460 = vector.load %arg16[%c0_286, %c0_287] : memref<16x128xf32, #tpu.memory_space<vmem>>, vector<16x128xf32>
    tpu.vector_store %arg16[%c0_286, %c0_287], %459 {strides = array<i32>} : memref<16x128xf32, #tpu.memory_space<vmem>>, vector<16x128xf32>,
    return
  }
  func.func @transform_0(%arg0: i32) -> (i32, i32) {
    %c0_i32 = arith.constant 0 : i32
    %c0_i32_0 = arith.constant 0 : i32
    %c0_i32_1 = arith.constant 0 : i32
    return %c0_i32, %c0_i32_0 : i32, i32
  }
  func.func @transform_1(%arg0: i32) -> (i32, i32) {
    %c0_i32 = arith.constant 0 : i32
    %c0_i32_0 = arith.constant 0 : i32
    %c0_i32_1 = arith.constant 0 : i32
    return %c0_i32, %c0_i32_0 : i32, i32
  }
  func.func @transform_2(%arg0: i32) -> (i32, i32, i32) {
    %c0_i32 = arith.constant 0 : i32
    %c0_i32_0 = arith.constant 0 : i32
    %c0_i32_1 = arith.constant 0 : i32
    %c0_i32_2 = arith.constant 0 : i32
    return %c0_i32, %c0_i32_0, %c0_i32_1 : i32, i32, i32
  }
  func.func @transform_3(%arg0: i32) -> (i32, i32, i32) {
    %c0_i32 = arith.constant 0 : i32
    %c0_i32_0 = arith.constant 0 : i32
    %c0_i32_1 = arith.constant 0 : i32
    %c0_i32_2 = arith.constant 0 : i32
    return %c0_i32, %c0_i32_0, %c0_i32_1 : i32, i32, i32
  }
  func.func @transform_4(%arg0: i32) -> (i32, i32, i32) {
    %c0_i32 = arith.constant 0 : i32
    %c0_i32_0 = arith.constant 0 : i32
    %c0_i32_1 = arith.constant 0 : i32
    %c0_i32_2 = arith.constant 0 : i32
    return %c0_i32, %c0_i32_0, %c0_i32_1 : i32, i32, i32
  }
  func.func @transform_5(%arg0: i32) -> (i32, i32, i32) {
    %c0_i32 = arith.constant 0 : i32
    %c0_i32_0 = arith.constant 0 : i32
    %c0_i32_1 = arith.constant 0 : i32
    %c0_i32_2 = arith.constant 0 : i32
    return %c0_i32, %c0_i32_0, %c0_i32_1 : i32, i32, i32
  }
  func.func @transform_6(%arg0: i32) -> (i32, i32, i32) {
    %c0_i32 = arith.constant 0 : i32
    %c0_i32_0 = arith.constant 0 : i32
    %c0_i32_1 = arith.constant 0 : i32
    %c0_i32_2 = arith.constant 0 : i32
    return %c0_i32, %c0_i32_0, %c0_i32_1 : i32, i32, i32
  }
  func.func @transform_7(%arg0: i32) -> (i32, i32, i32) {
    %c0_i32 = arith.constant 0 : i32
    %c0_i32_0 = arith.constant 0 : i32
    %c0_i32_1 = arith.constant 0 : i32
    %c0_i32_2 = arith.constant 0 : i32
    return %c0_i32, %c0_i32_0, %c0_i32_1 : i32, i32, i32
  }
  func.func @transform_8(%arg0: i32) -> (i32, i32, i32) {
    %c0_i32 = arith.constant 0 : i32
    %c0_i32_0 = arith.constant 0 : i32
    %c0_i32_1 = arith.constant 0 : i32
    %c0_i32_2 = arith.constant 0 : i32
    return %c0_i32, %c0_i32_0, %c0_i32_1 : i32, i32, i32
  }
  func.func @transform_9(%arg0: i32) -> (i32, i32, i32) {
    %c0_i32 = arith.constant 0 : i32
    %c0_i32_0 = arith.constant 0 : i32
    %c0_i32_1 = arith.constant 0 : i32
    %c0_i32_2 = arith.constant 0 : i32
    return %c0_i32, %c0_i32_0, %c0_i32_1 : i32, i32, i32
  }
  func.func @transform_10(%arg0: i32) -> (i32, i32, i32) {
    %c0_i32 = arith.constant 0 : i32
    %c0_i32_0 = arith.constant 0 : i32
    %c0_i32_1 = arith.constant 0 : i32
    %c0_i32_2 = arith.constant 0 : i32
    return %c0_i32, %c0_i32_0, %c0_i32_1 : i32, i32, i32
  }
  func.func @transform_11(%arg0: i32) -> (i32, i32, i32) {
    %c0_i32 = arith.constant 0 : i32
    %c0_i32_0 = arith.constant 0 : i32
    %c0_i32_1 = arith.constant 0 : i32
    %c0_i32_2 = arith.constant 0 : i32
    return %c0_i32, %c0_i32_0, %c0_i32_1 : i32, i32, i32
  }
  func.func @transform_12(%arg0: i32) -> (i32, i32, i32) {
    %c0_i32 = arith.constant 0 : i32
    %c0_i32_0 = arith.constant 0 : i32
    %c0_i32_1 = arith.constant 0 : i32
    %c0_i32_2 = arith.constant 0 : i32
    return %c0_i32, %c0_i32_0, %c0_i32_1 : i32, i32, i32
  }
  func.func @transform_13(%arg0: i32) -> (i32, i32, i32) {
    %c0_i32 = arith.constant 0 : i32
    %c0_i32_0 = arith.constant 0 : i32
    %c0_i32_1 = arith.constant 0 : i32
    %c0_i32_2 = arith.constant 0 : i32
    return %c0_i32, %c0_i32_0, %c0_i32_1 : i32, i32, i32
  }
  func.func @transform_14(%arg0: i32) -> (i32, i32) {
    %c0_i32 = arith.constant 0 : i32
    %c0_i32_0 = arith.constant 0 : i32
    %c0_i32_1 = arith.constant 0 : i32
    return %c0_i32, %c0_i32_0 : i32, i32
  }
  func.func @transform_15(%arg0: i32) -> (i32, i32) {
    %c0_i32 = arith.constant 0 : i32
    %c0_i32_0 = arith.constant 0 : i32
    %c0_i32_1 = arith.constant 0 : i32
    return %c0_i32, %c0_i32_0 : i32, i32
  }
}

</mosaic_0001>

<llo_original>
// kernel: mamba_forward.1
$region0: #{mamba_forward.1}
  #allocation0 [shape = 'u32[]', space=smem, size = 0x4, offset = 0x4, fixed_abs, tag = 'smem constant byte address 0x4 - core index']
  #allocation1 [shape = 'u32[144,128]{1,0:T(1,128)}', space=vmem, size = 0x12000, scoped, tag = 'internal scratch']
  #allocation2 [shape = 'f32[8,16,128]{2,1,0:T(8,128)}', space=vmem, size = 0x10000, scoped, tag = 'scratch operand']
  #allocation3 [shape = 'f32[8,16,128]{2,1,0:T(8,128)}', space=vmem, size = 0x10000, scoped, tag = 'scratch operand']
  #allocation4 [shape = 'f32[8,16,128]{2,1,0:T(8,128)}', space=vmem, size = 0x10000, scoped, tag = 'scratch operand']
  %s0 = inlined_call_operand.vmem [shape: s32[16,1], index: 0, kind: input, shape index: {}]
  %s1 = inlined_call_operand.vmem [shape: f32[128,32], index: 1, kind: input, shape index: {}]
  %s2 = inlined_call_operand.vmem [shape: f32[2,1,32], index: 2, kind: input, shape index: {}]
  %s3 = inlined_call_operand.vmem [shape: f32[2,32,64], index: 3, kind: input, shape index: {}]
  %s4 = inlined_call_operand.vmem [shape: f32[2,32,64], index: 4, kind: input, shape index: {}]
  %s5 = inlined_call_operand.vmem [shape: f32[2,4,128], index: 5, kind: input, shape index: {}]
  %s6 = inlined_call_operand.vmem [shape: f32[2,1,128], index: 6, kind: input, shape index: {}]
  %s7 = inlined_call_operand.vmem [shape: f32[2,128,128], index: 7, kind: input, shape index: {}]
  %s8 = inlined_call_operand.vmem [shape: f32[2,1,128], index: 8, kind: input, shape index: {}]
  %s9 = inlined_call_operand.vmem [shape: f32[2,128,32], index: 9, kind: input, shape index: {}]
  %s10 = inlined_call_operand.vmem [shape: f32[2,128,32], index: 10, kind: input, shape index: {}]
  %s11 = inlined_call_operand.vmem [shape: f32[2,16,128], index: 11, kind: input, shape index: {}]
  %s12 = inlined_call_operand.vmem [shape: f32[2,1,128], index: 12, kind: input, shape index: {}]
  %s13 = inlined_call_operand.vmem [shape: f32[2,64,32], index: 13, kind: input, shape index: {}]
  %s14 = inlined_call_operand.vmem [shape: f32[1,32], index: 14, kind: input, shape index: {}]
  %s15 = inlined_call_operand.hbm [shape: f32[16,128], index: 15, kind: output, shape index: {}]
  %s16 = sld [smem:[#allocation0]]
  $region70: #{mamba_forward.1} parent=0
    _
  %s18 = ssub.s32 1, %s16
  %s19 = scalar_select 0, %s18, %s16
  $region1: #{mamba_forward.1} parent=0
    #allocation5 [shape = 'u8[8192]{0}', space=vmem, size = 0x2000, scoped, tag = 'output window, operand 0, single buffered']
    #allocation6 [shape = 's32[1]{0}', space=sflag, size = 0x4, scoped, tag = 'scoped memory for mamba_forward.1']
    %20 = vsyncpa [#allocation6], 0
    // Predicated region
    $region2: #{mamba_forward.1} parent=1 // pred_check
      _
    $region3: #{mamba_forward.1} parent=1 // pred_check_branch
      %22 = sbr.rel (0) target = $region5
    $region4: #{mamba_forward.1} parent=1 // pred_region
      _
    $region5: #{mamba_forward.1} parent=1 // pred_fallthru
      _
    // Predicated region
    $region6: #{mamba_forward.1} parent=1 // pred_check
      _
    $region7: #{mamba_forward.1} parent=1 // pred_check_branch
      %24 = sbr.rel (0) target = $region9
    $region8: #{mamba_forward.1} parent=1 // pred_region
      _
    $region9: #{mamba_forward.1} parent=1 // pred_fallthru
      _
    // Predicated region
    $region10: #{mamba_forward.1} parent=1 // pred_check
      _
    $region11: #{mamba_forward.1} parent=1 // pred_check_branch
      %26 = sbr.rel (0) target = $region13
    $region12: #{mamba_forward.1} parent=1 // pred_region
      _
    $region13: #{mamba_forward.1} parent=1 // pred_fallthru
      _
    // Predicated region
    $region14: #{mamba_forward.1} parent=1 // pred_check
      _
    $region15: #{mamba_forward.1} parent=1 // pred_check_branch
      %28 = sbr.rel (0) target = $region17
    $region16: #{mamba_forward.1} parent=1 // pred_region
      _
    $region17: #{mamba_forward.1} parent=1 // pred_fallthru
      _
    // Predicated region
    $region18: #{mamba_forward.1} parent=1 // pred_check
      _
    $region19: #{mamba_forward.1} parent=1 // pred_check_branch
      %30 = sbr.rel (0) target = $region21
    $region20: #{mamba_forward.1} parent=1 // pred_region
      _
    $region21: #{mamba_forward.1} parent=1 // pred_fallthru
      _
    // Predicated region
    $region22: #{mamba_forward.1} parent=1 // pred_check
      _
    $region23: #{mamba_forward.1} parent=1 // pred_check_branch
      %32 = sbr.rel (0) target = $region25
    $region24: #{mamba_forward.1} parent=1 // pred_region
      _
    $region25: #{mamba_forward.1} parent=1 // pred_fallthru
      _
    // Predicated region
    $region26: #{mamba_forward.1} parent=1 // pred_check
      _
    $region27: #{mamba_forward.1} parent=1 // pred_check_branch
      %34 = sbr.rel (0) target = $region29
    $region28: #{mamba_forward.1} parent=1 // pred_region
      _
    $region29: #{mamba_forward.1} parent=1 // pred_fallthru
      _
    // Predicated region
    $region30: #{mamba_forward.1} parent=1 // pred_check
      _
    $region31: #{mamba_forward.1} parent=1 // pred_check_branch
      %36 = sbr.rel (0) target = $region33
    $region32: #{mamba_forward.1} parent=1 // pred_region
      _
    $region33: #{mamba_forward.1} parent=1 // pred_fallthru
      _
    // Predicated region
    $region34: #{mamba_forward.1} parent=1 // pred_check
      _
    $region35: #{mamba_forward.1} parent=1 // pred_check_branch
      %38 = sbr.rel (0) target = $region37
    $region36: #{mamba_forward.1} parent=1 // pred_region
      _
    $region37: #{mamba_forward.1} parent=1 // pred_fallthru
      _
    // Predicated region
    $region38: #{mamba_forward.1} parent=1 // pred_check
      _
    $region39: #{mamba_forward.1} parent=1 // pred_check_branch
      %40 = sbr.rel (0) target = $region41
    $region40: #{mamba_forward.1} parent=1 // pred_region
      _
    $region41: #{mamba_forward.1} parent=1 // pred_fallthru
      _
    // Predicated region
    $region42: #{mamba_forward.1} parent=1 // pred_check
      _
    $region43: #{mamba_forward.1} parent=1 // pred_check_branch
      %42 = sbr.rel (0) target = $region45
    $region44: #{mamba_forward.1} parent=1 // pred_region
      _
    $region45: #{mamba_forward.1} parent=1 // pred_fallthru
      _
    // Predicated region
    $region46: #{mamba_forward.1} parent=1 // pred_check
      _
    $region47: #{mamba_forward.1} parent=1 // pred_check_branch
      %44 = sbr.rel (0) target = $region49
    $region48: #{mamba_forward.1} parent=1 // pred_region
      _
    $region49: #{mamba_forward.1} parent=1 // pred_fallthru
      _
    // Predicated region
    $region50: #{mamba_forward.1} parent=1 // pred_check
      _
    $region51: #{mamba_forward.1} parent=1 // pred_check_branch
      %46 = sbr.rel (0) target = $region53
    $region52: #{mamba_forward.1} parent=1 // pred_region
      _
    $region53: #{mamba_forward.1} parent=1 // pred_fallthru
      _
    // Predicated region
    $region54: #{mamba_forward.1} parent=1 // pred_check
      _
    $region55: #{mamba_forward.1} parent=1 // pred_check_branch
      %48 = sbr.rel (0) target = $region57
    $region56: #{mamba_forward.1} parent=1 // pred_region
      _
    $region57: #{mamba_forward.1} parent=1 // pred_fallthru
      _
    // Predicated region
    $region58: #{mamba_forward.1} parent=1 // pred_check
      _
    $region59: #{mamba_forward.1} parent=1 // pred_check_branch
      %50 = sbr.rel (0) target = $region61
    $region60: #{mamba_forward.1} parent=1 // pred_region
      _
    $region61: #{mamba_forward.1} parent=1 // pred_fallthru
      _
    %v51 = vlaneseq
    %v52 = vand.u32 %v51, 127
    %v53 = vld [vmem:[%s0] sm:$0xff]
    %v54 = vld [vmem:[%s0 + $0x8] sm:$0xff]
    %55 = vset.pattern.permute.xlu0 0
    %56 = vperm.xlu0 %55, %v53
    %v57 = vpop.permute.xlu0 %56
    %58 = vset.pattern.permute.xlu0 0
    %59 = vperm.xlu0 %58, %v54
    %v60 = vpop.permute.xlu0 %59
    %vm61 = vcmp.eq.s32.totalorder %v52, %v57
    %vm62 = vcmp.eq.s32.totalorder %v52, %v60
    %v63 = vsel %vm61, 1, 0
    %v64 = vsel %vm62, 1, 0
    %v65 = vcvt.s32.f32 %v63
    %v66 = vcvt.s32.f32 %v64
    %v67 = vld [vmem:[%s1] sm:$0xff]
    %v68 = vld [vmem:[%s1 + $0x8] sm:$0xff]
    %v69 = vld [vmem:[%s1 + $0x10] sm:$0xff]
    %v70 = vld [vmem:[%s1 + $0x18] sm:$0xff]
    %v71 = vld [vmem:[%s1 + $0x20] sm:$0xff]
    %v72 = vld [vmem:[%s1 + $0x28] sm:$0xff]
    %v73 = vld [vmem:[%s1 + $0x30] sm:$0xff]
    %v74 = vld [vmem:[%s1 + $0x38] sm:$0xff]
    %v75 = vld [vmem:[%s1 + $0x40] sm:$0xff]
    %v76 = vld [vmem:[%s1 + $0x48] sm:$0xff]
    %v77 = vld [vmem:[%s1 + $0x50] sm:$0xff]
    %v78 = vld [vmem:[%s1 + $0x58] sm:$0xff]
    %v79 = vld [vmem:[%s1 + $0x60] sm:$0xff]
    %v80 = vld [vmem:[%s1 + $0x68] sm:$0xff]
    %v81 = vld [vmem:[%s1 + $0x70] sm:$0xff]
    %v82 = vld [vmem:[%s1 + $0x78] sm:$0xff]
    %83 = vmatprep.subr.mxu0 0.0
    %84 = vmatpush1.msra.mxu0 %v67
    %85 = vmatprep.subr.mxu0 0.0
    %86 = vmatpush1.msra.mxu0 %v68
    %87 = vmatprep.subr.mxu0 0.0
    %88 = vmatpush1.msra.mxu0 %v69
    %89 = vmatprep.subr.mxu0 0.0
    %90 = vmatpush1.msra.mxu0 %v70
    %91 = vmatprep.subr.mxu0 0.0
    %92 = vmatpush1.msra.mxu0 %v71
    %93 = vmatprep.subr.mxu0 0.0
    %94 = vmatpush1.msra.mxu0 %v72
    %95 = vmatprep.subr.mxu0 0.0
    %96 = vmatpush1.msra.mxu0 %v73
    %97 = vmatprep.subr.mxu0 0.0
    %98 = vmatpush1.msra.mxu0 %v74
    %99 = vmatprep.subr.mxu0 0.0
    %100 = vmatpush1.msra.mxu0 %v75
    %101 = vmatprep.subr.mxu0 0.0
    %102 = vmatpush1.msra.mxu0 %v76
    %103 = vmatprep.subr.mxu0 0.0
    %104 = vmatpush1.msra.mxu0 %v77
    %105 = vmatprep.subr.mxu0 0.0
    %106 = vmatpush1.msra.mxu0 %v78
    %107 = vmatprep.subr.mxu0 0.0
    %108 = vmatpush1.msra.mxu0 %v79
    %109 = vmatprep.subr.mxu0 0.0
    %110 = vmatpush1.msra.mxu0 %v80
    %111 = vmatprep.subr.mxu0 0.0
    %112 = vmatpush1.msra.mxu0 %v81
    %113 = vmatprep.subr.mxu0 0.0
    %114 = vmatpush1.msra.mxu0 %v82
    %115 = vmatprep.subr.mxu0 0.0
    %116 = vmatpush1.msra.mxu0 0.0
    %117 = vmatprep.subr.mxu0 0.0
    %118 = vmatpush1.msra.mxu0 0.0
    %119 = vmatprep.subr.mxu0 0.0
    %120 = vmatpush1.msra.mxu0 0.0
    %121 = vmatprep.subr.mxu0 0.0
    %122 = vmatpush1.msra.mxu0 0.0
    %123 = vmatprep.subr.mxu0 0.0
    %124 = vmatpush1.msra.mxu0 0.0
    %125 = vmatprep.subr.mxu0 0.0
    %126 = vmatpush1.msra.mxu0 0.0
    %127 = vmatprep.subr.mxu0 0.0
    %128 = vmatpush1.msra.mxu0 0.0
    %129 = vmatprep.subr.mxu0 0.0
    %130 = vmatpush1.msra.mxu0 0.0
    %131 = vmatprep.subr.mxu0 0.0
    %132 = vmatpush1.msra.mxu0 0.0
    %133 = vmatprep.subr.mxu0 0.0
    %134 = vmatpush1.msra.mxu0 0.0
    %135 = vmatprep.subr.mxu0 0.0
    %136 = vmatpush1.msra.mxu0 0.0
    %137 = vmatprep.subr.mxu0 0.0
    %138 = vmatpush1.msra.mxu0 0.0
    %139 = vmatprep.subr.mxu0 0.0
    %140 = vmatpush1.msra.mxu0 0.0
    %141 = vmatprep.subr.mxu0 0.0
    %142 = vmatpush1.msra.mxu0 0.0
    %143 = vmatprep.subr.mxu0 0.0
    %144 = vmatpush1.msra.mxu0 0.0
    %145 = vmatprep.subr.mxu0 0.0
    %146 = vmatpush1.msra.mxu0 0.0
    %147 = vmatprep.mubr.f32.mxu0 0.0
    %148 = vmatmul.mubr.f32.gmra.mrb[0].mxu0 %v65
    %v149 = vpop.f32.mrb[0].mxu0
    %v150 = vadd.f32 0.0, %v149
    %v151 = vpop.f32.mrb[0].mxu0
    %152 = vmatprep.mubr.f32.mxu0 0.0
    %153 = vmatmul.mubr.f32.gmra.mrb[0].mxu0 %v66
    %v154 = vpop.f32.mrb[0].mxu0
    %v155 = vadd.f32 0.0, %v154
    %v156 = vpop.f32.mrb[0].mxu0
    %157 = vdwg.mxu0
    %v158 = vlaneseq
    %v159 = vshrl.u32 %v158, 7
    %v160 = vsub.s32 %v159, %v52
    %vm161 = vcmp.eq.s32.totalorder %v160, 1
    %v162 = vsel %vm161, 1, 0
    %v163 = vcvt.s32.f32 %v162
    %vm164 = vcmp.eq.s32.totalorder %v160, 2
    %v165 = vsel %vm164, 1, 0
    %v166 = vcvt.s32.f32 %v165
    %vm167 = vcmp.eq.s32.totalorder %v160, 3
    %v168 = vsel %vm167, 1, 0
    %v169 = vcvt.s32.f32 %v168
    %v170 = vld [vmem:[%s2] sm:$0x1]
    %v171 = vmul.f32 %v150, %v150
    %v172 = vmul.f32 %v155, %v155
    %vm173 = vcmask 261120
    %v174 = vsel %vm173, %v171, 0.0
    %175 = vadd.xlane.f32.xlu0 %v174
    %v176 = vpop.xlane.xlu0 %175
    %v177 = vsel %vm173, %v172, 0.0
    %178 = vadd.xlane.f32.xlu0 %v177
    %v179 = vpop.xlane.xlu0 %178
    %v180 = vrcp.pop 32.0
    %v181 = vmul.f32 %v176, %v180
    %v182 = vmul.f32 %v179, %v180
    %v183 = vadd.f32 %v181, 1e-05
    %v184 = vadd.f32 %v182, 1e-05
    %v185 = vrsqrt.pop %v183
    %v186 = vrsqrt.pop %v184
    %v187 = vmul.f32 %v150, %v185
    %v188 = vmul.f32 %v155, %v186
    %v190 = vlaneseq
    %v191 = vshrl.u32 %v190, 7
    %v192 = vsub.s32 0, %v191
    %v193 = vrot.slane %v170, %v192
    %v195 = vmul.f32 %v187, %v193
    %v196 = vmul.f32 %v188, %v193
    %v197 = vld [vmem:[%s3] sm:$0xff]
    %v198 = vld [vmem:[%s3 + $0x8] sm:$0xff]
    %v199 = vld [vmem:[%s3 + $0x10] sm:$0xff]
    %v200 = vld [vmem:[%s3 + $0x18] sm:$0xff]
    %v202 = vsel %vm173, %v195, 0
    %v205 = vsel %vm173, %v196, 0
    %207 = vmatprep.subr.mxu0 0.0
    %208 = vmatpush1.msra.mxu0 %v197
    %209 = vmatprep.subr.mxu0 0.0
    %210 = vmatpush1.msra.mxu0 %v198
    %211 = vmatprep.subr.mxu0 0.0
    %212 = vmatpush1.msra.mxu0 %v199
    %213 = vmatprep.subr.mxu0 0.0
    %214 = vmatpush1.msra.mxu0 %v200
    %215 = vmatprep.subr.mxu0 0.0
    %216 = vmatpush1.msra.mxu0 0.0
    %217 = vmatprep.subr.mxu0 0.0
    %218 = vmatpush1.msra.mxu0 0.0
    %219 = vmatprep.subr.mxu0 0.0
    %220 = vmatpush1.msra.mxu0 0.0
    %221 = vmatprep.subr.mxu0 0.0
    %222 = vmatpush1.msra.mxu0 0.0
    %223 = vmatprep.subr.mxu0 0.0
    %224 = vmatpush1.msra.mxu0 0.0
    %225 = vmatprep.subr.mxu0 0.0
    %226 = vmatpush1.msra.mxu0 0.0
    %227 = vmatprep.subr.mxu0 0.0
    %228 = vmatpush1.msra.mxu0 0.0
    %229 = vmatprep.subr.mxu0 0.0
    %230 = vmatpush1.msra.mxu0 0.0
    %231 = vmatprep.subr.mxu0 0.0
    %232 = vmatpush1.msra.mxu0 0.0
    %233 = vmatprep.subr.mxu0 0.0
    %234 = vmatpush1.msra.mxu0 0.0
    %235 = vmatprep.subr.mxu0 0.0
    %236 = vmatpush1.msra.mxu0 0.0
    %237 = vmatprep.subr.mxu0 0.0
    %238 = vmatpush1.msra.mxu0 0.0
    %239 = vmatprep.subr.mxu0 0.0
    %240 = vmatpush1.msra.mxu0 0.0
    %241 = vmatprep.subr.mxu0 0.0
    %242 = vmatpush1.msra.mxu0 0.0
    %243 = vmatprep.subr.mxu0 0.0
    %244 = vmatpush1.msra.mxu0 0.0
    %245 = vmatprep.subr.mxu0 0.0
    %246 = vmatpush1.msra.mxu0 0.0
    %247 = vmatprep.subr.mxu0 0.0
    %248 = vmatpush1.msra.mxu0 0.0
    %249 = vmatprep.subr.mxu0 0.0
    %250 = vmatpush1.msra.mxu0 0.0
    %251 = vmatprep.subr.mxu0 0.0
    %252 = vmatpush1.msra.mxu0 0.0
    %253 = vmatprep.subr.mxu0 0.0
    %254 = vmatpush1.msra.mxu0 0.0
    %255 = vmatprep.subr.mxu0 0.0
    %256 = vmatpush1.msra.mxu0 0.0
    %257 = vmatprep.subr.mxu0 0.0
    %258 = vmatpush1.msra.mxu0 0.0
    %259 = vmatprep.subr.mxu0 0.0
    %260 = vmatpush1.msra.mxu0 0.0
    %261 = vmatprep.subr.mxu0 0.0
    %262 = vmatpush1.msra.mxu0 0.0
    %263 = vmatprep.subr.mxu0 0.0
    %264 = vmatpush1.msra.mxu0 0.0
    %265 = vmatprep.subr.mxu0 0.0
    %266 = vmatpush1.msra.mxu0 0.0
    %267 = vmatprep.subr.mxu0 0.0
    %268 = vmatpush1.msra.mxu0 0.0
    %269 = vmatprep.subr.mxu0 0.0
    %270 = vmatpush1.msra.mxu0 0.0
    %271 = vmatprep.mubr.f32.mxu0 0.0
    %272 = vmatmul.mubr.f32.gmra.mrb[0].mxu0 %v202
    %v273 = vpop.f32.mrb[0].mxu0
    %v274 = vadd.f32 0.0, %v273
    %v275 = vpop.f32.mrb[0].mxu0
    %276 = vmatprep.mubr.f32.mxu0 0.0
    %277 = vmatmul.mubr.f32.gmra.mrb[0].mxu0 %v205
    %v278 = vpop.f32.mrb[0].mxu0
    %v279 = vadd.f32 0.0, %v278
    %v280 = vpop.f32.mrb[0].mxu0
    %281 = vdwg.mxu0
    %v282 = vld [vmem:[%s4] sm:$0xff]
    %v283 = vld [vmem:[%s4 + $0x8] sm:$0xff]
    %v284 = vld [vmem:[%s4 + $0x10] sm:$0xff]
    %v285 = vld [vmem:[%s4 + $0x18] sm:$0xff]
    %286 = vmatprep.subr.mxu0 0.0
    %287 = vmatpush1.msra.mxu0 %v282
    %288 = vmatprep.subr.mxu0 0.0
    %289 = vmatpush1.msra.mxu0 %v283
    %290 = vmatprep.subr.mxu0 0.0
    %291 = vmatpush1.msra.mxu0 %v284
    %292 = vmatprep.subr.mxu0 0.0
    %293 = vmatpush1.msra.mxu0 %v285
    %294 = vmatprep.subr.mxu0 0.0
    %295 = vmatpush1.msra.mxu0 0.0
    %296 = vmatprep.subr.mxu0 0.0
    %297 = vmatpush1.msra.mxu0 0.0
    %298 = vmatprep.subr.mxu0 0.0
    %299 = vmatpush1.msra.mxu0 0.0
    %300 = vmatprep.subr.mxu0 0.0
    %301 = vmatpush1.msra.mxu0 0.0
    %302 = vmatprep.subr.mxu0 0.0
    %303 = vmatpush1.msra.mxu0 0.0
    %304 = vmatprep.subr.mxu0 0.0
    %305 = vmatpush1.msra.mxu0 0.0
    %306 = vmatprep.subr.mxu0 0.0
    %307 = vmatpush1.msra.mxu0 0.0
    %308 = vmatprep.subr.mxu0 0.0
    %309 = vmatpush1.msra.mxu0 0.0
    %310 = vmatprep.subr.mxu0 0.0
    %311 = vmatpush1.msra.mxu0 0.0
    %312 = vmatprep.subr.mxu0 0.0
    %313 = vmatpush1.msra.mxu0 0.0
    %314 = vmatprep.subr.mxu0 0.0
    %315 = vmatpush1.msra.mxu0 0.0
    %316 = vmatprep.subr.mxu0 0.0
    %317 = vmatpush1.msra.mxu0 0.0
    %318 = vmatprep.subr.mxu0 0.0
    %319 = vmatpush1.msra.mxu0 0.0
    %320 = vmatprep.subr.mxu0 0.0
    %321 = vmatpush1.msra.mxu0 0.0
    %322 = vmatprep.subr.mxu0 0.0
    %323 = vmatpush1.msra.mxu0 0.0
    %324 = vmatprep.subr.mxu0 0.0
    %325 = vmatpush1.msra.mxu0 0.0
    %326 = vmatprep.subr.mxu0 0.0
    %327 = vmatpush1.msra.mxu0 0.0
    %328 = vmatprep.subr.mxu0 0.0
    %329 = vmatpush1.msra.mxu0 0.0
    %330 = vmatprep.subr.mxu0 0.0
    %331 = vmatpush1.msra.mxu0 0.0
    %332 = vmatprep.subr.mxu0 0.0
    %333 = vmatpush1.msra.mxu0 0.0
    %334 = vmatprep.subr.mxu0 0.0
    %335 = vmatpush1.msra.mxu0 0.0
    %336 = vmatprep.subr.mxu0 0.0
    %337 = vmatpush1.msra.mxu0 0.0
    %338 = vmatprep.subr.mxu0 0.0
    %339 = vmatpush1.msra.mxu0 0.0
    %340 = vmatprep.subr.mxu0 0.0
    %341 = vmatpush1.msra.mxu0 0.0
    %342 = vmatprep.subr.mxu0 0.0
    %343 = vmatpush1.msra.mxu0 0.0
    %344 = vmatprep.subr.mxu0 0.0
    %345 = vmatpush1.msra.mxu0 0.0
    %346 = vmatprep.subr.mxu0 0.0
    %347 = vmatpush1.msra.mxu0 0.0
    %348 = vmatprep.subr.mxu0 0.0
    %349 = vmatpush1.msra.mxu0 0.0
    %350 = vmatprep.mubr.f32.mxu0 0.0
    %351 = vmatmul.mubr.f32.gmra.mrb[0].mxu0 %v202
    %v352 = vpop.f32.mrb[0].mxu0
    %v353 = vadd.f32 0.0, %v352
    %v354 = vpop.f32.mrb[0].mxu0
    %355 = vmatprep.mubr.f32.mxu0 0.0
    %356 = vmatmul.mubr.f32.gmra.mrb[0].mxu0 %v205
    %v357 = vpop.f32.mrb[0].mxu0
    %v358 = vadd.f32 0.0, %v357
    %v359 = vpop.f32.mrb[0].mxu0
    %360 = vdwg.mxu0
    %362 = vrot.lane.b32.xlu0 %v279, 64
    %v363 = vpop.permute.xlu0 %362
    %vm365 = vcmask 523264
    %v366 = vsel %vm365, %v274, %v363
    %v367 = vld [vmem:[%s5] sm:$0xf]
    %v368 = vlaneseq
    %v369 = vshrl.u32 %v368, 7
    %v370 = vsub.s32 3, %v369
    %v371 = vrot.slane %v367, %v370
    %v372 = vmul.f32 %v366, %v371
    %vm373 = vcmask 64512
    %v375 = vsel %vm373, %v169, 0
    %377 = vmatprep.subr.mxu0 0.0
    %378 = vmatpush1.msra.mxu0 %v366
    %379 = vmatprep.subr.mxu0 0.0
    %380 = vmatpush1.msra.mxu0 0.0
    %381 = vmatprep.subr.mxu0 0.0
    %382 = vmatpush1.msra.mxu0 0.0
    %383 = vmatprep.subr.mxu0 0.0
    %384 = vmatpush1.msra.mxu0 0.0
    %385 = vmatprep.subr.mxu0 0.0
    %386 = vmatpush1.msra.mxu0 0.0
    %387 = vmatprep.subr.mxu0 0.0
    %388 = vmatpush1.msra.mxu0 0.0
    %389 = vmatprep.subr.mxu0 0.0
    %390 = vmatpush1.msra.mxu0 0.0
    %391 = vmatprep.subr.mxu0 0.0
    %392 = vmatpush1.msra.mxu0 0.0
    %393 = vmatprep.subr.mxu0 0.0
    %394 = vmatpush1.msra.mxu0 0.0
    %395 = vmatprep.subr.mxu0 0.0
    %396 = vmatpush1.msra.mxu0 0.0
    %397 = vmatprep.subr.mxu0 0.0
    %398 = vmatpush1.msra.mxu0 0.0
    %399 = vmatprep.subr.mxu0 0.0
    %400 = vmatpush1.msra.mxu0 0.0
    %401 = vmatprep.subr.mxu0 0.0
    %402 = vmatpush1.msra.mxu0 0.0
    %403 = vmatprep.subr.mxu0 0.0
    %404 = vmatpush1.msra.mxu0 0.0
    %405 = vmatprep.subr.mxu0 0.0
    %406 = vmatpush1.msra.mxu0 0.0
    %407 = vmatprep.subr.mxu0 0.0
    %408 = vmatpush1.msra.mxu0 0.0
    %409 = vmatprep.subr.mxu0 0.0
    %410 = vmatpush1.msra.mxu0 0.0
    %411 = vmatprep.subr.mxu0 0.0
    %412 = vmatpush1.msra.mxu0 0.0
    %413 = vmatprep.subr.mxu0 0.0
    %414 = vmatpush1.msra.mxu0 0.0
    %415 = vmatprep.subr.mxu0 0.0
    %416 = vmatpush1.msra.mxu0 0.0
    %417 = vmatprep.subr.mxu0 0.0
    %418 = vmatpush1.msra.mxu0 0.0
    %419 = vmatprep.subr.mxu0 0.0
    %420 = vmatpush1.msra.mxu0 0.0
    %421 = vmatprep.subr.mxu0 0.0
    %422 = vmatpush1.msra.mxu0 0.0
    %423 = vmatprep.subr.mxu0 0.0
    %424 = vmatpush1.msra.mxu0 0.0
    %425 = vmatprep.subr.mxu0 0.0
    %426 = vmatpush1.msra.mxu0 0.0
    %427 = vmatprep.subr.mxu0 0.0
    %428 = vmatpush1.msra.mxu0 0.0
    %429 = vmatprep.subr.mxu0 0.0
    %430 = vmatpush1.msra.mxu0 0.0
    %431 = vmatprep.subr.mxu0 0.0
    %432 = vmatpush1.msra.mxu0 0.0
    %433 = vmatprep.subr.mxu0 0.0
    %434 = vmatpush1.msra.mxu0 0.0
    %435 = vmatprep.subr.mxu0 0.0
    %436 = vmatpush1.msra.mxu0 0.0
    %437 = vmatprep.subr.mxu0 0.0
    %438 = vmatpush1.msra.mxu0 0.0
    %439 = vmatprep.subr.mxu0 0.0
    %440 = vmatpush1.msra.mxu0 0.0
    %441 = vmatprep.mubr.f32.mxu0 0.0
    %442 = vmatmul.mubr.f32.gmra.mrb[0].mxu0 %v375
    %v443 = vpop.f32.mrb[0].mxu0
    %v444 = vadd.f32 0.0, %v443
    %v445 = vpop.f32.mrb[0].mxu0
    %446 = vdwg.mxu0
    %v447 = vlaneseq
    %v448 = vshrl.u32 %v447, 7
    %v449 = vsub.s32 0, %v448
    %v450 = vrot.slane %v367, %v449
    %v451 = vmul.f32 %v444, %v450
    %v452 = vadd.f32 %v372, %v451
    %v454 = vsel %vm373, %v166, 0
    %456 = vmatprep.subr.mxu0 0.0
    %457 = vmatpush1.msra.mxu0 %v366
    %458 = vmatprep.subr.mxu0 0.0
    %459 = vmatpush1.msra.mxu0 0.0
    %460 = vmatprep.subr.mxu0 0.0
    %461 = vmatpush1.msra.mxu0 0.0
    %462 = vmatprep.subr.mxu0 0.0
    %463 = vmatpush1.msra.mxu0 0.0
    %464 = vmatprep.subr.mxu0 0.0
    %465 = vmatpush1.msra.mxu0 0.0
    %466 = vmatprep.subr.mxu0 0.0
    %467 = vmatpush1.msra.mxu0 0.0
    %468 = vmatprep.subr.mxu0 0.0
    %469 = vmatpush1.msra.mxu0 0.0
    %470 = vmatprep.subr.mxu0 0.0
    %471 = vmatpush1.msra.mxu0 0.0
    %472 = vmatprep.subr.mxu0 0.0
    %473 = vmatpush1.msra.mxu0 0.0
    %474 = vmatprep.subr.mxu0 0.0
    %475 = vmatpush1.msra.mxu0 0.0
    %476 = vmatprep.subr.mxu0 0.0
    %477 = vmatpush1.msra.mxu0 0.0
    %478 = vmatprep.subr.mxu0 0.0
    %479 = vmatpush1.msra.mxu0 0.0
    %480 = vmatprep.subr.mxu0 0.0
    %481 = vmatpush1.msra.mxu0 0.0
    %482 = vmatprep.subr.mxu0 0.0
    %483 = vmatpush1.msra.mxu0 0.0
    %484 = vmatprep.subr.mxu0 0.0
    %485 = vmatpush1.msra.mxu0 0.0
    %486 = vmatprep.subr.mxu0 0.0
    %487 = vmatpush1.msra.mxu0 0.0
    %488 = vmatprep.subr.mxu0 0.0
    %489 = vmatpush1.msra.mxu0 0.0
    %490 = vmatprep.subr.mxu0 0.0
    %491 = vmatpush1.msra.mxu0 0.0
    %492 = vmatprep.subr.mxu0 0.0
    %493 = vmatpush1.msra.mxu0 0.0
    %494 = vmatprep.subr.mxu0 0.0
    %495 = vmatpush1.msra.mxu0 0.0
    %496 = vmatprep.subr.mxu0 0.0
    %497 = vmatpush1.msra.mxu0 0.0
    %498 = vmatprep.subr.mxu0 0.0
    %499 = vmatpush1.msra.mxu0 0.0
    %500 = vmatprep.subr.mxu0 0.0
    %501 = vmatpush1.msra.mxu0 0.0
    %502 = vmatprep.subr.mxu0 0.0
    %503 = vmatpush1.msra.mxu0 0.0
    %504 = vmatprep.subr.mxu0 0.0
    %505 = vmatpush1.msra.mxu0 0.0
    %506 = vmatprep.subr.mxu0 0.0
    %507 = vmatpush1.msra.mxu0 0.0
    %508 = vmatprep.subr.mxu0 0.0
    %509 = vmatpush1.msra.mxu0 0.0
    %510 = vmatprep.subr.mxu0 0.0
    %511 = vmatpush1.msra.mxu0 0.0
    %512 = vmatprep.subr.mxu0 0.0
    %513 = vmatpush1.msra.mxu0 0.0
    %514 = vmatprep.subr.mxu0 0.0
    %515 = vmatpush1.msra.mxu0 0.0
    %516 = vmatprep.subr.mxu0 0.0
    %517 = vmatpush1.msra.mxu0 0.0
    %518 = vmatprep.subr.mxu0 0.0
    %519 = vmatpush1.msra.mxu0 0.0
    %520 = vmatprep.mubr.f32.mxu0 0.0
    %521 = vmatmul.mubr.f32.gmra.mrb[0].mxu0 %v454
    %v522 = vpop.f32.mrb[0].mxu0
    %v523 = vadd.f32 0.0, %v522
    %v524 = vpop.f32.mrb[0].mxu0
    %525 = vdwg.mxu0
    %v526 = vlaneseq
    %v527 = vshrl.u32 %v526, 7
    %v528 = vsub.s32 1, %v527
    %v529 = vrot.slane %v367, %v528
    %v530 = vmul.f32 %v523, %v529
    %v531 = vadd.f32 %v452, %v530
    %v533 = vsel %vm373, %v163, 0
    %535 = vmatprep.subr.mxu0 0.0
    %536 = vmatpush1.msra.mxu0 %v366
    %537 = vmatprep.subr.mxu0 0.0
    %538 = vmatpush1.msra.mxu0 0.0
    %539 = vmatprep.subr.mxu0 0.0
    %540 = vmatpush1.msra.mxu0 0.0
    %541 = vmatprep.subr.mxu0 0.0
    %542 = vmatpush1.msra.mxu0 0.0
    %543 = vmatprep.subr.mxu0 0.0
    %544 = vmatpush1.msra.mxu0 0.0
    %545 = vmatprep.subr.mxu0 0.0
    %546 = vmatpush1.msra.mxu0 0.0
    %547 = vmatprep.subr.mxu0 0.0
    %548 = vmatpush1.msra.mxu0 0.0
    %549 = vmatprep.subr.mxu0 0.0
    %550 = vmatpush1.msra.mxu0 0.0
    %551 = vmatprep.subr.mxu0 0.0
    %552 = vmatpush1.msra.mxu0 0.0
    %553 = vmatprep.subr.mxu0 0.0
    %554 = vmatpush1.msra.mxu0 0.0
    %555 = vmatprep.subr.mxu0 0.0
    %556 = vmatpush1.msra.mxu0 0.0
    %557 = vmatprep.subr.mxu0 0.0
    %558 = vmatpush1.msra.mxu0 0.0
    %559 = vmatprep.subr.mxu0 0.0
    %560 = vmatpush1.msra.mxu0 0.0
    %561 = vmatprep.subr.mxu0 0.0
    %562 = vmatpush1.msra.mxu0 0.0
    %563 = vmatprep.subr.mxu0 0.0
    %564 = vmatpush1.msra.mxu0 0.0
    %565 = vmatprep.subr.mxu0 0.0
    %566 = vmatpush1.msra.mxu0 0.0
    %567 = vmatprep.subr.mxu0 0.0
    %568 = vmatpush1.msra.mxu0 0.0
    %569 = vmatprep.subr.mxu0 0.0
    %570 = vmatpush1.msra.mxu0 0.0
    %571 = vmatprep.subr.mxu0 0.0
    %572 = vmatpush1.msra.mxu0 0.0
    %573 = vmatprep.subr.mxu0 0.0
    %574 = vmatpush1.msra.mxu0 0.0
    %575 = vmatprep.subr.mxu0 0.0
    %576 = vmatpush1.msra.mxu0 0.0
    %577 = vmatprep.subr.mxu0 0.0
    %578 = vmatpush1.msra.mxu0 0.0
    %579 = vmatprep.subr.mxu0 0.0
    %580 = vmatpush1.msra.mxu0 0.0
    %581 = vmatprep.subr.mxu0 0.0
    %582 = vmatpush1.msra.mxu0 0.0
    %583 = vmatprep.subr.mxu0 0.0
    %584 = vmatpush1.msra.mxu0 0.0
    %585 = vmatprep.subr.mxu0 0.0
    %586 = vmatpush1.msra.mxu0 0.0
    %587 = vmatprep.subr.mxu0 0.0
    %588 = vmatpush1.msra.mxu0 0.0
    %589 = vmatprep.subr.mxu0 0.0
    %590 = vmatpush1.msra.mxu0 0.0
    %591 = vmatprep.subr.mxu0 0.0
    %592 = vmatpush1.msra.mxu0 0.0
    %593 = vmatprep.subr.mxu0 0.0
    %594 = vmatpush1.msra.mxu0 0.0
    %595 = vmatprep.subr.mxu0 0.0
    %596 = vmatpush1.msra.mxu0 0.0
    %597 = vmatprep.subr.mxu0 0.0
    %598 = vmatpush1.msra.mxu0 0.0
    %599 = vmatprep.mubr.f32.mxu0 0.0
    %600 = vmatmul.mubr.f32.gmra.mrb[0].mxu0 %v533
    %v601 = vpop.f32.mrb[0].mxu0
    %v602 = vadd.f32 0.0, %v601
    %v603 = vpop.f32.mrb[0].mxu0
    %604 = vdwg.mxu0
    %v605 = vlaneseq
    %v606 = vshrl.u32 %v605, 7
    %v607 = vsub.s32 2, %v606
    %v608 = vrot.slane %v367, %v607
    %v609 = vmul.f32 %v602, %v608
    %v610 = vadd.f32 %v531, %v609
    %v611 = vld [vmem:[%s6] sm:$0x1]
    %v613 = vlaneseq
    %v614 = vshrl.u32 %v613, 7
    %v615 = vsub.s32 0, %v614
    %v616 = vrot.slane %v611, %v615
    %v618 = vadd.f32 %v610, %v616
    %v619 = vsub.f32 0.0, %v618
    %v620 = vmul.f32 %v619, 1.442695
    %v621 = vpow.pop %v620
    %v622 = vadd.f32 %v621, 1.0
    %v623 = vrcp.pop %v622
    %v624 = vmul.f32 1.0, %v623
    %v625 = vmul.f32 %v618, %v624
    %v626 = vld [vmem:[%s7] sm:$0xff]
    %v627 = vld [vmem:[%s7 + $0x8] sm:$0xff]
    %v628 = vld [vmem:[%s7 + $0x10] sm:$0xff]
    %v629 = vld [vmem:[%s7 + $0x18] sm:$0xff]
    %v630 = vld [vmem:[%s7 + $0x20] sm:$0xff]
    %v631 = vld [vmem:[%s7 + $0x28] sm:$0xff]
    %v632 = vld [vmem:[%s7 + $0x30] sm:$0xff]
    %v633 = vld [vmem:[%s7 + $0x38] sm:$0xff]
    %v634 = vld [vmem:[%s7 + $0x40] sm:$0xff]
    %v635 = vld [vmem:[%s7 + $0x48] sm:$0xff]
    %v636 = vld [vmem:[%s7 + $0x50] sm:$0xff]
    %v637 = vld [vmem:[%s7 + $0x58] sm:$0xff]
    %v638 = vld [vmem:[%s7 + $0x60] sm:$0xff]
    %v639 = vld [vmem:[%s7 + $0x68] sm:$0xff]
    %v640 = vld [vmem:[%s7 + $0x70] sm:$0xff]
    %v641 = vld [vmem:[%s7 + $0x78] sm:$0xff]
    %v642 = vld [vmem:[%s8] sm:$0x1]
    %v644 = vlaneseq
    %v645 = vshrl.u32 %v644, 7
    %v646 = vsub.s32 0, %v645
    %v647 = vrot.slane %v642, %v646
    %649 = vmatprep.subr.mxu0 0.0
    %650 = vmatpush1.msra.mxu0 %v626
    %651 = vmatprep.subr.mxu0 0.0
    %652 = vmatpush1.msra.mxu0 %v627
    %653 = vmatprep.subr.mxu0 0.0
    %654 = vmatpush1.msra.mxu0 %v628
    %655 = vmatprep.subr.mxu0 0.0
    %656 = vmatpush1.msra.mxu0 %v629
    %657 = vmatprep.subr.mxu0 0.0
    %658 = vmatpush1.msra.mxu0 %v630
    %659 = vmatprep.subr.mxu0 0.0
    %660 = vmatpush1.msra.mxu0 %v631
    %661 = vmatprep.subr.mxu0 0.0
    %662 = vmatpush1.msra.mxu0 %v632
    %663 = vmatprep.subr.mxu0 0.0
    %664 = vmatpush1.msra.mxu0 %v633
    %665 = vmatprep.subr.mxu0 0.0
    %666 = vmatpush1.msra.mxu0 %v634
    %667 = vmatprep.subr.mxu0 0.0
    %668 = vmatpush1.msra.mxu0 %v635
    %669 = vmatprep.subr.mxu0 0.0
    %670 = vmatpush1.msra.mxu0 %v636
    %671 = vmatprep.subr.mxu0 0.0
    %672 = vmatpush1.msra.mxu0 %v637
    %673 = vmatprep.subr.mxu0 0.0
    %674 = vmatpush1.msra.mxu0 %v638
    %675 = vmatprep.subr.mxu0 0.0
    %676 = vmatpush1.msra.mxu0 %v639
    %677 = vmatprep.subr.mxu0 0.0
    %678 = vmatpush1.msra.mxu0 %v640
    %679 = vmatprep.subr.mxu0 0.0
    %680 = vmatpush1.msra.mxu0 %v641
    %681 = vmatprep.subr.mxu0 0.0
    %682 = vmatpush1.msra.mxu0 0.0
    %683 = vmatprep.subr.mxu0 0.0
    %684 = vmatpush1.msra.mxu0 0.0
    %685 = vmatprep.subr.mxu0 0.0
    %686 = vmatpush1.msra.mxu0 0.0
    %687 = vmatprep.subr.mxu0 0.0
    %688 = vmatpush1.msra.mxu0 0.0
    %689 = vmatprep.subr.mxu0 0.0
    %690 = vmatpush1.msra.mxu0 0.0
    %691 = vmatprep.subr.mxu0 0.0
    %692 = vmatpush1.msra.mxu0 0.0
    %693 = vmatprep.subr.mxu0 0.0
    %694 = vmatpush1.msra.mxu0 0.0
    %695 = vmatprep.subr.mxu0 0.0
    %696 = vmatpush1.msra.mxu0 0.0
    %697 = vmatprep.subr.mxu0 0.0
    %698 = vmatpush1.msra.mxu0 0.0
    %699 = vmatprep.subr.mxu0 0.0
    %700 = vmatpush1.msra.mxu0 0.0
    %701 = vmatprep.subr.mxu0 0.0
    %702 = vmatpush1.msra.mxu0 0.0
    %703 = vmatprep.subr.mxu0 0.0
    %704 = vmatpush1.msra.mxu0 0.0
    %705 = vmatprep.subr.mxu0 0.0
    %706 = vmatpush1.msra.mxu0 0.0
    %707 = vmatprep.subr.mxu0 0.0
    %708 = vmatpush1.msra.mxu0 0.0
    %709 = vmatprep.subr.mxu0 0.0
    %710 = vmatpush1.msra.mxu0 0.0
    %711 = vmatprep.subr.mxu0 0.0
    %712 = vmatpush1.msra.mxu0 0.0
    %713 = vmatprep.mubr.f32.mxu0 0.0
    %714 = vmatmul.mubr.f32.gmra.mrb[0].mxu0 %v625
    %v715 = vpop.f32.mrb[0].mxu0
    %v716 = vadd.f32 %v647, %v715
    %v717 = vpop.f32.mrb[0].mxu0
    %718 = vdwg.mxu0
    %v719 = vld [vmem:[%s9] sm:$0xff]
    %v720 = vld [vmem:[%s9 + $0x8] sm:$0xff]
    %v721 = vld [vmem:[%s9 + $0x10] sm:$0xff]
    %v722 = vld [vmem:[%s9 + $0x18] sm:$0xff]
    %v723 = vld [vmem:[%s9 + $0x20] sm:$0xff]
    %v724 = vld [vmem:[%s9 + $0x28] sm:$0xff]
    %v725 = vld [vmem:[%s9 + $0x30] sm:$0xff]
    %v726 = vld [vmem:[%s9 + $0x38] sm:$0xff]
    %v727 = vld [vmem:[%s9 + $0x40] sm:$0xff]
    %v728 = vld [vmem:[%s9 + $0x48] sm:$0xff]
    %v729 = vld [vmem:[%s9 + $0x50] sm:$0xff]
    %v730 = vld [vmem:[%s9 + $0x58] sm:$0xff]
    %v731 = vld [vmem:[%s9 + $0x60] sm:$0xff]
    %v732 = vld [vmem:[%s9 + $0x68] sm:$0xff]
    %v733 = vld [vmem:[%s9 + $0x70] sm:$0xff]
    %v734 = vld [vmem:[%s9 + $0x78] sm:$0xff]
    %735 = vmatprep.subr.mxu0 0.0
    %736 = vmatpush1.msra.mxu0 %v719
    %737 = vmatprep.subr.mxu0 0.0
    %738 = vmatpush1.msra.mxu0 %v720
    %739 = vmatprep.subr.mxu0 0.0
    %740 = vmatpush1.msra.mxu0 %v721
    %741 = vmatprep.subr.mxu0 0.0
    %742 = vmatpush1.msra.mxu0 %v722
    %743 = vmatprep.subr.mxu0 0.0
    %744 = vmatpush1.msra.mxu0 %v723
    %745 = vmatprep.subr.mxu0 0.0
    %746 = vmatpush1.msra.mxu0 %v724
    %747 = vmatprep.subr.mxu0 0.0
    %748 = vmatpush1.msra.mxu0 %v725
    %749 = vmatprep.subr.mxu0 0.0
    %750 = vmatpush1.msra.mxu0 %v726
    %751 = vmatprep.subr.mxu0 0.0
    %752 = vmatpush1.msra.mxu0 %v727
    %753 = vmatprep.subr.mxu0 0.0
    %754 = vmatpush1.msra.mxu0 %v728
    %755 = vmatprep.subr.mxu0 0.0
    %756 = vmatpush1.msra.mxu0 %v729
    %757 = vmatprep.subr.mxu0 0.0
    %758 = vmatpush1.msra.mxu0 %v730
    %759 = vmatprep.subr.mxu0 0.0
    %760 = vmatpush1.msra.mxu0 %v731
    %761 = vmatprep.subr.mxu0 0.0
    %762 = vmatpush1.msra.mxu0 %v732
    %763 = vmatprep.subr.mxu0 0.0
    %764 = vmatpush1.msra.mxu0 %v733
    %765 = vmatprep.subr.mxu0 0.0
    %766 = vmatpush1.msra.mxu0 %v734
    %767 = vmatprep.subr.mxu0 0.0
    %768 = vmatpush1.msra.mxu0 0.0
    %769 = vmatprep.subr.mxu0 0.0
    %770 = vmatpush1.msra.mxu0 0.0
    %771 = vmatprep.subr.mxu0 0.0
    %772 = vmatpush1.msra.mxu0 0.0
    %773 = vmatprep.subr.mxu0 0.0
    %774 = vmatpush1.msra.mxu0 0.0
    %775 = vmatprep.subr.mxu0 0.0
    %776 = vmatpush1.msra.mxu0 0.0
    %777 = vmatprep.subr.mxu0 0.0
    %778 = vmatpush1.msra.mxu0 0.0
    %779 = vmatprep.subr.mxu0 0.0
    %780 = vmatpush1.msra.mxu0 0.0
    %781 = vmatprep.subr.mxu0 0.0
    %782 = vmatpush1.msra.mxu0 0.0
    %783 = vmatprep.subr.mxu0 0.0
    %784 = vmatpush1.msra.mxu0 0.0
    %785 = vmatprep.subr.mxu0 0.0
    %786 = vmatpush1.msra.mxu0 0.0
    %787 = vmatprep.subr.mxu0 0.0
    %788 = vmatpush1.msra.mxu0 0.0
    %789 = vmatprep.subr.mxu0 0.0
    %790 = vmatpush1.msra.mxu0 0.0
    %791 = vmatprep.subr.mxu0 0.0
    %792 = vmatpush1.msra.mxu0 0.0
    %793 = vmatprep.subr.mxu0 0.0
    %794 = vmatpush1.msra.mxu0 0.0
    %795 = vmatprep.subr.mxu0 0.0
    %796 = vmatpush1.msra.mxu0 0.0
    %797 = vmatprep.subr.mxu0 0.0
    %798 = vmatpush1.msra.mxu0 0.0
    %799 = vmatprep.mubr.f32.mxu0 0.0
    %800 = vmatmul.mubr.f32.gmra.mrb[0].mxu0 %v625
    %v801 = vpop.f32.mrb[0].mxu0
    %v802 = vadd.f32 0.0, %v801
    %v803 = vpop.f32.mrb[0].mxu0
    %804 = vdwg.mxu0
    %v805 = vld [vmem:[%s10] sm:$0xff]
    %v806 = vld [vmem:[%s10 + $0x8] sm:$0xff]
    %v807 = vld [vmem:[%s10 + $0x10] sm:$0xff]
    %v808 = vld [vmem:[%s10 + $0x18] sm:$0xff]
    %v809 = vld [vmem:[%s10 + $0x20] sm:$0xff]
    %v810 = vld [vmem:[%s10 + $0x28] sm:$0xff]
    %v811 = vld [vmem:[%s10 + $0x30] sm:$0xff]
    %v812 = vld [vmem:[%s10 + $0x38] sm:$0xff]
    %v813 = vld [vmem:[%s10 + $0x40] sm:$0xff]
    %v814 = vld [vmem:[%s10 + $0x48] sm:$0xff]
    %v815 = vld [vmem:[%s10 + $0x50] sm:$0xff]
    %v816 = vld [vmem:[%s10 + $0x58] sm:$0xff]
    %v817 = vld [vmem:[%s10 + $0x60] sm:$0xff]
    %v818 = vld [vmem:[%s10 + $0x68] sm:$0xff]
    %v819 = vld [vmem:[%s10 + $0x70] sm:$0xff]
    %v820 = vld [vmem:[%s10 + $0x78] sm:$0xff]
    %821 = vmatprep.subr.mxu0 0.0
    %822 = vmatpush1.msra.mxu0 %v805
    %823 = vmatprep.subr.mxu0 0.0
    %824 = vmatpush1.msra.mxu0 %v806
    %825 = vmatprep.subr.mxu0 0.0
    %826 = vmatpush1.msra.mxu0 %v807
    %827 = vmatprep.subr.mxu0 0.0
    %828 = vmatpush1.msra.mxu0 %v808
    %829 = vmatprep.subr.mxu0 0.0
    %830 = vmatpush1.msra.mxu0 %v809
    %831 = vmatprep.subr.mxu0 0.0
    %832 = vmatpush1.msra.mxu0 %v810
    %833 = vmatprep.subr.mxu0 0.0
    %834 = vmatpush1.msra.mxu0 %v811
    %835 = vmatprep.subr.mxu0 0.0
    %836 = vmatpush1.msra.mxu0 %v812
    %837 = vmatprep.subr.mxu0 0.0
    %838 = vmatpush1.msra.mxu0 %v813
    %839 = vmatprep.subr.mxu0 0.0
    %840 = vmatpush1.msra.mxu0 %v814
    %841 = vmatprep.subr.mxu0 0.0
    %842 = vmatpush1.msra.mxu0 %v815
    %843 = vmatprep.subr.mxu0 0.0
    %844 = vmatpush1.msra.mxu0 %v816
    %845 = vmatprep.subr.mxu0 0.0
    %846 = vmatpush1.msra.mxu0 %v817
    %847 = vmatprep.subr.mxu0 0.0
    %848 = vmatpush1.msra.mxu0 %v818
    %849 = vmatprep.subr.mxu0 0.0
    %850 = vmatpush1.msra.mxu0 %v819
    %851 = vmatprep.subr.mxu0 0.0
    %852 = vmatpush1.msra.mxu0 %v820
    %853 = vmatprep.subr.mxu0 0.0
    %854 = vmatpush1.msra.mxu0 0.0
    %855 = vmatprep.subr.mxu0 0.0
    %856 = vmatpush1.msra.mxu0 0.0
    %857 = vmatprep.subr.mxu0 0.0
    %858 = vmatpush1.msra.mxu0 0.0
    %859 = vmatprep.subr.mxu0 0.0
    %860 = vmatpush1.msra.mxu0 0.0
    %861 = vmatprep.subr.mxu0 0.0
    %862 = vmatpush1.msra.mxu0 0.0
    %863 = vmatprep.subr.mxu0 0.0
    %864 = vmatpush1.msra.mxu0 0.0
    %865 = vmatprep.subr.mxu0 0.0
    %866 = vmatpush1.msra.mxu0 0.0
    %867 = vmatprep.subr.mxu0 0.0
    %868 = vmatpush1.msra.mxu0 0.0
    %869 = vmatprep.subr.mxu0 0.0
    %870 = vmatpush1.msra.mxu0 0.0
    %871 = vmatprep.subr.mxu0 0.0
    %872 = vmatpush1.msra.mxu0 0.0
    %873 = vmatprep.subr.mxu0 0.0
    %874 = vmatpush1.msra.mxu0 0.0
    %875 = vmatprep.subr.mxu0 0.0
    %876 = vmatpush1.msra.mxu0 0.0
    %877 = vmatprep.subr.mxu0 0.0
    %878 = vmatpush1.msra.mxu0 0.0
    %879 = vmatprep.subr.mxu0 0.0
    %880 = vmatpush1.msra.mxu0 0.0
    %881 = vmatprep.subr.mxu0 0.0
    %882 = vmatpush1.msra.mxu0 0.0
    %883 = vmatprep.subr.mxu0 0.0
    %884 = vmatpush1.msra.mxu0 0.0
    %885 = vmatprep.mubr.f32.mxu0 0.0
    %886 = vmatmul.mubr.f32.gmra.mrb[0].mxu0 %v625
    %v887 = vpop.f32.mrb[0].mxu0
    %v888 = vadd.f32 0.0, %v887
    %v889 = vpop.f32.mrb[0].mxu0
    %890 = vdwg.mxu0
    %v891 = vmax.f32 %v716, 0.0
    %v892 = vand.u32 2147483647, %v716
    %v893 = vsub.f32 0.0, %v892
    %v894 = vmul.f32 %v893, 1.442695
    %v895 = vpow.pop %v894
    %v896 = vadd.f32 %v895, 1.0
    %v897 = vlog2.pop %v896
    %v898 = vmul.f32 %v897, 0.6931472
    %v899 = vadd.f32 %v891, %v898
    %vm900 = vcmp.gt.f32.partialorder %v716, 20.0
    %v901 = vsel %vm900, %v716, %v899
    %v903 = vcombine.high %v901, %v901
    %v905 = vunpack.c.l.s4 1966171168
    %v906 = vunpack.c.0.s8 %v905
    %v907 = vlaneseq
    %v908 = vshrl.u32 %v907, 7
    %v909 = vsub.s32 %v906, %v908
    %v910 = vrot.slane %v901, %v909
    %v912 = vunpack.c.l.s4 1966171168
    %v913 = vunpack.c.0.s8 %v912
    %v914 = vlaneseq
    %v915 = vshrl.u32 %v914, 7
    %v916 = vsub.s32 %v913, %v915
    %v917 = vrot.slane %v903, %v916
    %v918 = vcombine.high %v910, %v910
    %v919 = vcombine.high %v917, %v917
    %v921 = vunpack.c.l.s4 1966171168
    %v922 = vunpack.c.0.s8 %v921
    %v923 = vlaneseq
    %v924 = vshrl.u32 %v923, 7
    %v925 = vsub.s32 %v922, %v924
    %v926 = vrot.slane %v910, %v925
    %v928 = vunpack.c.l.s4 1966171168
    %v929 = vunpack.c.0.s8 %v928
    %v930 = vlaneseq
    %v931 = vshrl.u32 %v930, 7
    %v932 = vsub.s32 %v929, %v931
    %v933 = vrot.slane %v917, %v932
    %v935 = vunpack.c.l.s4 1966171168
    %v936 = vunpack.c.0.s8 %v935
    %v937 = vlaneseq
    %v938 = vshrl.u32 %v937, 7
    %v939 = vsub.s32 %v936, %v938
    %v940 = vrot.slane %v918, %v939
    %v942 = vunpack.c.l.s4 1966171168
    %v943 = vunpack.c.0.s8 %v942
    %v944 = vlaneseq
    %v945 = vshrl.u32 %v944, 7
    %v946 = vsub.s32 %v943, %v945
    %v947 = vrot.slane %v919, %v946
    %v948 = vcombine.high %v926, %v926
    %v949 = vcombine.high %v933, %v933
    %v950 = vcombine.high %v940, %v940
    %v951 = vcombine.high %v947, %v947
    %v952 = vld [vmem:[%s11] sm:$0xff]
    %v953 = vld [vmem:[%s11 + $0x8] sm:$0xff]
    %v954 = vlaneseq
    %v955 = vshrl.u32 %v954, 7
    %v956 = vsub.s32 0, %v955
    %v957 = vrot.slane %v926, %v956
    %v958 = vlaneseq
    %v959 = vshrl.u32 %v958, 7
    %v960 = vsub.s32 0, %v959
    %v961 = vrot.slane %v940, %v960
    %v962 = vlaneseq
    %v963 = vshrl.u32 %v962, 7
    %v964 = vsub.s32 0, %v963
    %v965 = vrot.slane %v948, %v964
    %v966 = vlaneseq
    %v967 = vshrl.u32 %v966, 7
    %v968 = vsub.s32 0, %v967
    %v969 = vrot.slane %v950, %v968
    %v970 = vlaneseq
    %v971 = vshrl.u32 %v970, 7
    %v972 = vsub.s32 0, %v971
    %v973 = vrot.slane %v933, %v972
    %v974 = vlaneseq
    %v975 = vshrl.u32 %v974, 7
    %v976 = vsub.s32 0, %v975
    %v977 = vrot.slane %v947, %v976
    %v978 = vlaneseq
    %v979 = vshrl.u32 %v978, 7
    %v980 = vsub.s32 0, %v979
    %v981 = vrot.slane %v949, %v980
    %v982 = vlaneseq
    %v983 = vshrl.u32 %v982, 7
    %v984 = vsub.s32 0, %v983
    %v985 = vrot.slane %v951, %v984
    %v994 = vmul.f32 %v957, %v952
    %v995 = vmul.f32 %v957, %v953
    %v996 = vmul.f32 %v961, %v952
    %v997 = vmul.f32 %v961, %v953
    %v998 = vmul.f32 %v965, %v952
    %v999 = vmul.f32 %v965, %v953
    %v1000 = vmul.f32 %v969, %v952
    %v1001 = vmul.f32 %v969, %v953
    %v1002 = vmul.f32 %v973, %v952
    %v1003 = vmul.f32 %v973, %v953
    %v1004 = vmul.f32 %v977, %v952
    %v1005 = vmul.f32 %v977, %v953
    %v1006 = vmul.f32 %v981, %v952
    %v1007 = vmul.f32 %v981, %v953
    %v1008 = vmul.f32 %v985, %v952
    %v1009 = vmul.f32 %v985, %v953
    %v1010 = vmul.f32 %v994, 1.442695
    %v1011 = vpow.pop %v1010
    %v1012 = vmul.f32 %v995, 1.442695
    %v1013 = vpow.pop %v1012
    %v1014 = vmul.f32 %v996, 1.442695
    %v1015 = vpow.pop %v1014
    %v1016 = vmul.f32 %v997, 1.442695
    %v1017 = vpow.pop %v1016
    %v1018 = vmul.f32 %v998, 1.442695
    %v1019 = vpow.pop %v1018
    %v1020 = vmul.f32 %v999, 1.442695
    %v1021 = vpow.pop %v1020
    %v1022 = vmul.f32 %v1000, 1.442695
    %v1023 = vpow.pop %v1022
    %v1024 = vmul.f32 %v1001, 1.442695
    %v1025 = vpow.pop %v1024
    %v1026 = vmul.f32 %v1002, 1.442695
    %v1027 = vpow.pop %v1026
    %v1028 = vmul.f32 %v1003, 1.442695
    %v1029 = vpow.pop %v1028
    %v1030 = vmul.f32 %v1004, 1.442695
    %v1031 = vpow.pop %v1030
    %v1032 = vmul.f32 %v1005, 1.442695
    %v1033 = vpow.pop %v1032
    %v1034 = vmul.f32 %v1006, 1.442695
    %v1035 = vpow.pop %v1034
    %v1036 = vmul.f32 %v1007, 1.442695
    %v1037 = vpow.pop %v1036
    %v1038 = vmul.f32 %v1008, 1.442695
    %v1039 = vpow.pop %v1038
    %v1040 = vmul.f32 %v1009, 1.442695
    %v1041 = vpow.pop %v1040
    %1042 = vst [vmem:[#allocation2] sm:$0xff] %v1011
    %1043 = vst [vmem:[#allocation2 + $0x8] sm:$0xff] %v1013
    %1044 = vst [vmem:[#allocation2 + $0x10] sm:$0xff] %v1015
    %1045 = vst [vmem:[#allocation2 + $0x18] sm:$0xff] %v1017
    %1046 = vst [vmem:[#allocation2 + $0x20] sm:$0xff] %v1019
    %1047 = vst [vmem:[#allocation2 + $0x28] sm:$0xff] %v1021
    %1048 = vst [vmem:[#allocation2 + $0x30] sm:$0xff] %v1023
    %1049 = vst [vmem:[#allocation2 + $0x38] sm:$0xff] %v1025
    %1050 = vst [vmem:[#allocation2 + $0x40] sm:$0xff] %v1027
    %1051 = vst [vmem:[#allocation2 + $0x48] sm:$0xff] %v1029
    %1052 = vst [vmem:[#allocation2 + $0x50] sm:$0xff] %v1031
    %1053 = vst [vmem:[#allocation2 + $0x58] sm:$0xff] %v1033
    %1054 = vst [vmem:[#allocation2 + $0x60] sm:$0xff] %v1035
    %1055 = vst [vmem:[#allocation2 + $0x68] sm:$0xff] %v1037
    %1056 = vst [vmem:[#allocation2 + $0x70] sm:$0xff] %v1039
    %1057 = vst [vmem:[#allocation2 + $0x78] sm:$0xff] %v1041
    %v1058 = vmul.f32 %v901, %v625
    %v1060 = vcombine.high %v1058, %v1058
    %v1062 = vunpack.c.l.s4 1966171168
    %v1063 = vunpack.c.0.s8 %v1062
    %v1064 = vlaneseq
    %v1065 = vshrl.u32 %v1064, 7
    %v1066 = vsub.s32 %v1063, %v1065
    %v1067 = vrot.slane %v1058, %v1066
    %v1069 = vunpack.c.l.s4 1966171168
    %v1070 = vunpack.c.0.s8 %v1069
    %v1071 = vlaneseq
    %v1072 = vshrl.u32 %v1071, 7
    %v1073 = vsub.s32 %v1070, %v1072
    %v1074 = vrot.slane %v1060, %v1073
    %v1075 = vcombine.high %v1067, %v1067
    %v1076 = vcombine.high %v1074, %v1074
    %v1078 = vunpack.c.l.s4 1966171168
    %v1079 = vunpack.c.0.s8 %v1078
    %v1080 = vlaneseq
    %v1081 = vshrl.u32 %v1080, 7
    %v1082 = vsub.s32 %v1079, %v1081
    %v1083 = vrot.slane %v1067, %v1082
    %v1085 = vunpack.c.l.s4 1966171168
    %v1086 = vunpack.c.0.s8 %v1085
    %v1087 = vlaneseq
    %v1088 = vshrl.u32 %v1087, 7
    %v1089 = vsub.s32 %v1086, %v1088
    %v1090 = vrot.slane %v1074, %v1089
    %v1092 = vunpack.c.l.s4 1966171168
    %v1093 = vunpack.c.0.s8 %v1092
    %v1094 = vlaneseq
    %v1095 = vshrl.u32 %v1094, 7
    %v1096 = vsub.s32 %v1093, %v1095
    %v1097 = vrot.slane %v1075, %v1096
    %v1099 = vunpack.c.l.s4 1966171168
    %v1100 = vunpack.c.0.s8 %v1099
    %v1101 = vlaneseq
    %v1102 = vshrl.u32 %v1101, 7
    %v1103 = vsub.s32 %v1100, %v1102
    %v1104 = vrot.slane %v1076, %v1103
    %v1105 = vcombine.high %v1083, %v1083
    %v1106 = vcombine.high %v1090, %v1090
    %v1107 = vcombine.high %v1097, %v1097
    %v1108 = vcombine.high %v1104, %v1104
    %v1109 = vlaneseq
    %v1110 = vshrl.u32 %v1109, 7
    %v1111 = vsub.s32 0, %v1110
    %v1112 = vrot.slane %v802, %v1111
    %1114 = vbcast.lane.b32.xlu0 %v1112, 256
    %v1115 = vpop.permute.xlu0 %1114
    %s1117 = sor.u32 256, 8
    %1118 = vbcast.lane.b32.xlu0 %v1112, %s1117
    %v1119 = vpop.permute.xlu0 %1118
    %v1120 = vlaneseq
    %v1121 = vshrl.u32 %v1120, 7
    %v1122 = vsub.s32 1, %v1121
    %v1123 = vrot.slane %v802, %v1122
    %1125 = vbcast.lane.b32.xlu0 %v1123, 256
    %v1126 = vpop.permute.xlu0 %1125
    %s1128 = sor.u32 256, 8
    %1129 = vbcast.lane.b32.xlu0 %v1123, %s1128
    %v1130 = vpop.permute.xlu0 %1129
    %v1131 = vlaneseq
    %v1132 = vshrl.u32 %v1131, 7
    %v1133 = vsub.s32 2, %v1132
    %v1134 = vrot.slane %v802, %v1133
    %1136 = vbcast.lane.b32.xlu0 %v1134, 256
    %v1137 = vpop.permute.xlu0 %1136
    %s1139 = sor.u32 256, 8
    %1140 = vbcast.lane.b32.xlu0 %v1134, %s1139
    %v1141 = vpop.permute.xlu0 %1140
    %v1142 = vlaneseq
    %v1143 = vshrl.u32 %v1142, 7
    %v1144 = vsub.s32 3, %v1143
    %v1145 = vrot.slane %v802, %v1144
    %1147 = vbcast.lane.b32.xlu0 %v1145, 256
    %v1148 = vpop.permute.xlu0 %1147
    %s1150 = sor.u32 256, 8
    %1151 = vbcast.lane.b32.xlu0 %v1145, %s1150
    %v1152 = vpop.permute.xlu0 %1151
    %v1153 = vlaneseq
    %v1154 = vshrl.u32 %v1153, 7
    %v1155 = vsub.s32 4, %v1154
    %v1156 = vrot.slane %v802, %v1155
    %1158 = vbcast.lane.b32.xlu0 %v1156, 256
    %v1159 = vpop.permute.xlu0 %1158
    %s1161 = sor.u32 256, 8
    %1162 = vbcast.lane.b32.xlu0 %v1156, %s1161
    %v1163 = vpop.permute.xlu0 %1162
    %v1164 = vlaneseq
    %v1165 = vshrl.u32 %v1164, 7
    %v1166 = vsub.s32 5, %v1165
    %v1167 = vrot.slane %v802, %v1166
    %1169 = vbcast.lane.b32.xlu0 %v1167, 256
    %v1170 = vpop.permute.xlu0 %1169
    %s1172 = sor.u32 256, 8
    %1173 = vbcast.lane.b32.xlu0 %v1167, %s1172
    %v1174 = vpop.permute.xlu0 %1173
    %v1175 = vlaneseq
    %v1176 = vshrl.u32 %v1175, 7
    %v1177 = vsub.s32 6, %v1176
    %v1178 = vrot.slane %v802, %v1177
    %1180 = vbcast.lane.b32.xlu0 %v1178, 256
    %v1181 = vpop.permute.xlu0 %1180
    %s1183 = sor.u32 256, 8
    %1184 = vbcast.lane.b32.xlu0 %v1178, %s1183
    %v1185 = vpop.permute.xlu0 %1184
    %v1186 = vlaneseq
    %v1187 = vshrl.u32 %v1186, 7
    %v1188 = vsub.s32 7, %v1187
    %v1189 = vrot.slane %v802, %v1188
    %1191 = vbcast.lane.b32.xlu0 %v1189, 256
    %v1192 = vpop.permute.xlu0 %1191
    %s1194 = sor.u32 256, 8
    %1195 = vbcast.lane.b32.xlu0 %v1189, %s1194
    %v1196 = vpop.permute.xlu0 %1195
    %s1198 = sor.u32 256, 16
    %1199 = vbcast.lane.b32.xlu0 %v1112, %s1198
    %v1200 = vpop.permute.xlu0 %1199
    %s1202 = sor.u32 256, 24
    %1203 = vbcast.lane.b32.xlu0 %v1112, %s1202
    %v1204 = vpop.permute.xlu0 %1203
    %s1206 = sor.u32 256, 16
    %1207 = vbcast.lane.b32.xlu0 %v1123, %s1206
    %v1208 = vpop.permute.xlu0 %1207
    %s1210 = sor.u32 256, 24
    %1211 = vbcast.lane.b32.xlu0 %v1123, %s1210
    %v1212 = vpop.permute.xlu0 %1211
    %s1214 = sor.u32 256, 16
    %1215 = vbcast.lane.b32.xlu0 %v1134, %s1214
    %v1216 = vpop.permute.xlu0 %1215
    %s1218 = sor.u32 256, 24
    %1219 = vbcast.lane.b32.xlu0 %v1134, %s1218
    %v1220 = vpop.permute.xlu0 %1219
    %s1222 = sor.u32 256, 16
    %1223 = vbcast.lane.b32.xlu0 %v1145, %s1222
    %v1224 = vpop.permute.xlu0 %1223
    %s1226 = sor.u32 256, 24
    %1227 = vbcast.lane.b32.xlu0 %v1145, %s1226
    %v1228 = vpop.permute.xlu0 %1227
    %s1230 = sor.u32 256, 16
    %1231 = vbcast.lane.b32.xlu0 %v1156, %s1230
    %v1232 = vpop.permute.xlu0 %1231
    %s1234 = sor.u32 256, 24
    %1235 = vbcast.lane.b32.xlu0 %v1156, %s1234
    %v1236 = vpop.permute.xlu0 %1235
    %s1238 = sor.u32 256, 16
    %1239 = vbcast.lane.b32.xlu0 %v1167, %s1238
    %v1240 = vpop.permute.xlu0 %1239
    %s1242 = sor.u32 256, 24
    %1243 = vbcast.lane.b32.xlu0 %v1167, %s1242
    %v1244 = vpop.permute.xlu0 %1243
    %s1246 = sor.u32 256, 16
    %1247 = vbcast.lane.b32.xlu0 %v1178, %s1246
    %v1248 = vpop.permute.xlu0 %1247
    %s1250 = sor.u32 256, 24
    %1251 = vbcast.lane.b32.xlu0 %v1178, %s1250
    %v1252 = vpop.permute.xlu0 %1251
    %s1254 = sor.u32 256, 16
    %1255 = vbcast.lane.b32.xlu0 %v1189, %s1254
    %v1256 = vpop.permute.xlu0 %1255
    %s1258 = sor.u32 256, 24
    %1259 = vbcast.lane.b32.xlu0 %v1189, %s1258
    %v1260 = vpop.permute.xlu0 %1259
    %v1261 = vsel %vm365, %v1115, %v1200
    %v1262 = vsel %vm365, %v1119, %v1204
    %v1263 = vsel %vm365, %v1126, %v1208
    %v1264 = vsel %vm365, %v1130, %v1212
    %v1265 = vsel %vm365, %v1137, %v1216
    %v1266 = vsel %vm365, %v1141, %v1220
    %v1267 = vsel %vm365, %v1148, %v1224
    %v1268 = vsel %vm365, %v1152, %v1228
    %v1269 = vsel %vm365, %v1159, %v1232
    %v1270 = vsel %vm365, %v1163, %v1236
    %v1271 = vsel %vm365, %v1170, %v1240
    %v1272 = vsel %vm365, %v1174, %v1244
    %v1273 = vsel %vm365, %v1181, %v1248
    %v1274 = vsel %vm365, %v1185, %v1252
    %v1275 = vsel %vm365, %v1192, %v1256
    %v1276 = vsel %vm365, %v1196, %v1260
    %v1277 = vlaneseq
    %v1278 = vshrl.u32 %v1277, 7
    %v1279 = vsub.s32 0, %v1278
    %v1280 = vrot.slane %v1083, %v1279
    %v1281 = vlaneseq
    %v1282 = vshrl.u32 %v1281, 7
    %v1283 = vsub.s32 0, %v1282
    %v1284 = vrot.slane %v1097, %v1283
    %v1285 = vlaneseq
    %v1286 = vshrl.u32 %v1285, 7
    %v1287 = vsub.s32 0, %v1286
    %v1288 = vrot.slane %v1105, %v1287
    %v1289 = vlaneseq
    %v1290 = vshrl.u32 %v1289, 7
    %v1291 = vsub.s32 0, %v1290
    %v1292 = vrot.slane %v1107, %v1291
    %v1293 = vlaneseq
    %v1294 = vshrl.u32 %v1293, 7
    %v1295 = vsub.s32 0, %v1294
    %v1296 = vrot.slane %v1090, %v1295
    %v1297 = vlaneseq
    %v1298 = vshrl.u32 %v1297, 7
    %v1299 = vsub.s32 0, %v1298
    %v1300 = vrot.slane %v1104, %v1299
    %v1301 = vlaneseq
    %v1302 = vshrl.u32 %v1301, 7
    %v1303 = vsub.s32 0, %v1302
    %v1304 = vrot.slane %v1106, %v1303
    %v1305 = vlaneseq
    %v1306 = vshrl.u32 %v1305, 7
    %v1307 = vsub.s32 0, %v1306
    %v1308 = vrot.slane %v1108, %v1307
    %v1317 = vmul.f32 %v1280, %v1261
    %v1318 = vmul.f32 %v1280, %v1262
    %v1319 = vmul.f32 %v1284, %v1263
    %v1320 = vmul.f32 %v1284, %v1264
    %v1321 = vmul.f32 %v1288, %v1265
    %v1322 = vmul.f32 %v1288, %v1266
    %v1323 = vmul.f32 %v1292, %v1267
    %v1324 = vmul.f32 %v1292, %v1268
    %v1325 = vmul.f32 %v1296, %v1269
    %v1326 = vmul.f32 %v1296, %v1270
    %v1327 = vmul.f32 %v1300, %v1271
    %v1328 = vmul.f32 %v1300, %v1272
    %v1329 = vmul.f32 %v1304, %v1273
    %v1330 = vmul.f32 %v1304, %v1274
    %v1331 = vmul.f32 %v1308, %v1275
    %v1332 = vmul.f32 %v1308, %v1276
    %1333 = vst [vmem:[#allocation3] sm:$0xff] %v1317
    %1334 = vst [vmem:[#allocation3 + $0x8] sm:$0xff] %v1318
    %1335 = vst [vmem:[#allocation3 + $0x10] sm:$0xff] %v1319
    %1336 = vst [vmem:[#allocation3 + $0x18] sm:$0xff] %v1320
    %1337 = vst [vmem:[#allocation3 + $0x20] sm:$0xff] %v1321
    %1338 = vst [vmem:[#allocation3 + $0x28] sm:$0xff] %v1322
    %1339 = vst [vmem:[#allocation3 + $0x30] sm:$0xff] %v1323
    %1340 = vst [vmem:[#allocation3 + $0x38] sm:$0xff] %v1324
    %1341 = vst [vmem:[#allocation3 + $0x40] sm:$0xff] %v1325
    %1342 = vst [vmem:[#allocation3 + $0x48] sm:$0xff] %v1326
    %1343 = vst [vmem:[#allocation3 + $0x50] sm:$0xff] %v1327
    %1344 = vst [vmem:[#allocation3 + $0x58] sm:$0xff] %v1328
    %1345 = vst [vmem:[#allocation3 + $0x60] sm:$0xff] %v1329
    %1346 = vst [vmem:[#allocation3 + $0x68] sm:$0xff] %v1330
    %1347 = vst [vmem:[#allocation3 + $0x70] sm:$0xff] %v1331
    %1348 = vst [vmem:[#allocation3 + $0x78] sm:$0xff] %v1332
    %v1349 = vld [vmem:[#allocation2] sm:$0xff]
    %v1350 = vld [vmem:[#allocation2 + $0x8] sm:$0xff]
    %v1351 = vmul.f32 %v1349, 0.0
    %v1352 = vmul.f32 %v1350, 0.0
    %v1353 = vld [vmem:[#allocation3] sm:$0xff]
    %v1354 = vld [vmem:[#allocation3 + $0x8] sm:$0xff]
    %v1355 = vadd.f32 %v1351, %v1353
    %v1356 = vadd.f32 %v1352, %v1354
    %1357 = vst [vmem:[#allocation4] sm:$0xff] %v1355
    %1358 = vst [vmem:[#allocation4 + $0x8] sm:$0xff] %v1356
    %s1359 = scalar_lea.vmem [#allocation2], 16
    %v1360 = vld [vmem:[%s1359] sm:$0xff]
    %v1361 = vld [vmem:[%s1359 + $0x8] sm:$0xff]
    %v1362 = vmul.f32 %v1360, %v1355
    %v1363 = vmul.f32 %v1361, %v1356
    %s1364 = scalar_lea.vmem [#allocation3], 16
    %v1365 = vld [vmem:[%s1364] sm:$0xff]
    %v1366 = vld [vmem:[%s1364 + $0x8] sm:$0xff]
    %v1367 = vadd.f32 %v1362, %v1365
    %v1368 = vadd.f32 %v1363, %v1366
    %s1369 = scalar_lea.vmem [#allocation4], 16
    %1370 = vst [vmem:[%s1369] sm:$0xff] %v1367
    %1371 = vst [vmem:[%s1369 + $0x8] sm:$0xff] %v1368
    %s1372 = scalar_lea.vmem [#allocation2], 32
    %v1373 = vld [vmem:[%s1372] sm:$0xff]
    %v1374 = vld [vmem:[%s1372 + $0x8] sm:$0xff]
    %v1375 = vmul.f32 %v1373, %v1367
    %v1376 = vmul.f32 %v1374, %v1368
    %s1377 = scalar_lea.vmem [#allocation3], 32
    %v1378 = vld [vmem:[%s1377] sm:$0xff]
    %v1379 = vld [vmem:[%s1377 + $0x8] sm:$0xff]
    %v1380 = vadd.f32 %v1375, %v1378
    %v1381 = vadd.f32 %v1376, %v1379
    %s1382 = scalar_lea.vmem [#allocation4], 32
    %1383 = vst [vmem:[%s1382] sm:$0xff] %v1380
    %1384 = vst [vmem:[%s1382 + $0x8] sm:$0xff] %v1381
    %s1385 = scalar_lea.vmem [#allocation2], 48
    %v1386 = vld [vmem:[%s1385] sm:$0xff]
    %v1387 = vld [vmem:[%s1385 + $0x8] sm:$0xff]
    %v1388 = vmul.f32 %v1386, %v1380
    %v1389 = vmul.f32 %v1387, %v1381
    %s1390 = scalar_lea.vmem [#allocation3], 48
    %v1391 = vld [vmem:[%s1390] sm:$0xff]
    %v1392 = vld [vmem:[%s1390 + $0x8] sm:$0xff]
    %v1393 = vadd.f32 %v1388, %v1391
    %v1394 = vadd.f32 %v1389, %v1392
    %s1395 = scalar_lea.vmem [#allocation4], 48
    %1396 = vst [vmem:[%s1395] sm:$0xff] %v1393
    %1397 = vst [vmem:[%s1395 + $0x8] sm:$0xff] %v1394
    %s1398 = scalar_lea.vmem [#allocation2], 64
    %v1399 = vld [vmem:[%s1398] sm:$0xff]
    %v1400 = vld [vmem:[%s1398 + $0x8] sm:$0xff]
    %v1401 = vmul.f32 %v1399, %v1393
    %v1402 = vmul.f32 %v1400, %v1394
    %s1403 = scalar_lea.vmem [#allocation3], 64
    %v1404 = vld [vmem:[%s1403] sm:$0xff]
    %v1405 = vld [vmem:[%s1403 + $0x8] sm:$0xff]
    %v1406 = vadd.f32 %v1401, %v1404
    %v1407 = vadd.f32 %v1402, %v1405
    %s1408 = scalar_lea.vmem [#allocation4], 64
    %1409 = vst [vmem:[%s1408] sm:$0xff] %v1406
    %1410 = vst [vmem:[%s1408 + $0x8] sm:$0xff] %v1407
    %s1411 = scalar_lea.vmem [#allocation2], 80
    %v1412 = vld [vmem:[%s1411] sm:$0xff]
    %v1413 = vld [vmem:[%s1411 + $0x8] sm:$0xff]
    %v1414 = vmul.f32 %v1412, %v1406
    %v1415 = vmul.f32 %v1413, %v1407
    %s1416 = scalar_lea.vmem [#allocation3], 80
    %v1417 = vld [vmem:[%s1416] sm:$0xff]
    %v1418 = vld [vmem:[%s1416 + $0x8] sm:$0xff]
    %v1419 = vadd.f32 %v1414, %v1417
    %v1420 = vadd.f32 %v1415, %v1418
    %s1421 = scalar_lea.vmem [#allocation4], 80
    %1422 = vst [vmem:[%s1421] sm:$0xff] %v1419
    %1423 = vst [vmem:[%s1421 + $0x8] sm:$0xff] %v1420
    %s1424 = scalar_lea.vmem [#allocation2], 96
    %v1425 = vld [vmem:[%s1424] sm:$0xff]
    %v1426 = vld [vmem:[%s1424 + $0x8] sm:$0xff]
    %v1427 = vmul.f32 %v1425, %v1419
    %v1428 = vmul.f32 %v1426, %v1420
    %s1429 = scalar_lea.vmem [#allocation3], 96
    %v1430 = vld [vmem:[%s1429] sm:$0xff]
    %v1431 = vld [vmem:[%s1429 + $0x8] sm:$0xff]
    %v1432 = vadd.f32 %v1427, %v1430
    %v1433 = vadd.f32 %v1428, %v1431
    %s1434 = scalar_lea.vmem [#allocation4], 96
    %1435 = vst [vmem:[%s1434] sm:$0xff] %v1432
    %1436 = vst [vmem:[%s1434 + $0x8] sm:$0xff] %v1433
    %s1437 = scalar_lea.vmem [#allocation2], 112
    %v1438 = vld [vmem:[%s1437] sm:$0xff]
    %v1439 = vld [vmem:[%s1437 + $0x8] sm:$0xff]
    %v1440 = vmul.f32 %v1438, %v1432
    %v1441 = vmul.f32 %v1439, %v1433
    %s1442 = scalar_lea.vmem [#allocation3], 112
    %v1443 = vld [vmem:[%s1442] sm:$0xff]
    %v1444 = vld [vmem:[%s1442 + $0x8] sm:$0xff]
    %v1445 = vadd.f32 %v1440, %v1443
    %v1446 = vadd.f32 %v1441, %v1444
    %s1447 = scalar_lea.vmem [#allocation4], 112
    %1448 = vst [vmem:[%s1447] sm:$0xff] %v1445
    %1449 = vst [vmem:[%s1447 + $0x8] sm:$0xff] %v1446
    %v1450 = vld [vmem:[#allocation4] sm:$0xff]
    %v1451 = vld [vmem:[#allocation4 + $0x8] sm:$0xff]
    %v1452 = vld [vmem:[#allocation4 + $0x10] sm:$0xff]
    %v1453 = vld [vmem:[#allocation4 + $0x18] sm:$0xff]
    %v1454 = vld [vmem:[#allocation4 + $0x20] sm:$0xff]
    %v1455 = vld [vmem:[#allocation4 + $0x28] sm:$0xff]
    %v1456 = vld [vmem:[#allocation4 + $0x30] sm:$0xff]
    %v1457 = vld [vmem:[#allocation4 + $0x38] sm:$0xff]
    %v1458 = vld [vmem:[#allocation4 + $0x40] sm:$0xff]
    %v1459 = vld [vmem:[#allocation4 + $0x48] sm:$0xff]
    %v1460 = vld [vmem:[#allocation4 + $0x50] sm:$0xff]
    %v1461 = vld [vmem:[#allocation4 + $0x58] sm:$0xff]
    %v1462 = vld [vmem:[#allocation4 + $0x60] sm:$0xff]
    %v1463 = vld [vmem:[#allocation4 + $0x68] sm:$0xff]
    %v1464 = vld [vmem:[#allocation4 + $0x70] sm:$0xff]
    %v1465 = vld [vmem:[#allocation4 + $0x78] sm:$0xff]
    %v1466 = vlaneseq
    %v1467 = vshrl.u32 %v1466, 7
    %v1468 = vsub.s32 0, %v1467
    %v1469 = vrot.slane %v888, %v1468
    %1471 = vbcast.lane.b32.xlu0 %v1469, 256
    %v1472 = vpop.permute.xlu0 %1471
    %s1474 = sor.u32 256, 8
    %1475 = vbcast.lane.b32.xlu0 %v1469, %s1474
    %v1476 = vpop.permute.xlu0 %1475
    %v1477 = vlaneseq
    %v1478 = vshrl.u32 %v1477, 7
    %v1479 = vsub.s32 1, %v1478
    %v1480 = vrot.slane %v888, %v1479
    %1482 = vbcast.lane.b32.xlu0 %v1480, 256
    %v1483 = vpop.permute.xlu0 %1482
    %s1485 = sor.u32 256, 8
    %1486 = vbcast.lane.b32.xlu0 %v1480, %s1485
    %v1487 = vpop.permute.xlu0 %1486
    %v1488 = vlaneseq
    %v1489 = vshrl.u32 %v1488, 7
    %v1490 = vsub.s32 2, %v1489
    %v1491 = vrot.slane %v888, %v1490
    %1493 = vbcast.lane.b32.xlu0 %v1491, 256
    %v1494 = vpop.permute.xlu0 %1493
    %s1496 = sor.u32 256, 8
    %1497 = vbcast.lane.b32.xlu0 %v1491, %s1496
    %v1498 = vpop.permute.xlu0 %1497
    %v1499 = vlaneseq
    %v1500 = vshrl.u32 %v1499, 7
    %v1501 = vsub.s32 3, %v1500
    %v1502 = vrot.slane %v888, %v1501
    %1504 = vbcast.lane.b32.xlu0 %v1502, 256
    %v1505 = vpop.permute.xlu0 %1504
    %s1507 = sor.u32 256, 8
    %1508 = vbcast.lane.b32.xlu0 %v1502, %s1507
    %v1509 = vpop.permute.xlu0 %1508
    %v1510 = vlaneseq
    %v1511 = vshrl.u32 %v1510, 7
    %v1512 = vsub.s32 4, %v1511
    %v1513 = vrot.slane %v888, %v1512
    %1515 = vbcast.lane.b32.xlu0 %v1513, 256
    %v1516 = vpop.permute.xlu0 %1515
    %s1518 = sor.u32 256, 8
    %1519 = vbcast.lane.b32.xlu0 %v1513, %s1518
    %v1520 = vpop.permute.xlu0 %1519
    %v1521 = vlaneseq
    %v1522 = vshrl.u32 %v1521, 7
    %v1523 = vsub.s32 5, %v1522
    %v1524 = vrot.slane %v888, %v1523
    %1526 = vbcast.lane.b32.xlu0 %v1524, 256
    %v1527 = vpop.permute.xlu0 %1526
    %s1529 = sor.u32 256, 8
    %1530 = vbcast.lane.b32.xlu0 %v1524, %s1529
    %v1531 = vpop.permute.xlu0 %1530
    %v1532 = vlaneseq
    %v1533 = vshrl.u32 %v1532, 7
    %v1534 = vsub.s32 6, %v1533
    %v1535 = vrot.slane %v888, %v1534
    %1537 = vbcast.lane.b32.xlu0 %v1535, 256
    %v1538 = vpop.permute.xlu0 %1537
    %s1540 = sor.u32 256, 8
    %1541 = vbcast.lane.b32.xlu0 %v1535, %s1540
    %v1542 = vpop.permute.xlu0 %1541
    %v1543 = vlaneseq
    %v1544 = vshrl.u32 %v1543, 7
    %v1545 = vsub.s32 7, %v1544
    %v1546 = vrot.slane %v888, %v1545
    %1548 = vbcast.lane.b32.xlu0 %v1546, 256
    %v1549 = vpop.permute.xlu0 %1548
    %s1551 = sor.u32 256, 8
    %1552 = vbcast.lane.b32.xlu0 %v1546, %s1551
    %v1553 = vpop.permute.xlu0 %1552
    %s1555 = sor.u32 256, 16
    %1556 = vbcast.lane.b32.xlu0 %v1469, %s1555
    %v1557 = vpop.permute.xlu0 %1556
    %s1559 = sor.u32 256, 24
    %1560 = vbcast.lane.b32.xlu0 %v1469, %s1559
    %v1561 = vpop.permute.xlu0 %1560
    %s1563 = sor.u32 256, 16
    %1564 = vbcast.lane.b32.xlu0 %v1480, %s1563
    %v1565 = vpop.permute.xlu0 %1564
    %s1567 = sor.u32 256, 24
    %1568 = vbcast.lane.b32.xlu0 %v1480, %s1567
    %v1569 = vpop.permute.xlu0 %1568
    %s1571 = sor.u32 256, 16
    %1572 = vbcast.lane.b32.xlu0 %v1491, %s1571
    %v1573 = vpop.permute.xlu0 %1572
    %s1575 = sor.u32 256, 24
    %1576 = vbcast.lane.b32.xlu0 %v1491, %s1575
    %v1577 = vpop.permute.xlu0 %1576
    %s1579 = sor.u32 256, 16
    %1580 = vbcast.lane.b32.xlu0 %v1502, %s1579
    %v1581 = vpop.permute.xlu0 %1580
    %s1583 = sor.u32 256, 24
    %1584 = vbcast.lane.b32.xlu0 %v1502, %s1583
    %v1585 = vpop.permute.xlu0 %1584
    %s1587 = sor.u32 256, 16
    %1588 = vbcast.lane.b32.xlu0 %v1513, %s1587
    %v1589 = vpop.permute.xlu0 %1588
    %s1591 = sor.u32 256, 24
    %1592 = vbcast.lane.b32.xlu0 %v1513, %s1591
    %v1593 = vpop.permute.xlu0 %1592
    %s1595 = sor.u32 256, 16
    %1596 = vbcast.lane.b32.xlu0 %v1524, %s1595
    %v1597 = vpop.permute.xlu0 %1596
    %s1599 = sor.u32 256, 24
    %1600 = vbcast.lane.b32.xlu0 %v1524, %s1599
    %v1601 = vpop.permute.xlu0 %1600
    %s1603 = sor.u32 256, 16
    %1604 = vbcast.lane.b32.xlu0 %v1535, %s1603
    %v1605 = vpop.permute.xlu0 %1604
    %s1607 = sor.u32 256, 24
    %1608 = vbcast.lane.b32.xlu0 %v1535, %s1607
    %v1609 = vpop.permute.xlu0 %1608
    %s1611 = sor.u32 256, 16
    %1612 = vbcast.lane.b32.xlu0 %v1546, %s1611
    %v1613 = vpop.permute.xlu0 %1612
    %s1615 = sor.u32 256, 24
    %1616 = vbcast.lane.b32.xlu0 %v1546, %s1615
    %v1617 = vpop.permute.xlu0 %1616
    %v1618 = vsel %vm365, %v1472, %v1557
    %v1619 = vsel %vm365, %v1476, %v1561
    %v1620 = vsel %vm365, %v1483, %v1565
    %v1621 = vsel %vm365, %v1487, %v1569
    %v1622 = vsel %vm365, %v1494, %v1573
    %v1623 = vsel %vm365, %v1498, %v1577
    %v1624 = vsel %vm365, %v1505, %v1581
    %v1625 = vsel %vm365, %v1509, %v1585
    %v1626 = vsel %vm365, %v1516, %v1589
    %v1627 = vsel %vm365, %v1520, %v1593
    %v1628 = vsel %vm365, %v1527, %v1597
    %v1629 = vsel %vm365, %v1531, %v1601
    %v1630 = vsel %vm365, %v1538, %v1605
    %v1631 = vsel %vm365, %v1542, %v1609
    %v1632 = vsel %vm365, %v1549, %v1613
    %v1633 = vsel %vm365, %v1553, %v1617
    %v1634 = vmul.f32 %v1450, %v1618
    %v1635 = vmul.f32 %v1451, %v1619
    %v1636 = vmul.f32 %v1452, %v1620
    %v1637 = vmul.f32 %v1453, %v1621
    %v1638 = vmul.f32 %v1454, %v1622
    %v1639 = vmul.f32 %v1455, %v1623
    %v1640 = vmul.f32 %v1456, %v1624
    %v1641 = vmul.f32 %v1457, %v1625
    %v1642 = vmul.f32 %v1458, %v1626
    %v1643 = vmul.f32 %v1459, %v1627
    %v1644 = vmul.f32 %v1460, %v1628
    %v1645 = vmul.f32 %v1461, %v1629
    %v1646 = vmul.f32 %v1462, %v1630
    %v1647 = vmul.f32 %v1463, %v1631
    %v1648 = vmul.f32 %v1464, %v1632
    %v1649 = vmul.f32 %v1465, %v1633
    %v1650 = vadd.f32 %v1634, %v1635
    %v1651 = vrot.slane %v1650, 4
    %v1652 = vadd.f32 %v1650, %v1651
    %v1653 = vrot.slane %v1652, 2
    %v1654 = vadd.f32 %v1652, %v1653
    %v1655 = vrot.slane %v1654, 1
    %v1656 = vadd.f32 %v1654, %v1655
    %v1657 = vadd.f32 %v1636, %v1637
    %v1658 = vrot.slane %v1657, 4
    %v1659 = vadd.f32 %v1657, %v1658
    %v1660 = vrot.slane %v1659, 2
    %v1661 = vadd.f32 %v1659, %v1660
    %v1662 = vrot.slane %v1661, 1
    %v1663 = vadd.f32 %v1661, %v1662
    %v1664 = vadd.f32 %v1638, %v1639
    %v1665 = vrot.slane %v1664, 4
    %v1666 = vadd.f32 %v1664, %v1665
    %v1667 = vrot.slane %v1666, 2
    %v1668 = vadd.f32 %v1666, %v1667
    %v1669 = vrot.slane %v1668, 1
    %v1670 = vadd.f32 %v1668, %v1669
    %v1671 = vadd.f32 %v1640, %v1641
    %v1672 = vrot.slane %v1671, 4
    %v1673 = vadd.f32 %v1671, %v1672
    %v1674 = vrot.slane %v1673, 2
    %v1675 = vadd.f32 %v1673, %v1674
    %v1676 = vrot.slane %v1675, 1
    %v1677 = vadd.f32 %v1675, %v1676
    %v1678 = vadd.f32 %v1642, %v1643
    %v1679 = vrot.slane %v1678, 4
    %v1680 = vadd.f32 %v1678, %v1679
    %v1681 = vrot.slane %v1680, 2
    %v1682 = vadd.f32 %v1680, %v1681
    %v1683 = vrot.slane %v1682, 1
    %v1684 = vadd.f32 %v1682, %v1683
    %v1685 = vadd.f32 %v1644, %v1645
    %v1686 = vrot.slane %v1685, 4
    %v1687 = vadd.f32 %v1685, %v1686
    %v1688 = vrot.slane %v1687, 2
    %v1689 = vadd.f32 %v1687, %v1688
    %v1690 = vrot.slane %v1689, 1
    %v1691 = vadd.f32 %v1689, %v1690
    %v1692 = vadd.f32 %v1646, %v1647
    %v1693 = vrot.slane %v1692, 4
    %v1694 = vadd.f32 %v1692, %v1693
    %v1695 = vrot.slane %v1694, 2
    %v1696 = vadd.f32 %v1694, %v1695
    %v1697 = vrot.slane %v1696, 1
    %v1698 = vadd.f32 %v1696, %v1697
    %v1699 = vadd.f32 %v1648, %v1649
    %v1700 = vrot.slane %v1699, 4
    %v1701 = vadd.f32 %v1699, %v1700
    %v1702 = vrot.slane %v1701, 2
    %v1703 = vadd.f32 %v1701, %v1702
    %v1704 = vrot.slane %v1703, 1
    %v1705 = vadd.f32 %v1703, %v1704
    %v1706 = vld [vmem:[%s12] sm:$0x1]
    %v1708 = vlaneseq
    %v1709 = vshrl.u32 %v1708, 7
    %v1710 = vsub.s32 0, %v1709
    %v1711 = vrot.slane %v1706, %v1710
    %v1713 = vmul.f32 %v625, %v1711
    %v1715 = vrot.slane %v1713, 1
    %v1716 = vrot.slane %v1713, 2
    %v1717 = vrot.slane %v1713, 3
    %v1718 = vrot.slane %v1713, 4
    %v1719 = vrot.slane %v1713, 5
    %v1720 = vrot.slane %v1713, 6
    %v1721 = vrot.slane %v1713, 7
    %v1730 = vadd.f32 %v1656, %v1713
    %v1731 = vadd.f32 %v1663, %v1715
    %v1732 = vadd.f32 %v1670, %v1716
    %v1733 = vadd.f32 %v1677, %v1717
    %v1734 = vadd.f32 %v1684, %v1718
    %v1735 = vadd.f32 %v1691, %v1719
    %v1736 = vadd.f32 %v1698, %v1720
    %v1737 = vadd.f32 %v1705, %v1721
    %v1746 = vrot.slane %v1731, 7
    %vm1747 = vcmask 1041409
    %v1748 = vsel %vm1747, %v1746, %v1730
    %v1749 = vrot.slane %v1732, 6
    %vm1750 = vcmask 1042434
    %v1751 = vsel %vm1750, %v1749, %v1748
    %v1752 = vrot.slane %v1733, 5
    %vm1753 = vcmask 1043459
    %v1754 = vsel %vm1753, %v1752, %v1751
    %v1755 = vrot.slane %v1734, 4
    %vm1756 = vcmask 1044484
    %v1757 = vsel %vm1756, %v1755, %v1754
    %v1758 = vrot.slane %v1735, 3
    %vm1759 = vcmask 1045509
    %v1760 = vsel %vm1759, %v1758, %v1757
    %v1761 = vrot.slane %v1736, 2
    %vm1762 = vcmask 1046534
    %v1763 = vsel %vm1762, %v1761, %v1760
    %v1764 = vrot.slane %v1737, 1
    %vm1765 = vcmask 1047559
    %v1766 = vsel %vm1765, %v1764, %v1763
    %1768 = vrot.lane.b32.xlu0 %v1766, 64
    %v1769 = vpop.permute.xlu0 %1768
    %v1771 = vsub.f32 0.0, %v353
    %v1772 = vsub.f32 0.0, %v358
    %v1773 = vmul.f32 %v1771, 1.442695
    %v1774 = vpow.pop %v1773
    %v1775 = vmul.f32 %v1772, 1.442695
    %v1776 = vpow.pop %v1775
    %v1777 = vadd.f32 %v1774, 1.0
    %v1778 = vadd.f32 %v1776, 1.0
    %v1779 = vrcp.pop %v1777
    %v1780 = vmul.f32 1.0, %v1779
    %v1781 = vrcp.pop %v1778
    %v1782 = vmul.f32 1.0, %v1781
    %v1783 = vmul.f32 %v353, %v1780
    %v1784 = vmul.f32 %v358, %v1782
    %v1785 = vmul.f32 %v1766, %v1783
    %v1786 = vmul.f32 %v1769, %v1784
    %v1787 = vld [vmem:[%s13] sm:$0xff]
    %v1788 = vld [vmem:[%s13 + $0x8] sm:$0xff]
    %v1789 = vld [vmem:[%s13 + $0x10] sm:$0xff]
    %v1790 = vld [vmem:[%s13 + $0x18] sm:$0xff]
    %v1791 = vld [vmem:[%s13 + $0x20] sm:$0xff]
    %v1792 = vld [vmem:[%s13 + $0x28] sm:$0xff]
    %v1793 = vld [vmem:[%s13 + $0x30] sm:$0xff]
    %v1794 = vld [vmem:[%s13 + $0x38] sm:$0xff]
    %v1796 = vsel %vm365, %v1785, 0
    %v1799 = vsel %vm365, %v1786, 0
    %1801 = vmatprep.subr.mxu0 0.0
    %1802 = vmatpush1.msra.mxu0 %v1787
    %1803 = vmatprep.subr.mxu0 0.0
    %1804 = vmatpush1.msra.mxu0 %v1788
    %1805 = vmatprep.subr.mxu0 0.0
    %1806 = vmatpush1.msra.mxu0 %v1789
    %1807 = vmatprep.subr.mxu0 0.0
    %1808 = vmatpush1.msra.mxu0 %v1790
    %1809 = vmatprep.subr.mxu0 0.0
    %1810 = vmatpush1.msra.mxu0 %v1791
    %1811 = vmatprep.subr.mxu0 0.0
    %1812 = vmatpush1.msra.mxu0 %v1792
    %1813 = vmatprep.subr.mxu0 0.0
    %1814 = vmatpush1.msra.mxu0 %v1793
    %1815 = vmatprep.subr.mxu0 0.0
    %1816 = vmatpush1.msra.mxu0 %v1794
    %1817 = vmatprep.subr.mxu0 0.0
    %1818 = vmatpush1.msra.mxu0 0.0
    %1819 = vmatprep.subr.mxu0 0.0
    %1820 = vmatpush1.msra.mxu0 0.0
    %1821 = vmatprep.subr.mxu0 0.0
    %1822 = vmatpush1.msra.mxu0 0.0
    %1823 = vmatprep.subr.mxu0 0.0
    %1824 = vmatpush1.msra.mxu0 0.0
    %1825 = vmatprep.subr.mxu0 0.0
    %1826 = vmatpush1.msra.mxu0 0.0
    %1827 = vmatprep.subr.mxu0 0.0
    %1828 = vmatpush1.msra.mxu0 0.0
    %1829 = vmatprep.subr.mxu0 0.0
    %1830 = vmatpush1.msra.mxu0 0.0
    %1831 = vmatprep.subr.mxu0 0.0
    %1832 = vmatpush1.msra.mxu0 0.0
    %1833 = vmatprep.subr.mxu0 0.0
    %1834 = vmatpush1.msra.mxu0 0.0
    %1835 = vmatprep.subr.mxu0 0.0
    %1836 = vmatpush1.msra.mxu0 0.0
    %1837 = vmatprep.subr.mxu0 0.0
    %1838 = vmatpush1.msra.mxu0 0.0
    %1839 = vmatprep.subr.mxu0 0.0
    %1840 = vmatpush1.msra.mxu0 0.0
    %1841 = vmatprep.subr.mxu0 0.0
    %1842 = vmatpush1.msra.mxu0 0.0
    %1843 = vmatprep.subr.mxu0 0.0
    %1844 = vmatpush1.msra.mxu0 0.0
    %1845 = vmatprep.subr.mxu0 0.0
    %1846 = vmatpush1.msra.mxu0 0.0
    %1847 = vmatprep.subr.mxu0 0.0
    %1848 = vmatpush1.msra.mxu0 0.0
    %1849 = vmatprep.subr.mxu0 0.0
    %1850 = vmatpush1.msra.mxu0 0.0
    %1851 = vmatprep.subr.mxu0 0.0
    %1852 = vmatpush1.msra.mxu0 0.0
    %1853 = vmatprep.subr.mxu0 0.0
    %1854 = vmatpush1.msra.mxu0 0.0
    %1855 = vmatprep.subr.mxu0 0.0
    %1856 = vmatpush1.msra.mxu0 0.0
    %1857 = vmatprep.subr.mxu0 0.0
    %1858 = vmatpush1.msra.mxu0 0.0
    %1859 = vmatprep.subr.mxu0 0.0
    %1860 = vmatpush1.msra.mxu0 0.0
    %1861 = vmatprep.subr.mxu0 0.0
    %1862 = vmatpush1.msra.mxu0 0.0
    %1863 = vmatprep.subr.mxu0 0.0
    %1864 = vmatpush1.msra.mxu0 0.0
    %1865 = vmatprep.mubr.f32.mxu0 0.0
    %1866 = vmatmul.mubr.f32.gmra.mrb[0].mxu0 %v1796
    %v1867 = vpop.f32.mrb[0].mxu0
    %v1868 = vadd.f32 0.0, %v1867
    %v1869 = vpop.f32.mrb[0].mxu0
    %1870 = vmatprep.mubr.f32.mxu0 0.0
    %1871 = vmatmul.mubr.f32.gmra.mrb[0].mxu0 %v1799
    %v1872 = vpop.f32.mrb[0].mxu0
    %v1873 = vadd.f32 0.0, %v1872
    %v1874 = vpop.f32.mrb[0].mxu0
    %1875 = vdwg.mxu0
    %v1876 = vadd.f32 %v150, %v1868
    %v1877 = vadd.f32 %v155, %v1873
    %s1878 = scalar_lea.vmem %s2, 1
    %v1879 = vld [vmem:[%s1878] sm:$0x1]
    %v1880 = vmul.f32 %v1876, %v1876
    %v1881 = vmul.f32 %v1877, %v1877
    %v1882 = vsel %vm173, %v1880, 0.0
    %1883 = vadd.xlane.f32.xlu0 %v1882
    %v1884 = vpop.xlane.xlu0 %1883
    %v1885 = vsel %vm173, %v1881, 0.0
    %1886 = vadd.xlane.f32.xlu0 %v1885
    %v1887 = vpop.xlane.xlu0 %1886
    %v1888 = vmul.f32 %v1884, %v180
    %v1889 = vmul.f32 %v1887, %v180
    %v1890 = vadd.f32 %v1888, 1e-05
    %v1891 = vadd.f32 %v1889, 1e-05
    %v1892 = vrsqrt.pop %v1890
    %v1893 = vrsqrt.pop %v1891
    %v1894 = vmul.f32 %v1876, %v1892
    %v1895 = vmul.f32 %v1877, %v1893
    %v1897 = vlaneseq
    %v1898 = vshrl.u32 %v1897, 7
    %v1899 = vsub.s32 0, %v1898
    %v1900 = vrot.slane %v1879, %v1899
    %v1902 = vmul.f32 %v1894, %v1900
    %v1903 = vmul.f32 %v1895, %v1900
    %s1904 = scalar_lea.vmem %s3, 32
    %v1905 = vld [vmem:[%s1904] sm:$0xff]
    %v1906 = vld [vmem:[%s1904 + $0x8] sm:$0xff]
    %v1907 = vld [vmem:[%s1904 + $0x10] sm:$0xff]
    %v1908 = vld [vmem:[%s1904 + $0x18] sm:$0xff]
    %v1910 = vsel %vm173, %v1902, 0
    %v1913 = vsel %vm173, %v1903, 0
    %1915 = vmatprep.subr.mxu0 0.0
    %1916 = vmatpush1.msra.mxu0 %v1905
    %1917 = vmatprep.subr.mxu0 0.0
    %1918 = vmatpush1.msra.mxu0 %v1906
    %1919 = vmatprep.subr.mxu0 0.0
    %1920 = vmatpush1.msra.mxu0 %v1907
    %1921 = vmatprep.subr.mxu0 0.0
    %1922 = vmatpush1.msra.mxu0 %v1908
    %1923 = vmatprep.subr.mxu0 0.0
    %1924 = vmatpush1.msra.mxu0 0.0
    %1925 = vmatprep.subr.mxu0 0.0
    %1926 = vmatpush1.msra.mxu0 0.0
    %1927 = vmatprep.subr.mxu0 0.0
    %1928 = vmatpush1.msra.mxu0 0.0
    %1929 = vmatprep.subr.mxu0 0.0
    %1930 = vmatpush1.msra.mxu0 0.0
    %1931 = vmatprep.subr.mxu0 0.0
    %1932 = vmatpush1.msra.mxu0 0.0
    %1933 = vmatprep.subr.mxu0 0.0
    %1934 = vmatpush1.msra.mxu0 0.0
    %1935 = vmatprep.subr.mxu0 0.0
    %1936 = vmatpush1.msra.mxu0 0.0
    %1937 = vmatprep.subr.mxu0 0.0
    %1938 = vmatpush1.msra.mxu0 0.0
    %1939 = vmatprep.subr.mxu0 0.0
    %1940 = vmatpush1.msra.mxu0 0.0
    %1941 = vmatprep.subr.mxu0 0.0
    %1942 = vmatpush1.msra.mxu0 0.0
    %1943 = vmatprep.subr.mxu0 0.0
    %1944 = vmatpush1.msra.mxu0 0.0
    %1945 = vmatprep.subr.mxu0 0.0
    %1946 = vmatpush1.msra.mxu0 0.0
    %1947 = vmatprep.subr.mxu0 0.0
    %1948 = vmatpush1.msra.mxu0 0.0
    %1949 = vmatprep.subr.mxu0 0.0
    %1950 = vmatpush1.msra.mxu0 0.0
    %1951 = vmatprep.subr.mxu0 0.0
    %1952 = vmatpush1.msra.mxu0 0.0
    %1953 = vmatprep.subr.mxu0 0.0
    %1954 = vmatpush1.msra.mxu0 0.0
    %1955 = vmatprep.subr.mxu0 0.0
    %1956 = vmatpush1.msra.mxu0 0.0
    %1957 = vmatprep.subr.mxu0 0.0
    %1958 = vmatpush1.msra.mxu0 0.0
    %1959 = vmatprep.subr.mxu0 0.0
    %1960 = vmatpush1.msra.mxu0 0.0
    %1961 = vmatprep.subr.mxu0 0.0
    %1962 = vmatpush1.msra.mxu0 0.0
    %1963 = vmatprep.subr.mxu0 0.0
    %1964 = vmatpush1.msra.mxu0 0.0
    %1965 = vmatprep.subr.mxu0 0.0
    %1966 = vmatpush1.msra.mxu0 0.0
    %1967 = vmatprep.subr.mxu0 0.0
    %1968 = vmatpush1.msra.mxu0 0.0
    %1969 = vmatprep.subr.mxu0 0.0
    %1970 = vmatpush1.msra.mxu0 0.0
    %1971 = vmatprep.subr.mxu0 0.0
    %1972 = vmatpush1.msra.mxu0 0.0
    %1973 = vmatprep.subr.mxu0 0.0
    %1974 = vmatpush1.msra.mxu0 0.0
    %1975 = vmatprep.subr.mxu0 0.0
    %1976 = vmatpush1.msra.mxu0 0.0
    %1977 = vmatprep.subr.mxu0 0.0
    %1978 = vmatpush1.msra.mxu0 0.0
    %1979 = vmatprep.mubr.f32.mxu0 0.0
    %1980 = vmatmul.mubr.f32.gmra.mrb[0].mxu0 %v1910
    %v1981 = vpop.f32.mrb[0].mxu0
    %v1982 = vadd.f32 0.0, %v1981
    %v1983 = vpop.f32.mrb[0].mxu0
    %1984 = vmatprep.mubr.f32.mxu0 0.0
    %1985 = vmatmul.mubr.f32.gmra.mrb[0].mxu0 %v1913
    %v1986 = vpop.f32.mrb[0].mxu0
    %v1987 = vadd.f32 0.0, %v1986
    %v1988 = vpop.f32.mrb[0].mxu0
    %1989 = vdwg.mxu0
    %s1990 = scalar_lea.vmem %s4, 32
    %v1991 = vld [vmem:[%s1990] sm:$0xff]
    %v1992 = vld [vmem:[%s1990 + $0x8] sm:$0xff]
    %v1993 = vld [vmem:[%s1990 + $0x10] sm:$0xff]
    %v1994 = vld [vmem:[%s1990 + $0x18] sm:$0xff]
    %1995 = vmatprep.subr.mxu0 0.0
    %1996 = vmatpush1.msra.mxu0 %v1991
    %1997 = vmatprep.subr.mxu0 0.0
    %1998 = vmatpush1.msra.mxu0 %v1992
    %1999 = vmatprep.subr.mxu0 0.0
    %2000 = vmatpush1.msra.mxu0 %v1993
    %2001 = vmatprep.subr.mxu0 0.0
    %2002 = vmatpush1.msra.mxu0 %v1994
    %2003 = vmatprep.subr.mxu0 0.0
    %2004 = vmatpush1.msra.mxu0 0.0
    %2005 = vmatprep.subr.mxu0 0.0
    %2006 = vmatpush1.msra.mxu0 0.0
    %2007 = vmatprep.subr.mxu0 0.0
    %2008 = vmatpush1.msra.mxu0 0.0
    %2009 = vmatprep.subr.mxu0 0.0
    %2010 = vmatpush1.msra.mxu0 0.0
    %2011 = vmatprep.subr.mxu0 0.0
    %2012 = vmatpush1.msra.mxu0 0.0
    %2013 = vmatprep.subr.mxu0 0.0
    %2014 = vmatpush1.msra.mxu0 0.0
    %2015 = vmatprep.subr.mxu0 0.0
    %2016 = vmatpush1.msra.mxu0 0.0
    %2017 = vmatprep.subr.mxu0 0.0
    %2018 = vmatpush1.msra.mxu0 0.0
    %2019 = vmatprep.subr.mxu0 0.0
    %2020 = vmatpush1.msra.mxu0 0.0
    %2021 = vmatprep.subr.mxu0 0.0
    %2022 = vmatpush1.msra.mxu0 0.0
    %2023 = vmatprep.subr.mxu0 0.0
    %2024 = vmatpush1.msra.mxu0 0.0
    %2025 = vmatprep.subr.mxu0 0.0
    %2026 = vmatpush1.msra.mxu0 0.0
    %2027 = vmatprep.subr.mxu0 0.0
    %2028 = vmatpush1.msra.mxu0 0.0
    %2029 = vmatprep.subr.mxu0 0.0
    %2030 = vmatpush1.msra.mxu0 0.0
    %2031 = vmatprep.subr.mxu0 0.0
    %2032 = vmatpush1.msra.mxu0 0.0
    %2033 = vmatprep.subr.mxu0 0.0
    %2034 = vmatpush1.msra.mxu0 0.0
    %2035 = vmatprep.subr.mxu0 0.0
    %2036 = vmatpush1.msra.mxu0 0.0
    %2037 = vmatprep.subr.mxu0 0.0
    %2038 = vmatpush1.msra.mxu0 0.0
    %2039 = vmatprep.subr.mxu0 0.0
    %2040 = vmatpush1.msra.mxu0 0.0
    %2041 = vmatprep.subr.mxu0 0.0
    %2042 = vmatpush1.msra.mxu0 0.0
    %2043 = vmatprep.subr.mxu0 0.0
    %2044 = vmatpush1.msra.mxu0 0.0
    %2045 = vmatprep.subr.mxu0 0.0
    %2046 = vmatpush1.msra.mxu0 0.0
    %2047 = vmatprep.subr.mxu0 0.0
    %2048 = vmatpush1.msra.mxu0 0.0
    %2049 = vmatprep.subr.mxu0 0.0
    %2050 = vmatpush1.msra.mxu0 0.0
    %2051 = vmatprep.subr.mxu0 0.0
    %2052 = vmatpush1.msra.mxu0 0.0
    %2053 = vmatprep.subr.mxu0 0.0
    %2054 = vmatpush1.msra.mxu0 0.0
    %2055 = vmatprep.subr.mxu0 0.0
    %2056 = vmatpush1.msra.mxu0 0.0
    %2057 = vmatprep.subr.mxu0 0.0
    %2058 = vmatpush1.msra.mxu0 0.0
    %2059 = vmatprep.mubr.f32.mxu0 0.0
    %2060 = vmatmul.mubr.f32.gmra.mrb[0].mxu0 %v1910
    %v2061 = vpop.f32.mrb[0].mxu0
    %v2062 = vadd.f32 0.0, %v2061
    %v2063 = vpop.f32.mrb[0].mxu0
    %2064 = vmatprep.mubr.f32.mxu0 0.0
    %2065 = vmatmul.mubr.f32.gmra.mrb[0].mxu0 %v1913
    %v2066 = vpop.f32.mrb[0].mxu0
    %v2067 = vadd.f32 0.0, %v2066
    %v2068 = vpop.f32.mrb[0].mxu0
    %2069 = vdwg.mxu0
    %2071 = vrot.lane.b32.xlu0 %v1987, 64
    %v2072 = vpop.permute.xlu0 %2071
    %v2074 = vsel %vm365, %v1982, %v2072
    %s2075 = scalar_lea.vmem %s5, 4
    %v2076 = vld [vmem:[%s2075] sm:$0xf]
    %v2077 = vlaneseq
    %v2078 = vshrl.u32 %v2077, 7
    %v2079 = vsub.s32 3, %v2078
    %v2080 = vrot.slane %v2076, %v2079
    %v2081 = vmul.f32 %v2074, %v2080
    %2082 = vmatprep.subr.mxu0 0.0
    %2083 = vmatpush1.msra.mxu0 %v2074
    %2084 = vmatprep.subr.mxu0 0.0
    %2085 = vmatpush1.msra.mxu0 0.0
    %2086 = vmatprep.subr.mxu0 0.0
    %2087 = vmatpush1.msra.mxu0 0.0
    %2088 = vmatprep.subr.mxu0 0.0
    %2089 = vmatpush1.msra.mxu0 0.0
    %2090 = vmatprep.subr.mxu0 0.0
    %2091 = vmatpush1.msra.mxu0 0.0
    %2092 = vmatprep.subr.mxu0 0.0
    %2093 = vmatpush1.msra.mxu0 0.0
    %2094 = vmatprep.subr.mxu0 0.0
    %2095 = vmatpush1.msra.mxu0 0.0
    %2096 = vmatprep.subr.mxu0 0.0
    %2097 = vmatpush1.msra.mxu0 0.0
    %2098 = vmatprep.subr.mxu0 0.0
    %2099 = vmatpush1.msra.mxu0 0.0
    %2100 = vmatprep.subr.mxu0 0.0
    %2101 = vmatpush1.msra.mxu0 0.0
    %2102 = vmatprep.subr.mxu0 0.0
    %2103 = vmatpush1.msra.mxu0 0.0
    %2104 = vmatprep.subr.mxu0 0.0
    %2105 = vmatpush1.msra.mxu0 0.0
    %2106 = vmatprep.subr.mxu0 0.0
    %2107 = vmatpush1.msra.mxu0 0.0
    %2108 = vmatprep.subr.mxu0 0.0
    %2109 = vmatpush1.msra.mxu0 0.0
    %2110 = vmatprep.subr.mxu0 0.0
    %2111 = vmatpush1.msra.mxu0 0.0
    %2112 = vmatprep.subr.mxu0 0.0
    %2113 = vmatpush1.msra.mxu0 0.0
    %2114 = vmatprep.subr.mxu0 0.0
    %2115 = vmatpush1.msra.mxu0 0.0
    %2116 = vmatprep.subr.mxu0 0.0
    %2117 = vmatpush1.msra.mxu0 0.0
    %2118 = vmatprep.subr.mxu0 0.0
    %2119 = vmatpush1.msra.mxu0 0.0
    %2120 = vmatprep.subr.mxu0 0.0
    %2121 = vmatpush1.msra.mxu0 0.0
    %2122 = vmatprep.subr.mxu0 0.0
    %2123 = vmatpush1.msra.mxu0 0.0
    %2124 = vmatprep.subr.mxu0 0.0
    %2125 = vmatpush1.msra.mxu0 0.0
    %2126 = vmatprep.subr.mxu0 0.0
    %2127 = vmatpush1.msra.mxu0 0.0
    %2128 = vmatprep.subr.mxu0 0.0
    %2129 = vmatpush1.msra.mxu0 0.0
    %2130 = vmatprep.subr.mxu0 0.0
    %2131 = vmatpush1.msra.mxu0 0.0
    %2132 = vmatprep.subr.mxu0 0.0
    %2133 = vmatpush1.msra.mxu0 0.0
    %2134 = vmatprep.subr.mxu0 0.0
    %2135 = vmatpush1.msra.mxu0 0.0
    %2136 = vmatprep.subr.mxu0 0.0
    %2137 = vmatpush1.msra.mxu0 0.0
    %2138 = vmatprep.subr.mxu0 0.0
    %2139 = vmatpush1.msra.mxu0 0.0
    %2140 = vmatprep.subr.mxu0 0.0
    %2141 = vmatpush1.msra.mxu0 0.0
    %2142 = vmatprep.subr.mxu0 0.0
    %2143 = vmatpush1.msra.mxu0 0.0
    %2144 = vmatprep.subr.mxu0 0.0
    %2145 = vmatpush1.msra.mxu0 0.0
    %2146 = vmatprep.mubr.f32.mxu0 0.0
    %2147 = vmatmul.mubr.f32.gmra.mrb[0].mxu0 %v375
    %v2148 = vpop.f32.mrb[0].mxu0
    %v2149 = vadd.f32 0.0, %v2148
    %v2150 = vpop.f32.mrb[0].mxu0
    %2151 = vdwg.mxu0
    %v2152 = vlaneseq
    %v2153 = vshrl.u32 %v2152, 7
    %v2154 = vsub.s32 0, %v2153
    %v2155 = vrot.slane %v2076, %v2154
    %v2156 = vmul.f32 %v2149, %v2155
    %v2157 = vadd.f32 %v2081, %v2156
    %2158 = vmatprep.subr.mxu0 0.0
    %2159 = vmatpush1.msra.mxu0 %v2074
    %2160 = vmatprep.subr.mxu0 0.0
    %2161 = vmatpush1.msra.mxu0 0.0
    %2162 = vmatprep.subr.mxu0 0.0
    %2163 = vmatpush1.msra.mxu0 0.0
    %2164 = vmatprep.subr.mxu0 0.0
    %2165 = vmatpush1.msra.mxu0 0.0
    %2166 = vmatprep.subr.mxu0 0.0
    %2167 = vmatpush1.msra.mxu0 0.0
    %2168 = vmatprep.subr.mxu0 0.0
    %2169 = vmatpush1.msra.mxu0 0.0
    %2170 = vmatprep.subr.mxu0 0.0
    %2171 = vmatpush1.msra.mxu0 0.0
    %2172 = vmatprep.subr.mxu0 0.0
    %2173 = vmatpush1.msra.mxu0 0.0
    %2174 = vmatprep.subr.mxu0 0.0
    %2175 = vmatpush1.msra.mxu0 0.0
    %2176 = vmatprep.subr.mxu0 0.0
    %2177 = vmatpush1.msra.mxu0 0.0
    %2178 = vmatprep.subr.mxu0 0.0
    %2179 = vmatpush1.msra.mxu0 0.0
    %2180 = vmatprep.subr.mxu0 0.0
    %2181 = vmatpush1.msra.mxu0 0.0
    %2182 = vmatprep.subr.mxu0 0.0
    %2183 = vmatpush1.msra.mxu0 0.0
    %2184 = vmatprep.subr.mxu0 0.0
    %2185 = vmatpush1.msra.mxu0 0.0
    %2186 = vmatprep.subr.mxu0 0.0
    %2187 = vmatpush1.msra.mxu0 0.0
    %2188 = vmatprep.subr.mxu0 0.0
    %2189 = vmatpush1.msra.mxu0 0.0
    %2190 = vmatprep.subr.mxu0 0.0
    %2191 = vmatpush1.msra.mxu0 0.0
    %2192 = vmatprep.subr.mxu0 0.0
    %2193 = vmatpush1.msra.mxu0 0.0
    %2194 = vmatprep.subr.mxu0 0.0
    %2195 = vmatpush1.msra.mxu0 0.0
    %2196 = vmatprep.subr.mxu0 0.0
    %2197 = vmatpush1.msra.mxu0 0.0
    %2198 = vmatprep.subr.mxu0 0.0
    %2199 = vmatpush1.msra.mxu0 0.0
    %2200 = vmatprep.subr.mxu0 0.0
    %2201 = vmatpush1.msra.mxu0 0.0
    %2202 = vmatprep.subr.mxu0 0.0
    %2203 = vmatpush1.msra.mxu0 0.0
    %2204 = vmatprep.subr.mxu0 0.0
    %2205 = vmatpush1.msra.mxu0 0.0
    %2206 = vmatprep.subr.mxu0 0.0
    %2207 = vmatpush1.msra.mxu0 0.0
    %2208 = vmatprep.subr.mxu0 0.0
    %2209 = vmatpush1.msra.mxu0 0.0
    %2210 = vmatprep.subr.mxu0 0.0
    %2211 = vmatpush1.msra.mxu0 0.0
    %2212 = vmatprep.subr.mxu0 0.0
    %2213 = vmatpush1.msra.mxu0 0.0
    %2214 = vmatprep.subr.mxu0 0.0
    %2215 = vmatpush1.msra.mxu0 0.0
    %2216 = vmatprep.subr.mxu0 0.0
    %2217 = vmatpush1.msra.mxu0 0.0
    %2218 = vmatprep.subr.mxu0 0.0
    %2219 = vmatpush1.msra.mxu0 0.0
    %2220 = vmatprep.subr.mxu0 0.0
    %2221 = vmatpush1.msra.mxu0 0.0
    %2222 = vmatprep.mubr.f32.mxu0 0.0
    %2223 = vmatmul.mubr.f32.gmra.mrb[0].mxu0 %v454
    %v2224 = vpop.f32.mrb[0].mxu0
    %v2225 = vadd.f32 0.0, %v2224
    %v2226 = vpop.f32.mrb[0].mxu0
    %2227 = vdwg.mxu0
    %v2228 = vlaneseq
    %v2229 = vshrl.u32 %v2228, 7
    %v2230 = vsub.s32 1, %v2229
    %v2231 = vrot.slane %v2076, %v2230
    %v2232 = vmul.f32 %v2225, %v2231
    %v2233 = vadd.f32 %v2157, %v2232
    %2234 = vmatprep.subr.mxu0 0.0
    %2235 = vmatpush1.msra.mxu0 %v2074
    %2236 = vmatprep.subr.mxu0 0.0
    %2237 = vmatpush1.msra.mxu0 0.0
    %2238 = vmatprep.subr.mxu0 0.0
    %2239 = vmatpush1.msra.mxu0 0.0
    %2240 = vmatprep.subr.mxu0 0.0
    %2241 = vmatpush1.msra.mxu0 0.0
    %2242 = vmatprep.subr.mxu0 0.0
    %2243 = vmatpush1.msra.mxu0 0.0
    %2244 = vmatprep.subr.mxu0 0.0
    %2245 = vmatpush1.msra.mxu0 0.0
    %2246 = vmatprep.subr.mxu0 0.0
    %2247 = vmatpush1.msra.mxu0 0.0
    %2248 = vmatprep.subr.mxu0 0.0
    %2249 = vmatpush1.msra.mxu0 0.0
    %2250 = vmatprep.subr.mxu0 0.0
    %2251 = vmatpush1.msra.mxu0 0.0
    %2252 = vmatprep.subr.mxu0 0.0
    %2253 = vmatpush1.msra.mxu0 0.0
    %2254 = vmatprep.subr.mxu0 0.0
    %2255 = vmatpush1.msra.mxu0 0.0
    %2256 = vmatprep.subr.mxu0 0.0
    %2257 = vmatpush1.msra.mxu0 0.0
    %2258 = vmatprep.subr.mxu0 0.0
    %2259 = vmatpush1.msra.mxu0 0.0
    %2260 = vmatprep.subr.mxu0 0.0
    %2261 = vmatpush1.msra.mxu0 0.0
    %2262 = vmatprep.subr.mxu0 0.0
    %2263 = vmatpush1.msra.mxu0 0.0
    %2264 = vmatprep.subr.mxu0 0.0
    %2265 = vmatpush1.msra.mxu0 0.0
    %2266 = vmatprep.subr.mxu0 0.0
    %2267 = vmatpush1.msra.mxu0 0.0
    %2268 = vmatprep.subr.mxu0 0.0
    %2269 = vmatpush1.msra.mxu0 0.0
    %2270 = vmatprep.subr.mxu0 0.0
    %2271 = vmatpush1.msra.mxu0 0.0
    %2272 = vmatprep.subr.mxu0 0.0
    %2273 = vmatpush1.msra.mxu0 0.0
    %2274 = vmatprep.subr.mxu0 0.0
    %2275 = vmatpush1.msra.mxu0 0.0
    %2276 = vmatprep.subr.mxu0 0.0
    %2277 = vmatpush1.msra.mxu0 0.0
    %2278 = vmatprep.subr.mxu0 0.0
    %2279 = vmatpush1.msra.mxu0 0.0
    %2280 = vmatprep.subr.mxu0 0.0
    %2281 = vmatpush1.msra.mxu0 0.0
    %2282 = vmatprep.subr.mxu0 0.0
    %2283 = vmatpush1.msra.mxu0 0.0
    %2284 = vmatprep.subr.mxu0 0.0
    %2285 = vmatpush1.msra.mxu0 0.0
    %2286 = vmatprep.subr.mxu0 0.0
    %2287 = vmatpush1.msra.mxu0 0.0
    %2288 = vmatprep.subr.mxu0 0.0
    %2289 = vmatpush1.msra.mxu0 0.0
    %2290 = vmatprep.subr.mxu0 0.0
    %2291 = vmatpush1.msra.mxu0 0.0
    %2292 = vmatprep.subr.mxu0 0.0
    %2293 = vmatpush1.msra.mxu0 0.0
    %2294 = vmatprep.subr.mxu0 0.0
    %2295 = vmatpush1.msra.mxu0 0.0
    %2296 = vmatprep.subr.mxu0 0.0
    %2297 = vmatpush1.msra.mxu0 0.0
    %2298 = vmatprep.mubr.f32.mxu0 0.0
    %2299 = vmatmul.mubr.f32.gmra.mrb[0].mxu0 %v533
    %v2300 = vpop.f32.mrb[0].mxu0
    %v2301 = vadd.f32 0.0, %v2300
    %v2302 = vpop.f32.mrb[0].mxu0
    %2303 = vdwg.mxu0
    %v2304 = vlaneseq
    %v2305 = vshrl.u32 %v2304, 7
    %v2306 = vsub.s32 2, %v2305
    %v2307 = vrot.slane %v2076, %v2306
    %v2308 = vmul.f32 %v2301, %v2307
    %v2309 = vadd.f32 %v2233, %v2308
    %s2310 = scalar_lea.vmem %s6, 1
    %v2311 = vld [vmem:[%s2310] sm:$0x1]
    %v2313 = vlaneseq
    %v2314 = vshrl.u32 %v2313, 7
    %v2315 = vsub.s32 0, %v2314
    %v2316 = vrot.slane %v2311, %v2315
    %v2318 = vadd.f32 %v2309, %v2316
    %v2319 = vsub.f32 0.0, %v2318
    %v2320 = vmul.f32 %v2319, 1.442695
    %v2321 = vpow.pop %v2320
    %v2322 = vadd.f32 %v2321, 1.0
    %v2323 = vrcp.pop %v2322
    %v2324 = vmul.f32 1.0, %v2323
    %v2325 = vmul.f32 %v2318, %v2324
    %s2326 = scalar_lea.vmem %s7, 128
    %v2327 = vld [vmem:[%s2326] sm:$0xff]
    %v2328 = vld [vmem:[%s2326 + $0x8] sm:$0xff]
    %v2329 = vld [vmem:[%s2326 + $0x10] sm:$0xff]
    %v2330 = vld [vmem:[%s2326 + $0x18] sm:$0xff]
    %v2331 = vld [vmem:[%s2326 + $0x20] sm:$0xff]
    %v2332 = vld [vmem:[%s2326 + $0x28] sm:$0xff]
    %v2333 = vld [vmem:[%s2326 + $0x30] sm:$0xff]
    %v2334 = vld [vmem:[%s2326 + $0x38] sm:$0xff]
    %v2335 = vld [vmem:[%s2326 + $0x40] sm:$0xff]
    %v2336 = vld [vmem:[%s2326 + $0x48] sm:$0xff]
    %v2337 = vld [vmem:[%s2326 + $0x50] sm:$0xff]
    %v2338 = vld [vmem:[%s2326 + $0x58] sm:$0xff]
    %v2339 = vld [vmem:[%s2326 + $0x60] sm:$0xff]
    %v2340 = vld [vmem:[%s2326 + $0x68] sm:$0xff]
    %v2341 = vld [vmem:[%s2326 + $0x70] sm:$0xff]
    %v2342 = vld [vmem:[%s2326 + $0x78] sm:$0xff]
    %s2343 = scalar_lea.vmem %s8, 1
    %v2344 = vld [vmem:[%s2343] sm:$0x1]
    %v2346 = vlaneseq
    %v2347 = vshrl.u32 %v2346, 7
    %v2348 = vsub.s32 0, %v2347
    %v2349 = vrot.slane %v2344, %v2348
    %2351 = vmatprep.subr.mxu0 0.0
    %2352 = vmatpush1.msra.mxu0 %v2327
    %2353 = vmatprep.subr.mxu0 0.0
    %2354 = vmatpush1.msra.mxu0 %v2328
    %2355 = vmatprep.subr.mxu0 0.0
    %2356 = vmatpush1.msra.mxu0 %v2329
    %2357 = vmatprep.subr.mxu0 0.0
    %2358 = vmatpush1.msra.mxu0 %v2330
    %2359 = vmatprep.subr.mxu0 0.0
    %2360 = vmatpush1.msra.mxu0 %v2331
    %2361 = vmatprep.subr.mxu0 0.0
    %2362 = vmatpush1.msra.mxu0 %v2332
    %2363 = vmatprep.subr.mxu0 0.0
    %2364 = vmatpush1.msra.mxu0 %v2333
    %2365 = vmatprep.subr.mxu0 0.0
    %2366 = vmatpush1.msra.mxu0 %v2334
    %2367 = vmatprep.subr.mxu0 0.0
    %2368 = vmatpush1.msra.mxu0 %v2335
    %2369 = vmatprep.subr.mxu0 0.0
    %2370 = vmatpush1.msra.mxu0 %v2336
    %2371 = vmatprep.subr.mxu0 0.0
    %2372 = vmatpush1.msra.mxu0 %v2337
    %2373 = vmatprep.subr.mxu0 0.0
    %2374 = vmatpush1.msra.mxu0 %v2338
    %2375 = vmatprep.subr.mxu0 0.0
    %2376 = vmatpush1.msra.mxu0 %v2339
    %2377 = vmatprep.subr.mxu0 0.0
    %2378 = vmatpush1.msra.mxu0 %v2340
    %2379 = vmatprep.subr.mxu0 0.0
    %2380 = vmatpush1.msra.mxu0 %v2341
    %2381 = vmatprep.subr.mxu0 0.0
    %2382 = vmatpush1.msra.mxu0 %v2342
    %2383 = vmatprep.subr.mxu0 0.0
    %2384 = vmatpush1.msra.mxu0 0.0
    %2385 = vmatprep.subr.mxu0 0.0
    %2386 = vmatpush1.msra.mxu0 0.0
    %2387 = vmatprep.subr.mxu0 0.0
    %2388 = vmatpush1.msra.mxu0 0.0
    %2389 = vmatprep.subr.mxu0 0.0
    %2390 = vmatpush1.msra.mxu0 0.0
    %2391 = vmatprep.subr.mxu0 0.0
    %2392 = vmatpush1.msra.mxu0 0.0
    %2393 = vmatprep.subr.mxu0 0.0
    %2394 = vmatpush1.msra.mxu0 0.0
    %2395 = vmatprep.subr.mxu0 0.0
    %2396 = vmatpush1.msra.mxu0 0.0
    %2397 = vmatprep.subr.mxu0 0.0
    %2398 = vmatpush1.msra.mxu0 0.0
    %2399 = vmatprep.subr.mxu0 0.0
    %2400 = vmatpush1.msra.mxu0 0.0
    %2401 = vmatprep.subr.mxu0 0.0
    %2402 = vmatpush1.msra.mxu0 0.0
    %2403 = vmatprep.subr.mxu0 0.0
    %2404 = vmatpush1.msra.mxu0 0.0
    %2405 = vmatprep.subr.mxu0 0.0
    %2406 = vmatpush1.msra.mxu0 0.0
    %2407 = vmatprep.subr.mxu0 0.0
    %2408 = vmatpush1.msra.mxu0 0.0
    %2409 = vmatprep.subr.mxu0 0.0
    %2410 = vmatpush1.msra.mxu0 0.0
    %2411 = vmatprep.subr.mxu0 0.0
    %2412 = vmatpush1.msra.mxu0 0.0
    %2413 = vmatprep.subr.mxu0 0.0
    %2414 = vmatpush1.msra.mxu0 0.0
    %2415 = vmatprep.mubr.f32.mxu0 0.0
    %2416 = vmatmul.mubr.f32.gmra.mrb[0].mxu0 %v2325
    %v2417 = vpop.f32.mrb[0].mxu0
    %v2418 = vadd.f32 %v2349, %v2417
    %v2419 = vpop.f32.mrb[0].mxu0
    %2420 = vdwg.mxu0
    %s2421 = scalar_lea.vmem %s9, 128
    %v2422 = vld [vmem:[%s2421] sm:$0xff]
    %v2423 = vld [vmem:[%s2421 + $0x8] sm:$0xff]
    %v2424 = vld [vmem:[%s2421 + $0x10] sm:$0xff]
    %v2425 = vld [vmem:[%s2421 + $0x18] sm:$0xff]
    %v2426 = vld [vmem:[%s2421 + $0x20] sm:$0xff]
    %v2427 = vld [vmem:[%s2421 + $0x28] sm:$0xff]
    %v2428 = vld [vmem:[%s2421 + $0x30] sm:$0xff]
    %v2429 = vld [vmem:[%s2421 + $0x38] sm:$0xff]
    %v2430 = vld [vmem:[%s2421 + $0x40] sm:$0xff]
    %v2431 = vld [vmem:[%s2421 + $0x48] sm:$0xff]
    %v2432 = vld [vmem:[%s2421 + $0x50] sm:$0xff]
    %v2433 = vld [vmem:[%s2421 + $0x58] sm:$0xff]
    %v2434 = vld [vmem:[%s2421 + $0x60] sm:$0xff]
    %v2435 = vld [vmem:[%s2421 + $0x68] sm:$0xff]
    %v2436 = vld [vmem:[%s2421 + $0x70] sm:$0xff]
    %v2437 = vld [vmem:[%s2421 + $0x78] sm:$0xff]
    %2438 = vmatprep.subr.mxu0 0.0
    %2439 = vmatpush1.msra.mxu0 %v2422
    %2440 = vmatprep.subr.mxu0 0.0
    %2441 = vmatpush1.msra.mxu0 %v2423
    %2442 = vmatprep.subr.mxu0 0.0
    %2443 = vmatpush1.msra.mxu0 %v2424
    %2444 = vmatprep.subr.mxu0 0.0
    %2445 = vmatpush1.msra.mxu0 %v2425
    %2446 = vmatprep.subr.mxu0 0.0
    %2447 = vmatpush1.msra.mxu0 %v2426
    %2448 = vmatprep.subr.mxu0 0.0
    %2449 = vmatpush1.msra.mxu0 %v2427
    %2450 = vmatprep.subr.mxu0 0.0
    %2451 = vmatpush1.msra.mxu0 %v2428
    %2452 = vmatprep.subr.mxu0 0.0
    %2453 = vmatpush1.msra.mxu0 %v2429
    %2454 = vmatprep.subr.mxu0 0.0
    %2455 = vmatpush1.msra.mxu0 %v2430
    %2456 = vmatprep.subr.mxu0 0.0
    %2457 = vmatpush1.msra.mxu0 %v2431
    %2458 = vmatprep.subr.mxu0 0.0
    %2459 = vmatpush1.msra.mxu0 %v2432
    %2460 = vmatprep.subr.mxu0 0.0
    %2461 = vmatpush1.msra.mxu0 %v2433
    %2462 = vmatprep.subr.mxu0 0.0
    %2463 = vmatpush1.msra.mxu0 %v2434
    %2464 = vmatprep.subr.mxu0 0.0
    %2465 = vmatpush1.msra.mxu0 %v2435
    %2466 = vmatprep.subr.mxu0 0.0
    %2467 = vmatpush1.msra.mxu0 %v2436
    %2468 = vmatprep.subr.mxu0 0.0
    %2469 = vmatpush1.msra.mxu0 %v2437
    %2470 = vmatprep.subr.mxu0 0.0
    %2471 = vmatpush1.msra.mxu0 0.0
    %2472 = vmatprep.subr.mxu0 0.0
    %2473 = vmatpush1.msra.mxu0 0.0
    %2474 = vmatprep.subr.mxu0 0.0
    %2475 = vmatpush1.msra.mxu0 0.0
    %2476 = vmatprep.subr.mxu0 0.0
    %2477 = vmatpush1.msra.mxu0 0.0
    %2478 = vmatprep.subr.mxu0 0.0
    %2479 = vmatpush1.msra.mxu0 0.0
    %2480 = vmatprep.subr.mxu0 0.0
    %2481 = vmatpush1.msra.mxu0 0.0
    %2482 = vmatprep.subr.mxu0 0.0
    %2483 = vmatpush1.msra.mxu0 0.0
    %2484 = vmatprep.subr.mxu0 0.0
    %2485 = vmatpush1.msra.mxu0 0.0
    %2486 = vmatprep.subr.mxu0 0.0
    %2487 = vmatpush1.msra.mxu0 0.0
    %2488 = vmatprep.subr.mxu0 0.0
    %2489 = vmatpush1.msra.mxu0 0.0
    %2490 = vmatprep.subr.mxu0 0.0
    %2491 = vmatpush1.msra.mxu0 0.0
    %2492 = vmatprep.subr.mxu0 0.0
    %2493 = vmatpush1.msra.mxu0 0.0
    %2494 = vmatprep.subr.mxu0 0.0
    %2495 = vmatpush1.msra.mxu0 0.0
    %2496 = vmatprep.subr.mxu0 0.0
    %2497 = vmatpush1.msra.mxu0 0.0
    %2498 = vmatprep.subr.mxu0 0.0
    %2499 = vmatpush1.msra.mxu0 0.0
    %2500 = vmatprep.subr.mxu0 0.0
    %2501 = vmatpush1.msra.mxu0 0.0
    %2502 = vmatprep.mubr.f32.mxu0 0.0
    %2503 = vmatmul.mubr.f32.gmra.mrb[0].mxu0 %v2325
    %v2504 = vpop.f32.mrb[0].mxu0
    %v2505 = vadd.f32 0.0, %v2504
    %v2506 = vpop.f32.mrb[0].mxu0
    %2507 = vdwg.mxu0
    %s2508 = scalar_lea.vmem %s10, 128
    %v2509 = vld [vmem:[%s2508] sm:$0xff]
    %v2510 = vld [vmem:[%s2508 + $0x8] sm:$0xff]
    %v2511 = vld [vmem:[%s2508 + $0x10] sm:$0xff]
    %v2512 = vld [vmem:[%s2508 + $0x18] sm:$0xff]
    %v2513 = vld [vmem:[%s2508 + $0x20] sm:$0xff]
    %v2514 = vld [vmem:[%s2508 + $0x28] sm:$0xff]
    %v2515 = vld [vmem:[%s2508 + $0x30] sm:$0xff]
    %v2516 = vld [vmem:[%s2508 + $0x38] sm:$0xff]
    %v2517 = vld [vmem:[%s2508 + $0x40] sm:$0xff]
    %v2518 = vld [vmem:[%s2508 + $0x48] sm:$0xff]
    %v2519 = vld [vmem:[%s2508 + $0x50] sm:$0xff]
    %v2520 = vld [vmem:[%s2508 + $0x58] sm:$0xff]
    %v2521 = vld [vmem:[%s2508 + $0x60] sm:$0xff]
    %v2522 = vld [vmem:[%s2508 + $0x68] sm:$0xff]
    %v2523 = vld [vmem:[%s2508 + $0x70] sm:$0xff]
    %v2524 = vld [vmem:[%s2508 + $0x78] sm:$0xff]
    %2525 = vmatprep.subr.mxu0 0.0
    %2526 = vmatpush1.msra.mxu0 %v2509
    %2527 = vmatprep.subr.mxu0 0.0
    %2528 = vmatpush1.msra.mxu0 %v2510
    %2529 = vmatprep.subr.mxu0 0.0
    %2530 = vmatpush1.msra.mxu0 %v2511
    %2531 = vmatprep.subr.mxu0 0.0
    %2532 = vmatpush1.msra.mxu0 %v2512
    %2533 = vmatprep.subr.mxu0 0.0
    %2534 = vmatpush1.msra.mxu0 %v2513
    %2535 = vmatprep.subr.mxu0 0.0
    %2536 = vmatpush1.msra.mxu0 %v2514
    %2537 = vmatprep.subr.mxu0 0.0
    %2538 = vmatpush1.msra.mxu0 %v2515
    %2539 = vmatprep.subr.mxu0 0.0
    %2540 = vmatpush1.msra.mxu0 %v2516
    %2541 = vmatprep.subr.mxu0 0.0
    %2542 = vmatpush1.msra.mxu0 %v2517
    %2543 = vmatprep.subr.mxu0 0.0
    %2544 = vmatpush1.msra.mxu0 %v2518
    %2545 = vmatprep.subr.mxu0 0.0
    %2546 = vmatpush1.msra.mxu0 %v2519
    %2547 = vmatprep.subr.mxu0 0.0
    %2548 = vmatpush1.msra.mxu0 %v2520
    %2549 = vmatprep.subr.mxu0 0.0
    %2550 = vmatpush1.msra.mxu0 %v2521
    %2551 = vmatprep.subr.mxu0 0.0
    %2552 = vmatpush1.msra.mxu0 %v2522
    %2553 = vmatprep.subr.mxu0 0.0
    %2554 = vmatpush1.msra.mxu0 %v2523
    %2555 = vmatprep.subr.mxu0 0.0
    %2556 = vmatpush1.msra.mxu0 %v2524
    %2557 = vmatprep.subr.mxu0 0.0
    %2558 = vmatpush1.msra.mxu0 0.0
    %2559 = vmatprep.subr.mxu0 0.0
    %2560 = vmatpush1.msra.mxu0 0.0
    %2561 = vmatprep.subr.mxu0 0.0
    %2562 = vmatpush1.msra.mxu0 0.0
    %2563 = vmatprep.subr.mxu0 0.0
    %2564 = vmatpush1.msra.mxu0 0.0
    %2565 = vmatprep.subr.mxu0 0.0
    %2566 = vmatpush1.msra.mxu0 0.0
    %2567 = vmatprep.subr.mxu0 0.0
    %2568 = vmatpush1.msra.mxu0 0.0
    %2569 = vmatprep.subr.mxu0 0.0
    %2570 = vmatpush1.msra.mxu0 0.0
    %2571 = vmatprep.subr.mxu0 0.0
    %2572 = vmatpush1.msra.mxu0 0.0
    %2573 = vmatprep.subr.mxu0 0.0
    %2574 = vmatpush1.msra.mxu0 0.0
    %2575 = vmatprep.subr.mxu0 0.0
    %2576 = vmatpush1.msra.mxu0 0.0
    %2577 = vmatprep.subr.mxu0 0.0
    %2578 = vmatpush1.msra.mxu0 0.0
    %2579 = vmatprep.subr.mxu0 0.0
    %2580 = vmatpush1.msra.mxu0 0.0
    %2581 = vmatprep.subr.mxu0 0.0
    %2582 = vmatpush1.msra.mxu0 0.0
    %2583 = vmatprep.subr.mxu0 0.0
    %2584 = vmatpush1.msra.mxu0 0.0
    %2585 = vmatprep.subr.mxu0 0.0
    %2586 = vmatpush1.msra.mxu0 0.0
    %2587 = vmatprep.subr.mxu0 0.0
    %2588 = vmatpush1.msra.mxu0 0.0
    %2589 = vmatprep.mubr.f32.mxu0 0.0
    %2590 = vmatmul.mubr.f32.gmra.mrb[0].mxu0 %v2325
    %v2591 = vpop.f32.mrb[0].mxu0
    %v2592 = vadd.f32 0.0, %v2591
    %v2593 = vpop.f32.mrb[0].mxu0
    %2594 = vdwg.mxu0
    %v2595 = vmax.f32 %v2418, 0.0
    %v2596 = vand.u32 2147483647, %v2418
    %v2597 = vsub.f32 0.0, %v2596
    %v2598 = vmul.f32 %v2597, 1.442695
    %v2599 = vpow.pop %v2598
    %v2600 = vadd.f32 %v2599, 1.0
    %v2601 = vlog2.pop %v2600
    %v2602 = vmul.f32 %v2601, 0.6931472
    %v2603 = vadd.f32 %v2595, %v2602
    %vm2604 = vcmp.gt.f32.partialorder %v2418, 20.0
    %v2605 = vsel %vm2604, %v2418, %v2603
    %v2607 = vcombine.high %v2605, %v2605
    %v2609 = vunpack.c.l.s4 1966171168
    %v2610 = vunpack.c.0.s8 %v2609
    %v2611 = vlaneseq
    %v2612 = vshrl.u32 %v2611, 7
    %v2613 = vsub.s32 %v2610, %v2612
    %v2614 = vrot.slane %v2605, %v2613
    %v2616 = vunpack.c.l.s4 1966171168
    %v2617 = vunpack.c.0.s8 %v2616
    %v2618 = vlaneseq
    %v2619 = vshrl.u32 %v2618, 7
    %v2620 = vsub.s32 %v2617, %v2619
    %v2621 = vrot.slane %v2607, %v2620
    %v2622 = vcombine.high %v2614, %v2614
    %v2623 = vcombine.high %v2621, %v2621
    %v2625 = vunpack.c.l.s4 1966171168
    %v2626 = vunpack.c.0.s8 %v2625
    %v2627 = vlaneseq
    %v2628 = vshrl.u32 %v2627, 7
    %v2629 = vsub.s32 %v2626, %v2628
    %v2630 = vrot.slane %v2614, %v2629
    %v2632 = vunpack.c.l.s4 1966171168
    %v2633 = vunpack.c.0.s8 %v2632
    %v2634 = vlaneseq
    %v2635 = vshrl.u32 %v2634, 7
    %v2636 = vsub.s32 %v2633, %v2635
    %v2637 = vrot.slane %v2621, %v2636
    %v2639 = vunpack.c.l.s4 1966171168
    %v2640 = vunpack.c.0.s8 %v2639
    %v2641 = vlaneseq
    %v2642 = vshrl.u32 %v2641, 7
    %v2643 = vsub.s32 %v2640, %v2642
    %v2644 = vrot.slane %v2622, %v2643
    %v2646 = vunpack.c.l.s4 1966171168
    %v2647 = vunpack.c.0.s8 %v2646
    %v2648 = vlaneseq
    %v2649 = vshrl.u32 %v2648, 7
    %v2650 = vsub.s32 %v2647, %v2649
    %v2651 = vrot.slane %v2623, %v2650
    %v2652 = vcombine.high %v2630, %v2630
    %v2653 = vcombine.high %v2637, %v2637
    %v2654 = vcombine.high %v2644, %v2644
    %v2655 = vcombine.high %v2651, %v2651
    %s2656 = scalar_lea.vmem %s11, 16
    %v2657 = vld [vmem:[%s2656] sm:$0xff]
    %v2658 = vld [vmem:[%s2656 + $0x8] sm:$0xff]
    %v2659 = vlaneseq
    %v2660 = vshrl.u32 %v2659, 7
    %v2661 = vsub.s32 0, %v2660
    %v2662 = vrot.slane %v2630, %v2661
    %v2663 = vlaneseq
    %v2664 = vshrl.u32 %v2663, 7
    %v2665 = vsub.s32 0, %v2664
    %v2666 = vrot.slane %v2644, %v2665
    %v2667 = vlaneseq
    %v2668 = vshrl.u32 %v2667, 7
    %v2669 = vsub.s32 0, %v2668
    %v2670 = vrot.slane %v2652, %v2669
    %v2671 = vlaneseq
    %v2672 = vshrl.u32 %v2671, 7
    %v2673 = vsub.s32 0, %v2672
    %v2674 = vrot.slane %v2654, %v2673
    %v2675 = vlaneseq
    %v2676 = vshrl.u32 %v2675, 7
    %v2677 = vsub.s32 0, %v2676
    %v2678 = vrot.slane %v2637, %v2677
    %v2679 = vlaneseq
    %v2680 = vshrl.u32 %v2679, 7
    %v2681 = vsub.s32 0, %v2680
    %v2682 = vrot.slane %v2651, %v2681
    %v2683 = vlaneseq
    %v2684 = vshrl.u32 %v2683, 7
    %v2685 = vsub.s32 0, %v2684
    %v2686 = vrot.slane %v2653, %v2685
    %v2687 = vlaneseq
    %v2688 = vshrl.u32 %v2687, 7
    %v2689 = vsub.s32 0, %v2688
    %v2690 = vrot.slane %v2655, %v2689
    %v2699 = vmul.f32 %v2662, %v2657
    %v2700 = vmul.f32 %v2662, %v2658
    %v2701 = vmul.f32 %v2666, %v2657
    %v2702 = vmul.f32 %v2666, %v2658
    %v2703 = vmul.f32 %v2670, %v2657
    %v2704 = vmul.f32 %v2670, %v2658
    %v2705 = vmul.f32 %v2674, %v2657
    %v2706 = vmul.f32 %v2674, %v2658
    %v2707 = vmul.f32 %v2678, %v2657
    %v2708 = vmul.f32 %v2678, %v2658
    %v2709 = vmul.f32 %v2682, %v2657
    %v2710 = vmul.f32 %v2682, %v2658
    %v2711 = vmul.f32 %v2686, %v2657
    %v2712 = vmul.f32 %v2686, %v2658
    %v2713 = vmul.f32 %v2690, %v2657
    %v2714 = vmul.f32 %v2690, %v2658
    %v2715 = vmul.f32 %v2699, 1.442695
    %v2716 = vpow.pop %v2715
    %v2717 = vmul.f32 %v2700, 1.442695
    %v2718 = vpow.pop %v2717
    %v2719 = vmul.f32 %v2701, 1.442695
    %v2720 = vpow.pop %v2719
    %v2721 = vmul.f32 %v2702, 1.442695
    %v2722 = vpow.pop %v2721
    %v2723 = vmul.f32 %v2703, 1.442695
    %v2724 = vpow.pop %v2723
    %v2725 = vmul.f32 %v2704, 1.442695
    %v2726 = vpow.pop %v2725
    %v2727 = vmul.f32 %v2705, 1.442695
    %v2728 = vpow.pop %v2727
    %v2729 = vmul.f32 %v2706, 1.442695
    %v2730 = vpow.pop %v2729
    %v2731 = vmul.f32 %v2707, 1.442695
    %v2732 = vpow.pop %v2731
    %v2733 = vmul.f32 %v2708, 1.442695
    %v2734 = vpow.pop %v2733
    %v2735 = vmul.f32 %v2709, 1.442695
    %v2736 = vpow.pop %v2735
    %v2737 = vmul.f32 %v2710, 1.442695
    %v2738 = vpow.pop %v2737
    %v2739 = vmul.f32 %v2711, 1.442695
    %v2740 = vpow.pop %v2739
    %v2741 = vmul.f32 %v2712, 1.442695
    %v2742 = vpow.pop %v2741
    %v2743 = vmul.f32 %v2713, 1.442695
    %v2744 = vpow.pop %v2743
    %v2745 = vmul.f32 %v2714, 1.442695
    %v2746 = vpow.pop %v2745
    %2747 = vst [vmem:[#allocation2] sm:$0xff] %v2716
    %2748 = vst [vmem:[#allocation2 + $0x8] sm:$0xff] %v2718
    %2749 = vst [vmem:[#allocation2 + $0x10] sm:$0xff] %v2720
    %2750 = vst [vmem:[#allocation2 + $0x18] sm:$0xff] %v2722
    %2751 = vst [vmem:[#allocation2 + $0x20] sm:$0xff] %v2724
    %2752 = vst [vmem:[#allocation2 + $0x28] sm:$0xff] %v2726
    %2753 = vst [vmem:[#allocation2 + $0x30] sm:$0xff] %v2728
    %2754 = vst [vmem:[#allocation2 + $0x38] sm:$0xff] %v2730
    %2755 = vst [vmem:[#allocation2 + $0x40] sm:$0xff] %v2732
    %2756 = vst [vmem:[#allocation2 + $0x48] sm:$0xff] %v2734
    %2757 = vst [vmem:[#allocation2 + $0x50] sm:$0xff] %v2736
    %2758 = vst [vmem:[#allocation2 + $0x58] sm:$0xff] %v2738
    %2759 = vst [vmem:[#allocation2 + $0x60] sm:$0xff] %v2740
    %2760 = vst [vmem:[#allocation2 + $0x68] sm:$0xff] %v2742
    %2761 = vst [vmem:[#allocation2 + $0x70] sm:$0xff] %v2744
    %2762 = vst [vmem:[#allocation2 + $0x78] sm:$0xff] %v2746
    %v2763 = vmul.f32 %v2605, %v2325
    %v2765 = vcombine.high %v2763, %v2763
    %v2767 = vunpack.c.l.s4 1966171168
    %v2768 = vunpack.c.0.s8 %v2767
    %v2769 = vlaneseq
    %v2770 = vshrl.u32 %v2769, 7
    %v2771 = vsub.s32 %v2768, %v2770
    %v2772 = vrot.slane %v2763, %v2771
    %v2774 = vunpack.c.l.s4 1966171168
    %v2775 = vunpack.c.0.s8 %v2774
    %v2776 = vlaneseq
    %v2777 = vshrl.u32 %v2776, 7
    %v2778 = vsub.s32 %v2775, %v2777
    %v2779 = vrot.slane %v2765, %v2778
    %v2780 = vcombine.high %v2772, %v2772
    %v2781 = vcombine.high %v2779, %v2779
    %v2783 = vunpack.c.l.s4 1966171168
    %v2784 = vunpack.c.0.s8 %v2783
    %v2785 = vlaneseq
    %v2786 = vshrl.u32 %v2785, 7
    %v2787 = vsub.s32 %v2784, %v2786
    %v2788 = vrot.slane %v2772, %v2787
    %v2790 = vunpack.c.l.s4 1966171168
    %v2791 = vunpack.c.0.s8 %v2790
    %v2792 = vlaneseq
    %v2793 = vshrl.u32 %v2792, 7
    %v2794 = vsub.s32 %v2791, %v2793
    %v2795 = vrot.slane %v2779, %v2794
    %v2797 = vunpack.c.l.s4 1966171168
    %v2798 = vunpack.c.0.s8 %v2797
    %v2799 = vlaneseq
    %v2800 = vshrl.u32 %v2799, 7
    %v2801 = vsub.s32 %v2798, %v2800
    %v2802 = vrot.slane %v2780, %v2801
    %v2804 = vunpack.c.l.s4 1966171168
    %v2805 = vunpack.c.0.s8 %v2804
    %v2806 = vlaneseq
    %v2807 = vshrl.u32 %v2806, 7
    %v2808 = vsub.s32 %v2805, %v2807
    %v2809 = vrot.slane %v2781, %v2808
    %v2810 = vcombine.high %v2788, %v2788
    %v2811 = vcombine.high %v2795, %v2795
    %v2812 = vcombine.high %v2802, %v2802
    %v2813 = vcombine.high %v2809, %v2809
    %v2814 = vlaneseq
    %v2815 = vshrl.u32 %v2814, 7
    %v2816 = vsub.s32 0, %v2815
    %v2817 = vrot.slane %v2505, %v2816
    %2819 = vbcast.lane.b32.xlu0 %v2817, 256
    %v2820 = vpop.permute.xlu0 %2819
    %s2822 = sor.u32 256, 8
    %2823 = vbcast.lane.b32.xlu0 %v2817, %s2822
    %v2824 = vpop.permute.xlu0 %2823
    %v2825 = vlaneseq
    %v2826 = vshrl.u32 %v2825, 7
    %v2827 = vsub.s32 1, %v2826
    %v2828 = vrot.slane %v2505, %v2827
    %2830 = vbcast.lane.b32.xlu0 %v2828, 256
    %v2831 = vpop.permute.xlu0 %2830
    %s2833 = sor.u32 256, 8
    %2834 = vbcast.lane.b32.xlu0 %v2828, %s2833
    %v2835 = vpop.permute.xlu0 %2834
    %v2836 = vlaneseq
    %v2837 = vshrl.u32 %v2836, 7
    %v2838 = vsub.s32 2, %v2837
    %v2839 = vrot.slane %v2505, %v2838
    %2841 = vbcast.lane.b32.xlu0 %v2839, 256
    %v2842 = vpop.permute.xlu0 %2841
    %s2844 = sor.u32 256, 8
    %2845 = vbcast.lane.b32.xlu0 %v2839, %s2844
    %v2846 = vpop.permute.xlu0 %2845
    %v2847 = vlaneseq
    %v2848 = vshrl.u32 %v2847, 7
    %v2849 = vsub.s32 3, %v2848
    %v2850 = vrot.slane %v2505, %v2849
    %2852 = vbcast.lane.b32.xlu0 %v2850, 256
    %v2853 = vpop.permute.xlu0 %2852
    %s2855 = sor.u32 256, 8
    %2856 = vbcast.lane.b32.xlu0 %v2850, %s2855
    %v2857 = vpop.permute.xlu0 %2856
    %v2858 = vlaneseq
    %v2859 = vshrl.u32 %v2858, 7
    %v2860 = vsub.s32 4, %v2859
    %v2861 = vrot.slane %v2505, %v2860
    %2863 = vbcast.lane.b32.xlu0 %v2861, 256
    %v2864 = vpop.permute.xlu0 %2863
    %s2866 = sor.u32 256, 8
    %2867 = vbcast.lane.b32.xlu0 %v2861, %s2866
    %v2868 = vpop.permute.xlu0 %2867
    %v2869 = vlaneseq
    %v2870 = vshrl.u32 %v2869, 7
    %v2871 = vsub.s32 5, %v2870
    %v2872 = vrot.slane %v2505, %v2871
    %2874 = vbcast.lane.b32.xlu0 %v2872, 256
    %v2875 = vpop.permute.xlu0 %2874
    %s2877 = sor.u32 256, 8
    %2878 = vbcast.lane.b32.xlu0 %v2872, %s2877
    %v2879 = vpop.permute.xlu0 %2878
    %v2880 = vlaneseq
    %v2881 = vshrl.u32 %v2880, 7
    %v2882 = vsub.s32 6, %v2881
    %v2883 = vrot.slane %v2505, %v2882
    %2885 = vbcast.lane.b32.xlu0 %v2883, 256
    %v2886 = vpop.permute.xlu0 %2885
    %s2888 = sor.u32 256, 8
    %2889 = vbcast.lane.b32.xlu0 %v2883, %s2888
    %v2890 = vpop.permute.xlu0 %2889
    %v2891 = vlaneseq
    %v2892 = vshrl.u32 %v2891, 7
    %v2893 = vsub.s32 7, %v2892
    %v2894 = vrot.slane %v2505, %v2893
    %2896 = vbcast.lane.b32.xlu0 %v2894, 256
    %v2897 = vpop.permute.xlu0 %2896
    %s2899 = sor.u32 256, 8
    %2900 = vbcast.lane.b32.xlu0 %v2894, %s2899
    %v2901 = vpop.permute.xlu0 %2900
    %s2903 = sor.u32 256, 16
    %2904 = vbcast.lane.b32.xlu0 %v2817, %s2903
    %v2905 = vpop.permute.xlu0 %2904
    %s2907 = sor.u32 256, 24
    %2908 = vbcast.lane.b32.xlu0 %v2817, %s2907
    %v2909 = vpop.permute.xlu0 %2908
    %s2911 = sor.u32 256, 16
    %2912 = vbcast.lane.b32.xlu0 %v2828, %s2911
    %v2913 = vpop.permute.xlu0 %2912
    %s2915 = sor.u32 256, 24
    %2916 = vbcast.lane.b32.xlu0 %v2828, %s2915
    %v2917 = vpop.permute.xlu0 %2916
    %s2919 = sor.u32 256, 16
    %2920 = vbcast.lane.b32.xlu0 %v2839, %s2919
    %v2921 = vpop.permute.xlu0 %2920
    %s2923 = sor.u32 256, 24
    %2924 = vbcast.lane.b32.xlu0 %v2839, %s2923
    %v2925 = vpop.permute.xlu0 %2924
    %s2927 = sor.u32 256, 16
    %2928 = vbcast.lane.b32.xlu0 %v2850, %s2927
    %v2929 = vpop.permute.xlu0 %2928
    %s2931 = sor.u32 256, 24
    %2932 = vbcast.lane.b32.xlu0 %v2850, %s2931
    %v2933 = vpop.permute.xlu0 %2932
    %s2935 = sor.u32 256, 16
    %2936 = vbcast.lane.b32.xlu0 %v2861, %s2935
    %v2937 = vpop.permute.xlu0 %2936
    %s2939 = sor.u32 256, 24
    %2940 = vbcast.lane.b32.xlu0 %v2861, %s2939
    %v2941 = vpop.permute.xlu0 %2940
    %s2943 = sor.u32 256, 16
    %2944 = vbcast.lane.b32.xlu0 %v2872, %s2943
    %v2945 = vpop.permute.xlu0 %2944
    %s2947 = sor.u32 256, 24
    %2948 = vbcast.lane.b32.xlu0 %v2872, %s2947
    %v2949 = vpop.permute.xlu0 %2948
    %s2951 = sor.u32 256, 16
    %2952 = vbcast.lane.b32.xlu0 %v2883, %s2951
    %v2953 = vpop.permute.xlu0 %2952
    %s2955 = sor.u32 256, 24
    %2956 = vbcast.lane.b32.xlu0 %v2883, %s2955
    %v2957 = vpop.permute.xlu0 %2956
    %s2959 = sor.u32 256, 16
    %2960 = vbcast.lane.b32.xlu0 %v2894, %s2959
    %v2961 = vpop.permute.xlu0 %2960
    %s2963 = sor.u32 256, 24
    %2964 = vbcast.lane.b32.xlu0 %v2894, %s2963
    %v2965 = vpop.permute.xlu0 %2964
    %v2966 = vsel %vm365, %v2820, %v2905
    %v2967 = vsel %vm365, %v2824, %v2909
    %v2968 = vsel %vm365, %v2831, %v2913
    %v2969 = vsel %vm365, %v2835, %v2917
    %v2970 = vsel %vm365, %v2842, %v2921
    %v2971 = vsel %vm365, %v2846, %v2925
    %v2972 = vsel %vm365, %v2853, %v2929
    %v2973 = vsel %vm365, %v2857, %v2933
    %v2974 = vsel %vm365, %v2864, %v2937
    %v2975 = vsel %vm365, %v2868, %v2941
    %v2976 = vsel %vm365, %v2875, %v2945
    %v2977 = vsel %vm365, %v2879, %v2949
    %v2978 = vsel %vm365, %v2886, %v2953
    %v2979 = vsel %vm365, %v2890, %v2957
    %v2980 = vsel %vm365, %v2897, %v2961
    %v2981 = vsel %vm365, %v2901, %v2965
    %v2982 = vlaneseq
    %v2983 = vshrl.u32 %v2982, 7
    %v2984 = vsub.s32 0, %v2983
    %v2985 = vrot.slane %v2788, %v2984
    %v2986 = vlaneseq
    %v2987 = vshrl.u32 %v2986, 7
    %v2988 = vsub.s32 0, %v2987
    %v2989 = vrot.slane %v2802, %v2988
    %v2990 = vlaneseq
    %v2991 = vshrl.u32 %v2990, 7
    %v2992 = vsub.s32 0, %v2991
    %v2993 = vrot.slane %v2810, %v2992
    %v2994 = vlaneseq
    %v2995 = vshrl.u32 %v2994, 7
    %v2996 = vsub.s32 0, %v2995
    %v2997 = vrot.slane %v2812, %v2996
    %v2998 = vlaneseq
    %v2999 = vshrl.u32 %v2998, 7
    %v3000 = vsub.s32 0, %v2999
    %v3001 = vrot.slane %v2795, %v3000
    %v3002 = vlaneseq
    %v3003 = vshrl.u32 %v3002, 7
    %v3004 = vsub.s32 0, %v3003
    %v3005 = vrot.slane %v2809, %v3004
    %v3006 = vlaneseq
    %v3007 = vshrl.u32 %v3006, 7
    %v3008 = vsub.s32 0, %v3007
    %v3009 = vrot.slane %v2811, %v3008
    %v3010 = vlaneseq
    %v3011 = vshrl.u32 %v3010, 7
    %v3012 = vsub.s32 0, %v3011
    %v3013 = vrot.slane %v2813, %v3012
    %v3022 = vmul.f32 %v2985, %v2966
    %v3023 = vmul.f32 %v2985, %v2967
    %v3024 = vmul.f32 %v2989, %v2968
    %v3025 = vmul.f32 %v2989, %v2969
    %v3026 = vmul.f32 %v2993, %v2970
    %v3027 = vmul.f32 %v2993, %v2971
    %v3028 = vmul.f32 %v2997, %v2972
    %v3029 = vmul.f32 %v2997, %v2973
    %v3030 = vmul.f32 %v3001, %v2974
    %v3031 = vmul.f32 %v3001, %v2975
    %v3032 = vmul.f32 %v3005, %v2976
    %v3033 = vmul.f32 %v3005, %v2977
    %v3034 = vmul.f32 %v3009, %v2978
    %v3035 = vmul.f32 %v3009, %v2979
    %v3036 = vmul.f32 %v3013, %v2980
    %v3037 = vmul.f32 %v3013, %v2981
    %3038 = vst [vmem:[#allocation3] sm:$0xff] %v3022
    %3039 = vst [vmem:[#allocation3 + $0x8] sm:$0xff] %v3023
    %3040 = vst [vmem:[#allocation3 + $0x10] sm:$0xff] %v3024
    %3041 = vst [vmem:[#allocation3 + $0x18] sm:$0xff] %v3025
    %3042 = vst [vmem:[#allocation3 + $0x20] sm:$0xff] %v3026
    %3043 = vst [vmem:[#allocation3 + $0x28] sm:$0xff] %v3027
    %3044 = vst [vmem:[#allocation3 + $0x30] sm:$0xff] %v3028
    %3045 = vst [vmem:[#allocation3 + $0x38] sm:$0xff] %v3029
    %3046 = vst [vmem:[#allocation3 + $0x40] sm:$0xff] %v3030
    %3047 = vst [vmem:[#allocation3 + $0x48] sm:$0xff] %v3031
    %3048 = vst [vmem:[#allocation3 + $0x50] sm:$0xff] %v3032
    %3049 = vst [vmem:[#allocation3 + $0x58] sm:$0xff] %v3033
    %3050 = vst [vmem:[#allocation3 + $0x60] sm:$0xff] %v3034
    %3051 = vst [vmem:[#allocation3 + $0x68] sm:$0xff] %v3035
    %3052 = vst [vmem:[#allocation3 + $0x70] sm:$0xff] %v3036
    %3053 = vst [vmem:[#allocation3 + $0x78] sm:$0xff] %v3037
    %v3054 = vld [vmem:[#allocation2] sm:$0xff]
    %v3055 = vld [vmem:[#allocation2 + $0x8] sm:$0xff]
    %v3056 = vmul.f32 %v3054, 0.0
    %v3057 = vmul.f32 %v3055, 0.0
    %v3058 = vld [vmem:[#allocation3] sm:$0xff]
    %v3059 = vld [vmem:[#allocation3 + $0x8] sm:$0xff]
    %v3060 = vadd.f32 %v3056, %v3058
    %v3061 = vadd.f32 %v3057, %v3059
    %3062 = vst [vmem:[#allocation4] sm:$0xff] %v3060
    %3063 = vst [vmem:[#allocation4 + $0x8] sm:$0xff] %v3061
    %v3064 = vld [vmem:[%s1359] sm:$0xff]
    %v3065 = vld [vmem:[%s1359 + $0x8] sm:$0xff]
    %v3066 = vmul.f32 %v3064, %v3060
    %v3067 = vmul.f32 %v3065, %v3061
    %v3068 = vld [vmem:[%s1364] sm:$0xff]
    %v3069 = vld [vmem:[%s1364 + $0x8] sm:$0xff]
    %v3070 = vadd.f32 %v3066, %v3068
    %v3071 = vadd.f32 %v3067, %v3069
    %3072 = vst [vmem:[%s1369] sm:$0xff] %v3070
    %3073 = vst [vmem:[%s1369 + $0x8] sm:$0xff] %v3071
    %v3074 = vld [vmem:[%s1372] sm:$0xff]
    %v3075 = vld [vmem:[%s1372 + $0x8] sm:$0xff]
    %v3076 = vmul.f32 %v3074, %v3070
    %v3077 = vmul.f32 %v3075, %v3071
    %v3078 = vld [vmem:[%s1377] sm:$0xff]
    %v3079 = vld [vmem:[%s1377 + $0x8] sm:$0xff]
    %v3080 = vadd.f32 %v3076, %v3078
    %v3081 = vadd.f32 %v3077, %v3079
    %3082 = vst [vmem:[%s1382] sm:$0xff] %v3080
    %3083 = vst [vmem:[%s1382 + $0x8] sm:$0xff] %v3081
    %v3084 = vld [vmem:[%s1385] sm:$0xff]
    %v3085 = vld [vmem:[%s1385 + $0x8] sm:$0xff]
    %v3086 = vmul.f32 %v3084, %v3080
    %v3087 = vmul.f32 %v3085, %v3081
    %v3088 = vld [vmem:[%s1390] sm:$0xff]
    %v3089 = vld [vmem:[%s1390 + $0x8] sm:$0xff]
    %v3090 = vadd.f32 %v3086, %v3088
    %v3091 = vadd.f32 %v3087, %v3089
    %3092 = vst [vmem:[%s1395] sm:$0xff] %v3090
    %3093 = vst [vmem:[%s1395 + $0x8] sm:$0xff] %v3091
    %v3094 = vld [vmem:[%s1398] sm:$0xff]
    %v3095 = vld [vmem:[%s1398 + $0x8] sm:$0xff]
    %v3096 = vmul.f32 %v3094, %v3090
    %v3097 = vmul.f32 %v3095, %v3091
    %v3098 = vld [vmem:[%s1403] sm:$0xff]
    %v3099 = vld [vmem:[%s1403 + $0x8] sm:$0xff]
    %v3100 = vadd.f32 %v3096, %v3098
    %v3101 = vadd.f32 %v3097, %v3099
    %3102 = vst [vmem:[%s1408] sm:$0xff] %v3100
    %3103 = vst [vmem:[%s1408 + $0x8] sm:$0xff] %v3101
    %v3104 = vld [vmem:[%s1411] sm:$0xff]
    %v3105 = vld [vmem:[%s1411 + $0x8] sm:$0xff]
    %v3106 = vmul.f32 %v3104, %v3100
    %v3107 = vmul.f32 %v3105, %v3101
    %v3108 = vld [vmem:[%s1416] sm:$0xff]
    %v3109 = vld [vmem:[%s1416 + $0x8] sm:$0xff]
    %v3110 = vadd.f32 %v3106, %v3108
    %v3111 = vadd.f32 %v3107, %v3109
    %3112 = vst [vmem:[%s1421] sm:$0xff] %v3110
    %3113 = vst [vmem:[%s1421 + $0x8] sm:$0xff] %v3111
    %v3114 = vld [vmem:[%s1424] sm:$0xff]
    %v3115 = vld [vmem:[%s1424 + $0x8] sm:$0xff]
    %v3116 = vmul.f32 %v3114, %v3110
    %v3117 = vmul.f32 %v3115, %v3111
    %v3118 = vld [vmem:[%s1429] sm:$0xff]
    %v3119 = vld [vmem:[%s1429 + $0x8] sm:$0xff]
    %v3120 = vadd.f32 %v3116, %v3118
    %v3121 = vadd.f32 %v3117, %v3119
    %3122 = vst [vmem:[%s1434] sm:$0xff] %v3120
    %3123 = vst [vmem:[%s1434 + $0x8] sm:$0xff] %v3121
    %v3124 = vld [vmem:[%s1437] sm:$0xff]
    %v3125 = vld [vmem:[%s1437 + $0x8] sm:$0xff]
    %v3126 = vmul.f32 %v3124, %v3120
    %v3127 = vmul.f32 %v3125, %v3121
    %v3128 = vld [vmem:[%s1442] sm:$0xff]
    %v3129 = vld [vmem:[%s1442 + $0x8] sm:$0xff]
    %v3130 = vadd.f32 %v3126, %v3128
    %v3131 = vadd.f32 %v3127, %v3129
    %3132 = vst [vmem:[%s1447] sm:$0xff] %v3130
    %3133 = vst [vmem:[%s1447 + $0x8] sm:$0xff] %v3131
    %v3134 = vld [vmem:[#allocation4] sm:$0xff]
    %v3135 = vld [vmem:[#allocation4 + $0x8] sm:$0xff]
    %v3136 = vld [vmem:[#allocation4 + $0x10] sm:$0xff]
    %v3137 = vld [vmem:[#allocation4 + $0x18] sm:$0xff]
    %v3138 = vld [vmem:[#allocation4 + $0x20] sm:$0xff]
    %v3139 = vld [vmem:[#allocation4 + $0x28] sm:$0xff]
    %v3140 = vld [vmem:[#allocation4 + $0x30] sm:$0xff]
    %v3141 = vld [vmem:[#allocation4 + $0x38] sm:$0xff]
    %v3142 = vld [vmem:[#allocation4 + $0x40] sm:$0xff]
    %v3143 = vld [vmem:[#allocation4 + $0x48] sm:$0xff]
    %v3144 = vld [vmem:[#allocation4 + $0x50] sm:$0xff]
    %v3145 = vld [vmem:[#allocation4 + $0x58] sm:$0xff]
    %v3146 = vld [vmem:[#allocation4 + $0x60] sm:$0xff]
    %v3147 = vld [vmem:[#allocation4 + $0x68] sm:$0xff]
    %v3148 = vld [vmem:[#allocation4 + $0x70] sm:$0xff]
    %v3149 = vld [vmem:[#allocation4 + $0x78] sm:$0xff]
    %v3150 = vlaneseq
    %v3151 = vshrl.u32 %v3150, 7
    %v3152 = vsub.s32 0, %v3151
    %v3153 = vrot.slane %v2592, %v3152
    %3155 = vbcast.lane.b32.xlu0 %v3153, 256
    %v3156 = vpop.permute.xlu0 %3155
    %s3158 = sor.u32 256, 8
    %3159 = vbcast.lane.b32.xlu0 %v3153, %s3158
    %v3160 = vpop.permute.xlu0 %3159
    %v3161 = vlaneseq
    %v3162 = vshrl.u32 %v3161, 7
    %v3163 = vsub.s32 1, %v3162
    %v3164 = vrot.slane %v2592, %v3163
    %3166 = vbcast.lane.b32.xlu0 %v3164, 256
    %v3167 = vpop.permute.xlu0 %3166
    %s3169 = sor.u32 256, 8
    %3170 = vbcast.lane.b32.xlu0 %v3164, %s3169
    %v3171 = vpop.permute.xlu0 %3170
    %v3172 = vlaneseq
    %v3173 = vshrl.u32 %v3172, 7
    %v3174 = vsub.s32 2, %v3173
    %v3175 = vrot.slane %v2592, %v3174
    %3177 = vbcast.lane.b32.xlu0 %v3175, 256
    %v3178 = vpop.permute.xlu0 %3177
    %s3180 = sor.u32 256, 8
    %3181 = vbcast.lane.b32.xlu0 %v3175, %s3180
    %v3182 = vpop.permute.xlu0 %3181
    %v3183 = vlaneseq
    %v3184 = vshrl.u32 %v3183, 7
    %v3185 = vsub.s32 3, %v3184
    %v3186 = vrot.slane %v2592, %v3185
    %3188 = vbcast.lane.b32.xlu0 %v3186, 256
    %v3189 = vpop.permute.xlu0 %3188
    %s3191 = sor.u32 256, 8
    %3192 = vbcast.lane.b32.xlu0 %v3186, %s3191
    %v3193 = vpop.permute.xlu0 %3192
    %v3194 = vlaneseq
    %v3195 = vshrl.u32 %v3194, 7
    %v3196 = vsub.s32 4, %v3195
    %v3197 = vrot.slane %v2592, %v3196
    %3199 = vbcast.lane.b32.xlu0 %v3197, 256
    %v3200 = vpop.permute.xlu0 %3199
    %s3202 = sor.u32 256, 8
    %3203 = vbcast.lane.b32.xlu0 %v3197, %s3202
    %v3204 = vpop.permute.xlu0 %3203
    %v3205 = vlaneseq
    %v3206 = vshrl.u32 %v3205, 7
    %v3207 = vsub.s32 5, %v3206
    %v3208 = vrot.slane %v2592, %v3207
    %3210 = vbcast.lane.b32.xlu0 %v3208, 256
    %v3211 = vpop.permute.xlu0 %3210
    %s3213 = sor.u32 256, 8
    %3214 = vbcast.lane.b32.xlu0 %v3208, %s3213
    %v3215 = vpop.permute.xlu0 %3214
    %v3216 = vlaneseq
    %v3217 = vshrl.u32 %v3216, 7
    %v3218 = vsub.s32 6, %v3217
    %v3219 = vrot.slane %v2592, %v3218
    %3221 = vbcast.lane.b32.xlu0 %v3219, 256
    %v3222 = vpop.permute.xlu0 %3221
    %s3224 = sor.u32 256, 8
    %3225 = vbcast.lane.b32.xlu0 %v3219, %s3224
    %v3226 = vpop.permute.xlu0 %3225
    %v3227 = vlaneseq
    %v3228 = vshrl.u32 %v3227, 7
    %v3229 = vsub.s32 7, %v3228
    %v3230 = vrot.slane %v2592, %v3229
    %3232 = vbcast.lane.b32.xlu0 %v3230, 256
    %v3233 = vpop.permute.xlu0 %3232
    %s3235 = sor.u32 256, 8
    %3236 = vbcast.lane.b32.xlu0 %v3230, %s3235
    %v3237 = vpop.permute.xlu0 %3236
    %s3239 = sor.u32 256, 16
    %3240 = vbcast.lane.b32.xlu0 %v3153, %s3239
    %v3241 = vpop.permute.xlu0 %3240
    %s3243 = sor.u32 256, 24
    %3244 = vbcast.lane.b32.xlu0 %v3153, %s3243
    %v3245 = vpop.permute.xlu0 %3244
    %s3247 = sor.u32 256, 16
    %3248 = vbcast.lane.b32.xlu0 %v3164, %s3247
    %v3249 = vpop.permute.xlu0 %3248
    %s3251 = sor.u32 256, 24
    %3252 = vbcast.lane.b32.xlu0 %v3164, %s3251
    %v3253 = vpop.permute.xlu0 %3252
    %s3255 = sor.u32 256, 16
    %3256 = vbcast.lane.b32.xlu0 %v3175, %s3255
    %v3257 = vpop.permute.xlu0 %3256
    %s3259 = sor.u32 256, 24
    %3260 = vbcast.lane.b32.xlu0 %v3175, %s3259
    %v3261 = vpop.permute.xlu0 %3260
    %s3263 = sor.u32 256, 16
    %3264 = vbcast.lane.b32.xlu0 %v3186, %s3263
    %v3265 = vpop.permute.xlu0 %3264
    %s3267 = sor.u32 256, 24
    %3268 = vbcast.lane.b32.xlu0 %v3186, %s3267
    %v3269 = vpop.permute.xlu0 %3268
    %s3271 = sor.u32 256, 16
    %3272 = vbcast.lane.b32.xlu0 %v3197, %s3271
    %v3273 = vpop.permute.xlu0 %3272
    %s3275 = sor.u32 256, 24
    %3276 = vbcast.lane.b32.xlu0 %v3197, %s3275
    %v3277 = vpop.permute.xlu0 %3276
    %s3279 = sor.u32 256, 16
    %3280 = vbcast.lane.b32.xlu0 %v3208, %s3279
    %v3281 = vpop.permute.xlu0 %3280
    %s3283 = sor.u32 256, 24
    %3284 = vbcast.lane.b32.xlu0 %v3208, %s3283
    %v3285 = vpop.permute.xlu0 %3284
    %s3287 = sor.u32 256, 16
    %3288 = vbcast.lane.b32.xlu0 %v3219, %s3287
    %v3289 = vpop.permute.xlu0 %3288
    %s3291 = sor.u32 256, 24
    %3292 = vbcast.lane.b32.xlu0 %v3219, %s3291
    %v3293 = vpop.permute.xlu0 %3292
    %s3295 = sor.u32 256, 16
    %3296 = vbcast.lane.b32.xlu0 %v3230, %s3295
    %v3297 = vpop.permute.xlu0 %3296
    %s3299 = sor.u32 256, 24
    %3300 = vbcast.lane.b32.xlu0 %v3230, %s3299
    %v3301 = vpop.permute.xlu0 %3300
    %v3302 = vsel %vm365, %v3156, %v3241
    %v3303 = vsel %vm365, %v3160, %v3245
    %v3304 = vsel %vm365, %v3167, %v3249
    %v3305 = vsel %vm365, %v3171, %v3253
    %v3306 = vsel %vm365, %v3178, %v3257
    %v3307 = vsel %vm365, %v3182, %v3261
    %v3308 = vsel %vm365, %v3189, %v3265
    %v3309 = vsel %vm365, %v3193, %v3269
    %v3310 = vsel %vm365, %v3200, %v3273
    %v3311 = vsel %vm365, %v3204, %v3277
    %v3312 = vsel %vm365, %v3211, %v3281
    %v3313 = vsel %vm365, %v3215, %v3285
    %v3314 = vsel %vm365, %v3222, %v3289
    %v3315 = vsel %vm365, %v3226, %v3293
    %v3316 = vsel %vm365, %v3233, %v3297
    %v3317 = vsel %vm365, %v3237, %v3301
    %v3318 = vmul.f32 %v3134, %v3302
    %v3319 = vmul.f32 %v3135, %v3303
    %v3320 = vmul.f32 %v3136, %v3304
    %v3321 = vmul.f32 %v3137, %v3305
    %v3322 = vmul.f32 %v3138, %v3306
    %v3323 = vmul.f32 %v3139, %v3307
    %v3324 = vmul.f32 %v3140, %v3308
    %v3325 = vmul.f32 %v3141, %v3309
    %v3326 = vmul.f32 %v3142, %v3310
    %v3327 = vmul.f32 %v3143, %v3311
    %v3328 = vmul.f32 %v3144, %v3312
    %v3329 = vmul.f32 %v3145, %v3313
    %v3330 = vmul.f32 %v3146, %v3314
    %v3331 = vmul.f32 %v3147, %v3315
    %v3332 = vmul.f32 %v3148, %v3316
    %v3333 = vmul.f32 %v3149, %v3317
    %v3334 = vadd.f32 %v3318, %v3319
    %v3335 = vrot.slane %v3334, 4
    %v3336 = vadd.f32 %v3334, %v3335
    %v3337 = vrot.slane %v3336, 2
    %v3338 = vadd.f32 %v3336, %v3337
    %v3339 = vrot.slane %v3338, 1
    %v3340 = vadd.f32 %v3338, %v3339
    %v3341 = vadd.f32 %v3320, %v3321
    %v3342 = vrot.slane %v3341, 4
    %v3343 = vadd.f32 %v3341, %v3342
    %v3344 = vrot.slane %v3343, 2
    %v3345 = vadd.f32 %v3343, %v3344
    %v3346 = vrot.slane %v3345, 1
    %v3347 = vadd.f32 %v3345, %v3346
    %v3348 = vadd.f32 %v3322, %v3323
    %v3349 = vrot.slane %v3348, 4
    %v3350 = vadd.f32 %v3348, %v3349
    %v3351 = vrot.slane %v3350, 2
    %v3352 = vadd.f32 %v3350, %v3351
    %v3353 = vrot.slane %v3352, 1
    %v3354 = vadd.f32 %v3352, %v3353
    %v3355 = vadd.f32 %v3324, %v3325
    %v3356 = vrot.slane %v3355, 4
    %v3357 = vadd.f32 %v3355, %v3356
    %v3358 = vrot.slane %v3357, 2
    %v3359 = vadd.f32 %v3357, %v3358
    %v3360 = vrot.slane %v3359, 1
    %v3361 = vadd.f32 %v3359, %v3360
    %v3362 = vadd.f32 %v3326, %v3327
    %v3363 = vrot.slane %v3362, 4
    %v3364 = vadd.f32 %v3362, %v3363
    %v3365 = vrot.slane %v3364, 2
    %v3366 = vadd.f32 %v3364, %v3365
    %v3367 = vrot.slane %v3366, 1
    %v3368 = vadd.f32 %v3366, %v3367
    %v3369 = vadd.f32 %v3328, %v3329
    %v3370 = vrot.slane %v3369, 4
    %v3371 = vadd.f32 %v3369, %v3370
    %v3372 = vrot.slane %v3371, 2
    %v3373 = vadd.f32 %v3371, %v3372
    %v3374 = vrot.slane %v3373, 1
    %v3375 = vadd.f32 %v3373, %v3374
    %v3376 = vadd.f32 %v3330, %v3331
    %v3377 = vrot.slane %v3376, 4
    %v3378 = vadd.f32 %v3376, %v3377
    %v3379 = vrot.slane %v3378, 2
    %v3380 = vadd.f32 %v3378, %v3379
    %v3381 = vrot.slane %v3380, 1
    %v3382 = vadd.f32 %v3380, %v3381
    %v3383 = vadd.f32 %v3332, %v3333
    %v3384 = vrot.slane %v3383, 4
    %v3385 = vadd.f32 %v3383, %v3384
    %v3386 = vrot.slane %v3385, 2
    %v3387 = vadd.f32 %v3385, %v3386
    %v3388 = vrot.slane %v3387, 1
    %v3389 = vadd.f32 %v3387, %v3388
    %s3390 = scalar_lea.vmem %s12, 1
    %v3391 = vld [vmem:[%s3390] sm:$0x1]
    %v3393 = vlaneseq
    %v3394 = vshrl.u32 %v3393, 7
    %v3395 = vsub.s32 0, %v3394
    %v3396 = vrot.slane %v3391, %v3395
    %v3398 = vmul.f32 %v2325, %v3396
    %v3400 = vrot.slane %v3398, 1
    %v3401 = vrot.slane %v3398, 2
    %v3402 = vrot.slane %v3398, 3
    %v3403 = vrot.slane %v3398, 4
    %v3404 = vrot.slane %v3398, 5
    %v3405 = vrot.slane %v3398, 6
    %v3406 = vrot.slane %v3398, 7
    %v3415 = vadd.f32 %v3340, %v3398
    %v3416 = vadd.f32 %v3347, %v3400
    %v3417 = vadd.f32 %v3354, %v3401
    %v3418 = vadd.f32 %v3361, %v3402
    %v3419 = vadd.f32 %v3368, %v3403
    %v3420 = vadd.f32 %v3375, %v3404
    %v3421 = vadd.f32 %v3382, %v3405
    %v3422 = vadd.f32 %v3389, %v3406
    %v3431 = vrot.slane %v3416, 7
    %v3432 = vsel %vm1747, %v3431, %v3415
    %v3433 = vrot.slane %v3417, 6
    %v3434 = vsel %vm1750, %v3433, %v3432
    %v3435 = vrot.slane %v3418, 5
    %v3436 = vsel %vm1753, %v3435, %v3434
    %v3437 = vrot.slane %v3419, 4
    %v3438 = vsel %vm1756, %v3437, %v3436
    %v3439 = vrot.slane %v3420, 3
    %v3440 = vsel %vm1759, %v3439, %v3438
    %v3441 = vrot.slane %v3421, 2
    %v3442 = vsel %vm1762, %v3441, %v3440
    %v3443 = vrot.slane %v3422, 1
    %v3444 = vsel %vm1765, %v3443, %v3442
    %3446 = vrot.lane.b32.xlu0 %v3444, 64
    %v3447 = vpop.permute.xlu0 %3446
    %v3449 = vsub.f32 0.0, %v2062
    %v3450 = vsub.f32 0.0, %v2067
    %v3451 = vmul.f32 %v3449, 1.442695
    %v3452 = vpow.pop %v3451
    %v3453 = vmul.f32 %v3450, 1.442695
    %v3454 = vpow.pop %v3453
    %v3455 = vadd.f32 %v3452, 1.0
    %v3456 = vadd.f32 %v3454, 1.0
    %v3457 = vrcp.pop %v3455
    %v3458 = vmul.f32 1.0, %v3457
    %v3459 = vrcp.pop %v3456
    %v3460 = vmul.f32 1.0, %v3459
    %v3461 = vmul.f32 %v2062, %v3458
    %v3462 = vmul.f32 %v2067, %v3460
    %v3463 = vmul.f32 %v3444, %v3461
    %v3464 = vmul.f32 %v3447, %v3462
    %s3465 = scalar_lea.vmem %s13, 64
    %v3466 = vld [vmem:[%s3465] sm:$0xff]
    %v3467 = vld [vmem:[%s3465 + $0x8] sm:$0xff]
    %v3468 = vld [vmem:[%s3465 + $0x10] sm:$0xff]
    %v3469 = vld [vmem:[%s3465 + $0x18] sm:$0xff]
    %v3470 = vld [vmem:[%s3465 + $0x20] sm:$0xff]
    %v3471 = vld [vmem:[%s3465 + $0x28] sm:$0xff]
    %v3472 = vld [vmem:[%s3465 + $0x30] sm:$0xff]
    %v3473 = vld [vmem:[%s3465 + $0x38] sm:$0xff]
    %v3475 = vsel %vm365, %v3463, 0
    %v3478 = vsel %vm365, %v3464, 0
    %3480 = vmatprep.subr.mxu0 0.0
    %3481 = vmatpush1.msra.mxu0 %v3466
    %3482 = vmatprep.subr.mxu0 0.0
    %3483 = vmatpush1.msra.mxu0 %v3467
    %3484 = vmatprep.subr.mxu0 0.0
    %3485 = vmatpush1.msra.mxu0 %v3468
    %3486 = vmatprep.subr.mxu0 0.0
    %3487 = vmatpush1.msra.mxu0 %v3469
    %3488 = vmatprep.subr.mxu0 0.0
    %3489 = vmatpush1.msra.mxu0 %v3470
    %3490 = vmatprep.subr.mxu0 0.0
    %3491 = vmatpush1.msra.mxu0 %v3471
    %3492 = vmatprep.subr.mxu0 0.0
    %3493 = vmatpush1.msra.mxu0 %v3472
    %3494 = vmatprep.subr.mxu0 0.0
    %3495 = vmatpush1.msra.mxu0 %v3473
    %3496 = vmatprep.subr.mxu0 0.0
    %3497 = vmatpush1.msra.mxu0 0.0
    %3498 = vmatprep.subr.mxu0 0.0
    %3499 = vmatpush1.msra.mxu0 0.0
    %3500 = vmatprep.subr.mxu0 0.0
    %3501 = vmatpush1.msra.mxu0 0.0
    %3502 = vmatprep.subr.mxu0 0.0
    %3503 = vmatpush1.msra.mxu0 0.0
    %3504 = vmatprep.subr.mxu0 0.0
    %3505 = vmatpush1.msra.mxu0 0.0
    %3506 = vmatprep.subr.mxu0 0.0
    %3507 = vmatpush1.msra.mxu0 0.0
    %3508 = vmatprep.subr.mxu0 0.0
    %3509 = vmatpush1.msra.mxu0 0.0
    %3510 = vmatprep.subr.mxu0 0.0
    %3511 = vmatpush1.msra.mxu0 0.0
    %3512 = vmatprep.subr.mxu0 0.0
    %3513 = vmatpush1.msra.mxu0 0.0
    %3514 = vmatprep.subr.mxu0 0.0
    %3515 = vmatpush1.msra.mxu0 0.0
    %3516 = vmatprep.subr.mxu0 0.0
    %3517 = vmatpush1.msra.mxu0 0.0
    %3518 = vmatprep.subr.mxu0 0.0
    %3519 = vmatpush1.msra.mxu0 0.0
    %3520 = vmatprep.subr.mxu0 0.0
    %3521 = vmatpush1.msra.mxu0 0.0
    %3522 = vmatprep.subr.mxu0 0.0
    %3523 = vmatpush1.msra.mxu0 0.0
    %3524 = vmatprep.subr.mxu0 0.0
    %3525 = vmatpush1.msra.mxu0 0.0
    %3526 = vmatprep.subr.mxu0 0.0
    %3527 = vmatpush1.msra.mxu0 0.0
    %3528 = vmatprep.subr.mxu0 0.0
    %3529 = vmatpush1.msra.mxu0 0.0
    %3530 = vmatprep.subr.mxu0 0.0
    %3531 = vmatpush1.msra.mxu0 0.0
    %3532 = vmatprep.subr.mxu0 0.0
    %3533 = vmatpush1.msra.mxu0 0.0
    %3534 = vmatprep.subr.mxu0 0.0
    %3535 = vmatpush1.msra.mxu0 0.0
    %3536 = vmatprep.subr.mxu0 0.0
    %3537 = vmatpush1.msra.mxu0 0.0
    %3538 = vmatprep.subr.mxu0 0.0
    %3539 = vmatpush1.msra.mxu0 0.0
    %3540 = vmatprep.subr.mxu0 0.0
    %3541 = vmatpush1.msra.mxu0 0.0
    %3542 = vmatprep.subr.mxu0 0.0
    %3543 = vmatpush1.msra.mxu0 0.0
    %3544 = vmatprep.mubr.f32.mxu0 0.0
    %3545 = vmatmul.mubr.f32.gmra.mrb[0].mxu0 %v3475
    %v3546 = vpop.f32.mrb[0].mxu0
    %v3547 = vadd.f32 0.0, %v3546
    %v3548 = vpop.f32.mrb[0].mxu0
    %3549 = vmatprep.mubr.f32.mxu0 0.0
    %3550 = vmatmul.mubr.f32.gmra.mrb[0].mxu0 %v3478
    %v3551 = vpop.f32.mrb[0].mxu0
    %v3552 = vadd.f32 0.0, %v3551
    %v3553 = vpop.f32.mrb[0].mxu0
    %3554 = vdwg.mxu0
    %v3555 = vadd.f32 %v1876, %v3547
    %v3556 = vadd.f32 %v1877, %v3552
    %v3557 = vld [vmem:[%s14] sm:$0x1]
    %v3558 = vmul.f32 %v3555, %v3555
    %v3559 = vmul.f32 %v3556, %v3556
    %v3560 = vsel %vm173, %v3558, 0.0
    %3561 = vadd.xlane.f32.xlu0 %v3560
    %v3562 = vpop.xlane.xlu0 %3561
    %v3563 = vsel %vm173, %v3559, 0.0
    %3564 = vadd.xlane.f32.xlu0 %v3563
    %v3565 = vpop.xlane.xlu0 %3564
    %v3566 = vmul.f32 %v3562, %v180
    %v3567 = vmul.f32 %v3565, %v180
    %v3568 = vadd.f32 %v3566, 1e-05
    %v3569 = vadd.f32 %v3567, 1e-05
    %v3570 = vrsqrt.pop %v3568
    %v3571 = vrsqrt.pop %v3569
    %v3572 = vmul.f32 %v3555, %v3570
    %v3573 = vmul.f32 %v3556, %v3571
    %v3575 = vlaneseq
    %v3576 = vshrl.u32 %v3575, 7
    %v3577 = vsub.s32 0, %v3576
    %v3578 = vrot.slane %v3557, %v3577
    %v3580 = vmul.f32 %v3572, %v3578
    %v3581 = vmul.f32 %v3573, %v3578
    %v3582 = vld [vmem:[%s1] sm:$0xff]
    %v3583 = vld [vmem:[%s1 + $0x8] sm:$0xff]
    %v3584 = vld [vmem:[%s1 + $0x10] sm:$0xff]
    %v3585 = vld [vmem:[%s1 + $0x18] sm:$0xff]
    %v3586 = vld [vmem:[%s1 + $0x20] sm:$0xff]
    %v3587 = vld [vmem:[%s1 + $0x28] sm:$0xff]
    %v3588 = vld [vmem:[%s1 + $0x30] sm:$0xff]
    %v3589 = vld [vmem:[%s1 + $0x38] sm:$0xff]
    %v3590 = vld [vmem:[%s1 + $0x40] sm:$0xff]
    %v3591 = vld [vmem:[%s1 + $0x48] sm:$0xff]
    %v3592 = vld [vmem:[%s1 + $0x50] sm:$0xff]
    %v3593 = vld [vmem:[%s1 + $0x58] sm:$0xff]
    %v3594 = vld [vmem:[%s1 + $0x60] sm:$0xff]
    %v3595 = vld [vmem:[%s1 + $0x68] sm:$0xff]
    %v3596 = vld [vmem:[%s1 + $0x70] sm:$0xff]
    %v3597 = vld [vmem:[%s1 + $0x78] sm:$0xff]
    %v3599 = vsel %vm173, %v3580, 0
    %v3602 = vsel %vm173, %v3581, 0
    %v3605 = vsel %vm173, %v3582, 0
    %v3608 = vsel %vm173, %v3583, 0
    %v3611 = vsel %vm173, %v3584, 0
    %v3614 = vsel %vm173, %v3585, 0
    %v3617 = vsel %vm173, %v3586, 0
    %v3620 = vsel %vm173, %v3587, 0
    %v3623 = vsel %vm173, %v3588, 0
    %v3626 = vsel %vm173, %v3589, 0
    %v3629 = vsel %vm173, %v3590, 0
    %v3632 = vsel %vm173, %v3591, 0
    %v3635 = vsel %vm173, %v3592, 0
    %v3638 = vsel %vm173, %v3593, 0
    %v3641 = vsel %vm173, %v3594, 0
    %v3644 = vsel %vm173, %v3595, 0
    %v3647 = vsel %vm173, %v3596, 0
    %v3650 = vsel %vm173, %v3597, 0
    %3652 = vmatprep.subr.mxu0 0.0
    %3653 = vmatpush1.xpose.msra.mxu0 %v3605
    %3654 = vmatprep.subr.mxu0 0.0
    %3655 = vmatpush1.xpose.msra.mxu0 %v3608
    %3656 = vmatprep.subr.mxu0 0.0
    %3657 = vmatpush1.xpose.msra.mxu0 %v3611
    %3658 = vmatprep.subr.mxu0 0.0
    %3659 = vmatpush1.xpose.msra.mxu0 %v3614
    %3660 = vmatprep.subr.mxu0 0.0
    %3661 = vmatpush1.xpose.msra.mxu0 %v3617
    %3662 = vmatprep.subr.mxu0 0.0
    %3663 = vmatpush1.xpose.msra.mxu0 %v3620
    %3664 = vmatprep.subr.mxu0 0.0
    %3665 = vmatpush1.xpose.msra.mxu0 %v3623
    %3666 = vmatprep.subr.mxu0 0.0
    %3667 = vmatpush1.xpose.msra.mxu0 %v3626
    %3668 = vmatprep.subr.mxu0 0.0
    %3669 = vmatpush1.xpose.msra.mxu0 %v3629
    %3670 = vmatprep.subr.mxu0 0.0
    %3671 = vmatpush1.xpose.msra.mxu0 %v3632
    %3672 = vmatprep.subr.mxu0 0.0
    %3673 = vmatpush1.xpose.msra.mxu0 %v3635
    %3674 = vmatprep.subr.mxu0 0.0
    %3675 = vmatpush1.xpose.msra.mxu0 %v3638
    %3676 = vmatprep.subr.mxu0 0.0
    %3677 = vmatpush1.xpose.msra.mxu0 %v3641
    %3678 = vmatprep.subr.mxu0 0.0
    %3679 = vmatpush1.xpose.msra.mxu0 %v3644
    %3680 = vmatprep.subr.mxu0 0.0
    %3681 = vmatpush1.xpose.msra.mxu0 %v3647
    %3682 = vmatprep.subr.mxu0 0.0
    %3683 = vmatpush1.xpose.msra.mxu0 %v3650
    %3684 = vmatprep.subr.mxu0 0.0
    %3685 = vmatpush1.xpose.msra.mxu0 0.0
    %3686 = vmatprep.subr.mxu0 0.0
    %3687 = vmatpush1.xpose.msra.mxu0 0.0
    %3688 = vmatprep.subr.mxu0 0.0
    %3689 = vmatpush1.xpose.msra.mxu0 0.0
    %3690 = vmatprep.subr.mxu0 0.0
    %3691 = vmatpush1.xpose.msra.mxu0 0.0
    %3692 = vmatprep.subr.mxu0 0.0
    %3693 = vmatpush1.xpose.msra.mxu0 0.0
    %3694 = vmatprep.subr.mxu0 0.0
    %3695 = vmatpush1.xpose.msra.mxu0 0.0
    %3696 = vmatprep.subr.mxu0 0.0
    %3697 = vmatpush1.xpose.msra.mxu0 0.0
    %3698 = vmatprep.subr.mxu0 0.0
    %3699 = vmatpush1.xpose.msra.mxu0 0.0
    %3700 = vmatprep.subr.mxu0 0.0
    %3701 = vmatpush1.xpose.msra.mxu0 0.0
    %3702 = vmatprep.subr.mxu0 0.0
    %3703 = vmatpush1.xpose.msra.mxu0 0.0
    %3704 = vmatprep.subr.mxu0 0.0
    %3705 = vmatpush1.xpose.msra.mxu0 0.0
    %3706 = vmatprep.subr.mxu0 0.0
    %3707 = vmatpush1.xpose.msra.mxu0 0.0
    %3708 = vmatprep.subr.mxu0 0.0
    %3709 = vmatpush1.xpose.msra.mxu0 0.0
    %3710 = vmatprep.subr.mxu0 0.0
    %3711 = vmatpush1.xpose.msra.mxu0 0.0
    %3712 = vmatprep.subr.mxu0 0.0
    %3713 = vmatpush1.xpose.msra.mxu0 0.0
    %3714 = vmatprep.subr.mxu0 0.0
    %3715 = vmatpush1.xpose.msra.mxu0 0.0
    %3716 = vmatprep.mubr.f32.mxu0 0.0
    %3717 = vmatmul.mubr.f32.gmra.mrb[0].mxu0 %v3599
    %v3718 = vpop.f32.mrb[0].mxu0
    %v3719 = vadd.f32 0.0, %v3718
    %v3720 = vpop.f32.mrb[0].mxu0
    %3721 = vmatprep.mubr.f32.mxu0 0.0
    %3722 = vmatmul.mubr.f32.gmra.mrb[0].mxu0 %v3602
    %v3723 = vpop.f32.mrb[0].mxu0
    %v3724 = vadd.f32 0.0, %v3723
    %v3725 = vpop.f32.mrb[0].mxu0
    %3726 = vdwg.mxu0
    %3727 = vst [vmem:[#allocation5] sm:$0xff] %v3719
    %3728 = vst [vmem:[#allocation5 + $0x8] sm:$0xff] %v3724
    // Predicated region
    $region62: #{mamba_forward.1} parent=1 // pred_check
      _
    $region63: #{mamba_forward.1} parent=1 // pred_check_branch
      %3730 = sbr.rel (0) target = $region65
    $region64: #{mamba_forward.1} parent=1 // pred_region
      %s3732 = ssub.s32 256, 256
      %3733 = vsyncadd [#allocation6], %s3732
      %s3734 = sshll.u32 [#allocation5], 4
      %s3735 = int_to_ptr.vmem [resolvable:$true] %s3734
      %3740 = dma.vmem_to_hbm [thread:$0]  %s3735, 256, %s15, [#allocation6], 128, 128, 8
    $region65: #{mamba_forward.1} parent=1 // pred_fallthru
      _
    // Predicated region
    $region66: #{mamba_forward.1} parent=1 // pred_check
      _
    $region67: #{mamba_forward.1} parent=1 // pred_check_branch
      %3742 = sbr.rel (0) target = $region69
    $region68: #{mamba_forward.1} parent=1 // pred_region
      %3743 = dma.done [#allocation6], 256
    $region69: #{mamba_forward.1} parent=1 // pred_fallthru
      _
    %3744 = vsyncpa [#allocation6], 1

</llo_original>
